<compile_context>
chip_gen: v7x
topology: tpu7x:2x2x1
jax: 0.10.0
libtpu: 0.0.40
codegen_flags: <defaults>
</compile_context>

<pallas_src>
import math

import jax
import jax.numpy as jnp
from jax import lax
from jax.experimental import pallas as pl
from jax.experimental.pallas import tpu as pltpu


def _round_up(n, m):
    return ((n + m - 1) // m) * m


# ----------------------------------------------------------------------------
# Fused kernel: all GRU layers + ReLU + FC for one batch tile.
# ----------------------------------------------------------------------------
def _make_fused_gru_kernel(num_layers, seq_len, batch_tile, h_pad):
    three_h = 3 * h_pad

    def kernel(*refs):
        x_ref = refs[0]
        layer_refs = refs[1:1 + 4 * num_layers]
        w_fc_ref = refs[1 + 4 * num_layers]
        b_fc_ref = refs[2 + 4 * num_layers]
        out_ref = refs[3 + 4 * num_layers]
        gi_scr = refs[4 + 4 * num_layers]     # (T, TB, 3*H_pad) input proj.
        seq_scr = refs[5 + 4 * num_layers]    # (T, TB, H_pad) inter-layer act.

        h_final = jnp.zeros((batch_tile, h_pad), jnp.float32)

        for l in range(num_layers):           # layer_dim is static -> unrolled
            w_ih_ref, w_hh_ref, b_ih_ref, b_hh_ref = layer_refs[4 * l:4 * l + 4]
            is_last = (l == num_layers - 1)

            # ---- Input projection hoisted out of the recurrence:
            # one big matmul with M = T * batch_tile fills the MXU.
            inp = x_ref[...] if l == 0 else seq_scr[...]
            d_in = inp.shape[-1]
            gi_all = (jnp.dot(inp.reshape(seq_len * batch_tile, d_in),
                              w_ih_ref[...],
                              preferred_element_type=jnp.float32)
                      + b_ih_ref[...])
            gi_scr[...] = gi_all.reshape(seq_len, batch_tile, three_h)

            # ---- Recurrence: only h_{t-1} @ W_hh per step; h carried in
            # vregs through the fori_loop (no VMEM round-trip for h).
            def step(t, h_prev, _is_last=is_last):
                gi = gi_scr[t]                               # (TB, 3*H_pad)
                gh = (jnp.dot(h_prev, w_hh_ref[...],
                              preferred_element_type=jnp.float32)
                      + b_hh_ref[...])
                i_r = gi[:, :h_pad]
                i_z = gi[:, h_pad:2 * h_pad]
                i_n = gi[:, 2 * h_pad:]
                h_r = gh[:, :h_pad]
                h_z = gh[:, h_pad:2 * h_pad]
                h_n = gh[:, 2 * h_pad:]
                r = jax.nn.sigmoid(i_r + h_r)
                z = jax.nn.sigmoid(i_z + h_z)
                n = jnp.tanh(i_n + r * h_n)     # PyTorch: r * (W_hn h + b_hn)
                h_new = (1.0 - z) * n + z * h_prev
                if not _is_last:
                    seq_scr[t] = h_new          # next layer's input (VMEM only)
                return h_new

            h0 = jnp.zeros((batch_tile, h_pad), jnp.float32)
            h_final = lax.fori_loop(0, seq_len, step, h0,
                                    unroll=seq_len <= 32)

        # ---- Fused head: ReLU + final Linear on h_{T-1} of this batch tile.
        h_act = jnp.maximum(h_final, 0.0)
        out_ref[...] = (jnp.dot(h_act, w_fc_ref[...],
                                preferred_element_type=jnp.float32)
                        + b_fc_ref[...]).astype(out_ref.dtype)

    return kernel


# ----------------------------------------------------------------------------
# Wrapper: padding to lane-dense layouts + pallas_call setup.
# ----------------------------------------------------------------------------
def _pad_gate_cols(w, rows_pad, hidden, h_pad):
    """(rows, 3*hidden) -> (rows_pad, 3*h_pad), zero-padding each gate block."""
    r, z, n = jnp.split(w, 3, axis=1)
    pad = lambda g: jnp.pad(g, ((0, rows_pad - w.shape[0]), (0, h_pad - hidden)))
    return jnp.concatenate([pad(r), pad(z), pad(n)], axis=1)


def gru_model_forward(x, gru_params, fc_params, *, batch_tile=None):
    """Full GRUModelJit forward.

    x          : (B, T, D) batch-first, equal-length (pre-sorted) sequences.
    gru_params : [(w_ih (D_l,3H), w_hh (H,3H), b_ih (1,3H), b_hh (1,3H)), ...]
    fc_params  : (w_fc (H, O), b_fc (1, O))
    Returns an (O,) vector = fc(relu(out[0][-1, :])).
    """
    # TODO(synk): general pack_sequence with ragged lengths would need a
    # scalar-prefetched length vector + per-row masking of the hidden update.
    batch, seq_len, input_dim = x.shape
    hidden = gru_params[0][1].shape[0]
    out_dim = fc_params[0].shape[1]
    num_layers = len(gru_params)

    if batch_tile is None:
        # Sublane-aligned; small enough that weights + per-tile scratch stay
        # comfortably under v7x's 64 MiB VMEM.  (With tiny batches nb == 1, so
        # the second v7x TensorCore idles — can't split below 8 sublanes.)
        batch_tile = min(_round_up(batch, 8), 128)
    b_pad = _round_up(batch, batch_tile)
    nb = b_pad // batch_tile

    # Lane-dense padding: features / hidden / output padded to 128 lanes so
    # every gate slice is whole vregs and every store is an unmasked vst.
    d_pad = _round_up(input_dim, 128)
    h_pad = _round_up(hidden, 128)
    o_pad = _round_up(out_dim, 128)

    # Time-major layout: features -> lanes, batch tile -> sublanes.
    seq = jnp.transpose(x, (1, 0, 2)).astype(jnp.float32)
    seq = jnp.pad(seq, ((0, 0), (0, b_pad - batch), (0, d_pad - input_dim)))

    padded_params = []
    for i, (w_ih, w_hh, b_ih, b_hh) in enumerate(gru_params):
        rows_pad = d_pad if i == 0 else h_pad
        padded_params += [
            _pad_gate_cols(w_ih, rows_pad, hidden, h_pad),
            _pad_gate_cols(w_hh, h_pad, hidden, h_pad),
            _pad_gate_cols(b_ih, 1, hidden, h_pad),
            _pad_gate_cols(b_hh, 1, hidden, h_pad),
        ]
    w_fc, b_fc = fc_params
    w_fc_p = jnp.pad(w_fc, ((0, h_pad - hidden), (0, o_pad - out_dim)))
    b_fc_p = jnp.pad(b_fc, ((0, 0), (0, o_pad - out_dim)))

    const = lambda b: (0, 0)
    in_specs = [pl.BlockSpec((seq_len, batch_tile, d_pad), lambda b: (0, b, 0))]
    for i in range(num_layers):
        rows_pad = d_pad if i == 0 else h_pad
        in_specs += [
            pl.BlockSpec((rows_pad, 3 * h_pad), const),   # w_ih (VMEM-resident)
            pl.BlockSpec((h_pad, 3 * h_pad), const),      # w_hh
            pl.BlockSpec((1, 3 * h_pad), const),          # b_ih
            pl.BlockSpec((1, 3 * h_pad), const),          # b_hh
        ]
    in_specs += [pl.BlockSpec((h_pad, o_pad), const),     # w_fc
                 pl.BlockSpec((1, o_pad), const)]         # b_fc

    kernel = _make_fused_gru_kernel(num_layers, seq_len, batch_tile, h_pad)

    out_padded = pl.pallas_call(
        kernel,
        out_shape=jax.ShapeDtypeStruct((b_pad, o_pad), jnp.float32),
        grid_spec=pltpu.PrefetchScalarGridSpec(
            num_scalar_prefetch=0,
            grid=(nb,),
            in_specs=in_specs,
            out_specs=pl.BlockSpec((batch_tile, o_pad), lambda b: (b, 0)),
            scratch_shapes=[
                pltpu.VMEM((seq_len, batch_tile, 3 * h_pad), jnp.float32),
                pltpu.VMEM((seq_len, batch_tile, h_pad), jnp.float32),
            ],
        ),
        compiler_params=pltpu.CompilerParams(
            dimension_semantics=("parallel",)),
    )(seq, *padded_params, w_fc_p, b_fc_p)

    # out[0][-1, :] == top-layer h_{T-1} of batch row B-1 (equal-length,
    # sorted sequences).  ReLU + FC are already fused into the kernel.
    return out_padded[batch - 1, :out_dim]


# ----------------------------------------------------------------------------
# Parameter init (PyTorch-style uniform(-1/sqrt(H), 1/sqrt(H))) and a pure-JAX
# reference mirroring the PyTorch forward.
# ----------------------------------------------------------------------------
def init_gru_layer(key, in_dim, hidden):
    k1, k2, k3, k4 = jax.random.split(key, 4)
    bound = 1.0 / math.sqrt(hidden)
    w_ih = jax.random.uniform(k1, (in_dim, 3 * hidden), minval=-bound,
                              maxval=bound, dtype=jnp.float32)
    w_hh = jax.random.uniform(k2, (hidden, 3 * hidden), minval=-bound,
                              maxval=bound, dtype=jnp.float32)
    b_ih = jax.random.uniform(k3, (1, 3 * hidden), minval=-bound,
                              maxval=bound, dtype=jnp.float32)
    b_hh = jax.random.uniform(k4, (1, 3 * hidden), minval=-bound,
                              maxval=bound, dtype=jnp.float32)
    return w_ih, w_hh, b_ih, b_hh


def init_linear(key, in_dim, out_dim):
    kw, kb = jax.random.split(key)
    bound = 1.0 / math.sqrt(in_dim)
    w = jax.random.uniform(kw, (in_dim, out_dim), minval=-bound,
                           maxval=bound, dtype=jnp.float32)
    b = jax.random.uniform(kb, (1, out_dim), minval=-bound,
                           maxval=bound, dtype=jnp.float32)
    return w, b


def reference_forward(x, gru_params, fc_params):
    """Pure-JAX reference of GRUModelJit.forward (equal-length sequences)."""
    batch = x.shape[0]
    seq = x.astype(jnp.float32)
    for (w_ih, w_hh, b_ih, b_hh) in gru_params:
        hidden = w_hh.shape[0]
        h = jnp.zeros((batch, hidden), jnp.float32)
        outs = []
        for t in range(seq.shape[1]):
            x_t = seq[:, t, :]
            gi = jnp.dot(x_t, w_ih, preferred_element_type=jnp.float32) + b_ih
            gh = jnp.dot(h, w_hh, preferred_element_type=jnp.float32) + b_hh
            i_r, i_z, i_n = jnp.split(gi, 3, axis=-1)
            h_r, h_z, h_n = jnp.split(gh, 3, axis=-1)
            r = jax.nn.sigmoid(i_r + h_r)
            z = jax.nn.sigmoid(i_z + h_z)
            n = jnp.tanh(i_n + r * h_n)
            h = (1.0 - z) * n + z * h
            outs.append(h)
        seq = jnp.stack(outs, axis=1)                      # (B, T, H)
    h_final = jnp.maximum(seq[-1, -1, :], 0.0)             # out[0][-1, :] -> relu
    w_fc, b_fc = fc_params
    return jnp.dot(h_final, w_fc, preferred_element_type=jnp.float32) + b_fc[0]


if __name__ == "__main__":
    # GRUModelJit(input_dim=16, hidden_dim=[32], layer_dim=2, output_dim=8)
    input_dim = 16
    hidden_dim = [32]
    layer_dim = 2
    output_dim = 8
    batch = 4
    seq_len = 8

    key = jax.random.PRNGKey(0)
    keys = jax.random.split(key, 2 + layer_dim)
    kx, kfc = keys[0], keys[1]
    klayers = keys[2:]

    # Equal-length "packed" batch of sequences, batch_first.
    x = jax.random.normal(kx, (batch, seq_len, input_dim), dtype=jnp.float32)

    gru_params = []
    d_in = input_dim
    for kl in klayers:
        gru_params.append(init_gru_layer(kl, d_in, hidden_dim[0]))
        d_in = hidden_dim[0]
    fc_params = init_linear(kfc, hidden_dim[0], output_dim)

    out = gru_model_forward(x, gru_params, fc_params)
    out = jax.block_until_ready(out)

    ref = reference_forward(x, gru_params, fc_params)
    assert out.shape == (output_dim,)
    assert jnp.allclose(out, ref, atol=1e-4, rtol=1e-4), "mismatch vs reference"

    print("KERNEL_OK")
</pallas_src>

<mosaic_0001>
module attributes {stable_mosaic.version = 11 : i64} {
  func.func @kernel(%arg0: i32, %arg1: memref<8x8x128xf32, #tpu.memory_space<vmem>>, %arg2: memref<128x384xf32, #tpu.memory_space<vmem>>, %arg3: memref<128x384xf32, #tpu.memory_space<vmem>>, %arg4: memref<1x384xf32, #tpu.memory_space<vmem>>, %arg5: memref<1x384xf32, #tpu.memory_space<vmem>>, %arg6: memref<128x384xf32, #tpu.memory_space<vmem>>, %arg7: memref<128x384xf32, #tpu.memory_space<vmem>>, %arg8: memref<1x384xf32, #tpu.memory_space<vmem>>, %arg9: memref<1x384xf32, #tpu.memory_space<vmem>>, %arg10: memref<128x128xf32, #tpu.memory_space<vmem>>, %arg11: memref<1x128xf32, #tpu.memory_space<vmem>>, %arg12: memref<8x128xf32, #tpu.memory_space<vmem>>, %arg13: memref<8x8x384xf32, #tpu.memory_space<vmem>>, %arg14: memref<8x8x128xf32, #tpu.memory_space<vmem>>) attributes {dimension_semantics = [#tpu.dimension_semantics<parallel>], iteration_bounds = array<i64: 1>, scalar_prefetch = 0 : i64, scratch_operands = 2 : i64, tpu.core_type = #tpu.core_type<tc>, window_params = [{transform_indices = @transform_0, window_bounds = array<i64: 8, 8, 128>}, {pipeline_mode = #tpu.pipeline_mode<synchronous>, transform_indices = @transform_1, window_bounds = array<i64: 128, 384>}, {pipeline_mode = #tpu.pipeline_mode<synchronous>, transform_indices = @transform_2, window_bounds = array<i64: 128, 384>}, {pipeline_mode = #tpu.pipeline_mode<synchronous>, transform_indices = @transform_3, window_bounds = array<i64: 1, 384>}, {pipeline_mode = #tpu.pipeline_mode<synchronous>, transform_indices = @transform_4, window_bounds = array<i64: 1, 384>}, {pipeline_mode = #tpu.pipeline_mode<synchronous>, transform_indices = @transform_5, window_bounds = array<i64: 128, 384>}, {pipeline_mode = #tpu.pipeline_mode<synchronous>, transform_indices = @transform_6, window_bounds = array<i64: 128, 384>}, {pipeline_mode = #tpu.pipeline_mode<synchronous>, transform_indices = @transform_7, window_bounds = array<i64: 1, 384>}, {pipeline_mode = #tpu.pipeline_mode<synchronous>, transform_indices = @transform_8, window_bounds = array<i64: 1, 384>}, {pipeline_mode = #tpu.pipeline_mode<synchronous>, transform_indices = @transform_9, window_bounds = array<i64: 128, 128>}, {pipeline_mode = #tpu.pipeline_mode<synchronous>, transform_indices = @transform_10, window_bounds = array<i64: 1, 128>}, {transform_indices = @transform_11, window_bounds = array<i64: 8, 128>}]} {
    %c0 = arith.constant 0 : index
    %c0_0 = arith.constant 0 : index
    %c0_1 = arith.constant 0 : index
    %0 = vector.load %arg1[%c0, %c0_0, %c0_1] : memref<8x8x128xf32, #tpu.memory_space<vmem>>, vector<8x8x128xf32>
    %1 = vector.shape_cast %0 : vector<8x8x128xf32> to vector<64x128xf32>
    %c0_2 = arith.constant 0 : index
    %c0_3 = arith.constant 0 : index
    %2 = vector.load %arg2[%c0_2, %c0_3] : memref<128x384xf32, #tpu.memory_space<vmem>>, vector<128x384xf32>
    %cst = arith.constant dense<0.000000e+00> : vector<64x384xf32>
    %3 = tpu.matmul %1, %2, %cst {dimension_numbers = #tpu.dot_dimension_numbers<[1], [0], [0], [1], [0, 0, 1, 1], [], []>} : vector<64x128xf32>, vector<128x384xf32>, vector<64x384xf32> -> vector<64x384xf32>
    %c0_4 = arith.constant 0 : index
    %c0_5 = arith.constant 0 : index
    %4 = vector.load %arg4[%c0_4, %c0_5] : memref<1x384xf32, #tpu.memory_space<vmem>>, vector<1x384xf32>
    %5 = vector.broadcast %4 : vector<1x384xf32> to vector<64x384xf32>
    %6 = arith.addf %3, %5 : vector<64x384xf32>
    %7 = vector.shape_cast %6 : vector<64x384xf32> to vector<8x8x384xf32>
    %c0_6 = arith.constant 0 : index
    %c0_7 = arith.constant 0 : index
    %c0_8 = arith.constant 0 : index
    %8 = vector.load %arg13[%c0_6, %c0_7, %c0_8] : memref<8x8x384xf32, #tpu.memory_space<vmem>>, vector<8x8x384xf32>
    tpu.vector_store %arg13[%c0_6, %c0_7, %c0_8], %7 {strides = array<i32>} : memref<8x8x384xf32, #tpu.memory_space<vmem>>, vector<8x8x384xf32>,
    %cst_9 = arith.constant 0.000000e+00 : f32
    %9 = vector.broadcast %cst_9 : f32 to vector<8x128xf32>
    %c0_i32 = arith.constant 0 : i32
    %10 = arith.index_cast %c0_i32 : i32 to index
    %c0_10 = arith.constant 0 : index
    %c0_11 = arith.constant 0 : index
    %11 = vector.load %arg13[%10, %c0_10, %c0_11] : memref<8x8x384xf32, #tpu.memory_space<vmem>>, vector<1x8x384xf32>
    %12 = vector.shape_cast %11 : vector<1x8x384xf32> to vector<8x384xf32>
    %c0_12 = arith.constant 0 : index
    %c0_13 = arith.constant 0 : index
    %13 = vector.load %arg3[%c0_12, %c0_13] : memref<128x384xf32, #tpu.memory_space<vmem>>, vector<128x384xf32>
    %cst_14 = arith.constant dense<0.000000e+00> : vector<8x384xf32>
    %14 = tpu.matmul %9, %13, %cst_14 {dimension_numbers = #tpu.dot_dimension_numbers<[1], [0], [0], [1], [0, 0, 1, 1], [], []>} : vector<8x128xf32>, vector<128x384xf32>, vector<8x384xf32> -> vector<8x384xf32>
    %c0_15 = arith.constant 0 : index
    %c0_16 = arith.constant 0 : index
    %15 = vector.load %arg5[%c0_15, %c0_16] : memref<1x384xf32, #tpu.memory_space<vmem>>, vector<1x384xf32>
    %16 = vector.broadcast %15 : vector<1x384xf32> to vector<8x384xf32>
    %17 = arith.addf %14, %16 : vector<8x384xf32>
    %18 = vector.extract_strided_slice %12 {offsets = [0, 0], sizes = [8, 128], strides = [1, 1]} : vector<8x384xf32> to vector<8x128xf32>
    %19 = vector.extract_strided_slice %12 {offsets = [0, 128], sizes = [8, 128], strides = [1, 1]} : vector<8x384xf32> to vector<8x128xf32>
    %20 = vector.extract_strided_slice %12 {offsets = [0, 256], sizes = [8, 128], strides = [1, 1]} : vector<8x384xf32> to vector<8x128xf32>
    %21 = vector.extract_strided_slice %17 {offsets = [0, 0], sizes = [8, 128], strides = [1, 1]} : vector<8x384xf32> to vector<8x128xf32>
    %22 = vector.extract_strided_slice %17 {offsets = [0, 128], sizes = [8, 128], strides = [1, 1]} : vector<8x384xf32> to vector<8x128xf32>
    %23 = vector.extract_strided_slice %17 {offsets = [0, 256], sizes = [8, 128], strides = [1, 1]} : vector<8x384xf32> to vector<8x128xf32>
    %24 = arith.addf %18, %21 : vector<8x128xf32>
    %25 = arith.negf %24 : vector<8x128xf32>
    %26 = math.exp %25 : vector<8x128xf32>
    %cst_17 = arith.constant 1.000000e+00 : f32
    %27 = vector.broadcast %cst_17 : f32 to vector<8x128xf32>
    %28 = arith.addf %27, %26 : vector<8x128xf32>
    %29 = arith.divf %27, %28 : vector<8x128xf32>
    %30 = arith.addf %19, %22 : vector<8x128xf32>
    %31 = arith.negf %30 : vector<8x128xf32>
    %32 = math.exp %31 : vector<8x128xf32>
    %cst_18 = arith.constant 1.000000e+00 : f32
    %33 = vector.broadcast %cst_18 : f32 to vector<8x128xf32>
    %34 = arith.addf %33, %32 : vector<8x128xf32>
    %35 = arith.divf %33, %34 : vector<8x128xf32>
    %36 = arith.mulf %29, %23 : vector<8x128xf32>
    %37 = arith.addf %20, %36 : vector<8x128xf32>
    %38 = math.tanh %37 : vector<8x128xf32>
    %cst_19 = arith.constant 1.000000e+00 : f32
    %39 = vector.broadcast %cst_19 : f32 to vector<8x128xf32>
    %40 = arith.subf %39, %35 : vector<8x128xf32>
    %41 = arith.mulf %40, %38 : vector<8x128xf32>
    %42 = arith.mulf %35, %9 : vector<8x128xf32>
    %43 = arith.addf %41, %42 : vector<8x128xf32>
    %44 = arith.index_cast %c0_i32 : i32 to index
    %c0_20 = arith.constant 0 : index
    %c0_21 = arith.constant 0 : index
    %45 = vector.load %arg14[%44, %c0_20, %c0_21] : memref<8x8x128xf32, #tpu.memory_space<vmem>>, vector<1x8x128xf32>
    %46 = vector.shape_cast %45 : vector<1x8x128xf32> to vector<8x128xf32>
    %47 = vector.shape_cast %43 : vector<8x128xf32> to vector<1x8x128xf32>
    tpu.vector_store %arg14[%44, %c0_20, %c0_21], %47 {strides = array<i32>} : memref<8x8x128xf32, #tpu.memory_space<vmem>>, vector<1x8x128xf32>,
    %c1_i32 = arith.constant 1 : i32
    %48 = arith.index_cast %c1_i32 : i32 to index
    %c0_22 = arith.constant 0 : index
    %c0_23 = arith.constant 0 : index
    %49 = vector.load %arg13[%48, %c0_22, %c0_23] : memref<8x8x384xf32, #tpu.memory_space<vmem>>, vector<1x8x384xf32>
    %50 = vector.shape_cast %49 : vector<1x8x384xf32> to vector<8x384xf32>
    %c0_24 = arith.constant 0 : index
    %c0_25 = arith.constant 0 : index
    %51 = vector.load %arg3[%c0_24, %c0_25] : memref<128x384xf32, #tpu.memory_space<vmem>>, vector<128x384xf32>
    %cst_26 = arith.constant dense<0.000000e+00> : vector<8x384xf32>
    %52 = tpu.matmul %43, %51, %cst_26 {dimension_numbers = #tpu.dot_dimension_numbers<[1], [0], [0], [1], [0, 0, 1, 1], [], []>} : vector<8x128xf32>, vector<128x384xf32>, vector<8x384xf32> -> vector<8x384xf32>
    %c0_27 = arith.constant 0 : index
    %c0_28 = arith.constant 0 : index
    %53 = vector.load %arg5[%c0_27, %c0_28] : memref<1x384xf32, #tpu.memory_space<vmem>>, vector<1x384xf32>
    %54 = vector.broadcast %53 : vector<1x384xf32> to vector<8x384xf32>
    %55 = arith.addf %52, %54 : vector<8x384xf32>
    %56 = vector.extract_strided_slice %50 {offsets = [0, 0], sizes = [8, 128], strides = [1, 1]} : vector<8x384xf32> to vector<8x128xf32>
    %57 = vector.extract_strided_slice %50 {offsets = [0, 128], sizes = [8, 128], strides = [1, 1]} : vector<8x384xf32> to vector<8x128xf32>
    %58 = vector.extract_strided_slice %50 {offsets = [0, 256], sizes = [8, 128], strides = [1, 1]} : vector<8x384xf32> to vector<8x128xf32>
    %59 = vector.extract_strided_slice %55 {offsets = [0, 0], sizes = [8, 128], strides = [1, 1]} : vector<8x384xf32> to vector<8x128xf32>
    %60 = vector.extract_strided_slice %55 {offsets = [0, 128], sizes = [8, 128], strides = [1, 1]} : vector<8x384xf32> to vector<8x128xf32>
    %61 = vector.extract_strided_slice %55 {offsets = [0, 256], sizes = [8, 128], strides = [1, 1]} : vector<8x384xf32> to vector<8x128xf32>
    %62 = arith.addf %56, %59 : vector<8x128xf32>
    %63 = arith.negf %62 : vector<8x128xf32>
    %64 = math.exp %63 : vector<8x128xf32>
    %cst_29 = arith.constant 1.000000e+00 : f32
    %65 = vector.broadcast %cst_29 : f32 to vector<8x128xf32>
    %66 = arith.addf %65, %64 : vector<8x128xf32>
    %67 = arith.divf %65, %66 : vector<8x128xf32>
    %68 = arith.addf %57, %60 : vector<8x128xf32>
    %69 = arith.negf %68 : vector<8x128xf32>
    %70 = math.exp %69 : vector<8x128xf32>
    %cst_30 = arith.constant 1.000000e+00 : f32
    %71 = vector.broadcast %cst_30 : f32 to vector<8x128xf32>
    %72 = arith.addf %71, %70 : vector<8x128xf32>
    %73 = arith.divf %71, %72 : vector<8x128xf32>
    %74 = arith.mulf %67, %61 : vector<8x128xf32>
    %75 = arith.addf %58, %74 : vector<8x128xf32>
    %76 = math.tanh %75 : vector<8x128xf32>
    %cst_31 = arith.constant 1.000000e+00 : f32
    %77 = vector.broadcast %cst_31 : f32 to vector<8x128xf32>
    %78 = arith.subf %77, %73 : vector<8x128xf32>
    %79 = arith.mulf %78, %76 : vector<8x128xf32>
    %80 = arith.mulf %73, %43 : vector<8x128xf32>
    %81 = arith.addf %79, %80 : vector<8x128xf32>
    %82 = arith.index_cast %c1_i32 : i32 to index
    %c0_32 = arith.constant 0 : index
    %c0_33 = arith.constant 0 : index
    %83 = vector.load %arg14[%82, %c0_32, %c0_33] : memref<8x8x128xf32, #tpu.memory_space<vmem>>, vector<1x8x128xf32>
    %84 = vector.shape_cast %83 : vector<1x8x128xf32> to vector<8x128xf32>
    %85 = vector.shape_cast %81 : vector<8x128xf32> to vector<1x8x128xf32>
    tpu.vector_store %arg14[%82, %c0_32, %c0_33], %85 {strides = array<i32>} : memref<8x8x128xf32, #tpu.memory_space<vmem>>, vector<1x8x128xf32>,
    %c2_i32 = arith.constant 2 : i32
    %86 = arith.index_cast %c2_i32 : i32 to index
    %c0_34 = arith.constant 0 : index
    %c0_35 = arith.constant 0 : index
    %87 = vector.load %arg13[%86, %c0_34, %c0_35] : memref<8x8x384xf32, #tpu.memory_space<vmem>>, vector<1x8x384xf32>
    %88 = vector.shape_cast %87 : vector<1x8x384xf32> to vector<8x384xf32>
    %c0_36 = arith.constant 0 : index
    %c0_37 = arith.constant 0 : index
    %89 = vector.load %arg3[%c0_36, %c0_37] : memref<128x384xf32, #tpu.memory_space<vmem>>, vector<128x384xf32>
    %cst_38 = arith.constant dense<0.000000e+00> : vector<8x384xf32>
    %90 = tpu.matmul %81, %89, %cst_38 {dimension_numbers = #tpu.dot_dimension_numbers<[1], [0], [0], [1], [0, 0, 1, 1], [], []>} : vector<8x128xf32>, vector<128x384xf32>, vector<8x384xf32> -> vector<8x384xf32>
    %c0_39 = arith.constant 0 : index
    %c0_40 = arith.constant 0 : index
    %91 = vector.load %arg5[%c0_39, %c0_40] : memref<1x384xf32, #tpu.memory_space<vmem>>, vector<1x384xf32>
    %92 = vector.broadcast %91 : vector<1x384xf32> to vector<8x384xf32>
    %93 = arith.addf %90, %92 : vector<8x384xf32>
    %94 = vector.extract_strided_slice %88 {offsets = [0, 0], sizes = [8, 128], strides = [1, 1]} : vector<8x384xf32> to vector<8x128xf32>
    %95 = vector.extract_strided_slice %88 {offsets = [0, 128], sizes = [8, 128], strides = [1, 1]} : vector<8x384xf32> to vector<8x128xf32>
    %96 = vector.extract_strided_slice %88 {offsets = [0, 256], sizes = [8, 128], strides = [1, 1]} : vector<8x384xf32> to vector<8x128xf32>
    %97 = vector.extract_strided_slice %93 {offsets = [0, 0], sizes = [8, 128], strides = [1, 1]} : vector<8x384xf32> to vector<8x128xf32>
    %98 = vector.extract_strided_slice %93 {offsets = [0, 128], sizes = [8, 128], strides = [1, 1]} : vector<8x384xf32> to vector<8x128xf32>
    %99 = vector.extract_strided_slice %93 {offsets = [0, 256], sizes = [8, 128], strides = [1, 1]} : vector<8x384xf32> to vector<8x128xf32>
    %100 = arith.addf %94, %97 : vector<8x128xf32>
    %101 = arith.negf %100 : vector<8x128xf32>
    %102 = math.exp %101 : vector<8x128xf32>
    %cst_41 = arith.constant 1.000000e+00 : f32
    %103 = vector.broadcast %cst_41 : f32 to vector<8x128xf32>
    %104 = arith.addf %103, %102 : vector<8x128xf32>
    %105 = arith.divf %103, %104 : vector<8x128xf32>
    %106 = arith.addf %95, %98 : vector<8x128xf32>
    %107 = arith.negf %106 : vector<8x128xf32>
    %108 = math.exp %107 : vector<8x128xf32>
    %cst_42 = arith.constant 1.000000e+00 : f32
    %109 = vector.broadcast %cst_42 : f32 to vector<8x128xf32>
    %110 = arith.addf %109, %108 : vector<8x128xf32>
    %111 = arith.divf %109, %110 : vector<8x128xf32>
    %112 = arith.mulf %105, %99 : vector<8x128xf32>
    %113 = arith.addf %96, %112 : vector<8x128xf32>
    %114 = math.tanh %113 : vector<8x128xf32>
    %cst_43 = arith.constant 1.000000e+00 : f32
    %115 = vector.broadcast %cst_43 : f32 to vector<8x128xf32>
    %116 = arith.subf %115, %111 : vector<8x128xf32>
    %117 = arith.mulf %116, %114 : vector<8x128xf32>
    %118 = arith.mulf %111, %81 : vector<8x128xf32>
    %119 = arith.addf %117, %118 : vector<8x128xf32>
    %120 = arith.index_cast %c2_i32 : i32 to index
    %c0_44 = arith.constant 0 : index
    %c0_45 = arith.constant 0 : index
    %121 = vector.load %arg14[%120, %c0_44, %c0_45] : memref<8x8x128xf32, #tpu.memory_space<vmem>>, vector<1x8x128xf32>
    %122 = vector.shape_cast %121 : vector<1x8x128xf32> to vector<8x128xf32>
    %123 = vector.shape_cast %119 : vector<8x128xf32> to vector<1x8x128xf32>
    tpu.vector_store %arg14[%120, %c0_44, %c0_45], %123 {strides = array<i32>} : memref<8x8x128xf32, #tpu.memory_space<vmem>>, vector<1x8x128xf32>,
    %c3_i32 = arith.constant 3 : i32
    %124 = arith.index_cast %c3_i32 : i32 to index
    %c0_46 = arith.constant 0 : index
    %c0_47 = arith.constant 0 : index
    %125 = vector.load %arg13[%124, %c0_46, %c0_47] : memref<8x8x384xf32, #tpu.memory_space<vmem>>, vector<1x8x384xf32>
    %126 = vector.shape_cast %125 : vector<1x8x384xf32> to vector<8x384xf32>
    %c0_48 = arith.constant 0 : index
    %c0_49 = arith.constant 0 : index
    %127 = vector.load %arg3[%c0_48, %c0_49] : memref<128x384xf32, #tpu.memory_space<vmem>>, vector<128x384xf32>
    %cst_50 = arith.constant dense<0.000000e+00> : vector<8x384xf32>
    %128 = tpu.matmul %119, %127, %cst_50 {dimension_numbers = #tpu.dot_dimension_numbers<[1], [0], [0], [1], [0, 0, 1, 1], [], []>} : vector<8x128xf32>, vector<128x384xf32>, vector<8x384xf32> -> vector<8x384xf32>
    %c0_51 = arith.constant 0 : index
    %c0_52 = arith.constant 0 : index
    %129 = vector.load %arg5[%c0_51, %c0_52] : memref<1x384xf32, #tpu.memory_space<vmem>>, vector<1x384xf32>
    %130 = vector.broadcast %129 : vector<1x384xf32> to vector<8x384xf32>
    %131 = arith.addf %128, %130 : vector<8x384xf32>
    %132 = vector.extract_strided_slice %126 {offsets = [0, 0], sizes = [8, 128], strides = [1, 1]} : vector<8x384xf32> to vector<8x128xf32>
    %133 = vector.extract_strided_slice %126 {offsets = [0, 128], sizes = [8, 128], strides = [1, 1]} : vector<8x384xf32> to vector<8x128xf32>
    %134 = vector.extract_strided_slice %126 {offsets = [0, 256], sizes = [8, 128], strides = [1, 1]} : vector<8x384xf32> to vector<8x128xf32>
    %135 = vector.extract_strided_slice %131 {offsets = [0, 0], sizes = [8, 128], strides = [1, 1]} : vector<8x384xf32> to vector<8x128xf32>
    %136 = vector.extract_strided_slice %131 {offsets = [0, 128], sizes = [8, 128], strides = [1, 1]} : vector<8x384xf32> to vector<8x128xf32>
    %137 = vector.extract_strided_slice %131 {offsets = [0, 256], sizes = [8, 128], strides = [1, 1]} : vector<8x384xf32> to vector<8x128xf32>
    %138 = arith.addf %132, %135 : vector<8x128xf32>
    %139 = arith.negf %138 : vector<8x128xf32>
    %140 = math.exp %139 : vector<8x128xf32>
    %cst_53 = arith.constant 1.000000e+00 : f32
    %141 = vector.broadcast %cst_53 : f32 to vector<8x128xf32>
    %142 = arith.addf %141, %140 : vector<8x128xf32>
    %143 = arith.divf %141, %142 : vector<8x128xf32>
    %144 = arith.addf %133, %136 : vector<8x128xf32>
    %145 = arith.negf %144 : vector<8x128xf32>
    %146 = math.exp %145 : vector<8x128xf32>
    %cst_54 = arith.constant 1.000000e+00 : f32
    %147 = vector.broadcast %cst_54 : f32 to vector<8x128xf32>
    %148 = arith.addf %147, %146 : vector<8x128xf32>
    %149 = arith.divf %147, %148 : vector<8x128xf32>
    %150 = arith.mulf %143, %137 : vector<8x128xf32>
    %151 = arith.addf %134, %150 : vector<8x128xf32>
    %152 = math.tanh %151 : vector<8x128xf32>
    %cst_55 = arith.constant 1.000000e+00 : f32
    %153 = vector.broadcast %cst_55 : f32 to vector<8x128xf32>
    %154 = arith.subf %153, %149 : vector<8x128xf32>
    %155 = arith.mulf %154, %152 : vector<8x128xf32>
    %156 = arith.mulf %149, %119 : vector<8x128xf32>
    %157 = arith.addf %155, %156 : vector<8x128xf32>
    %158 = arith.index_cast %c3_i32 : i32 to index
    %c0_56 = arith.constant 0 : index
    %c0_57 = arith.constant 0 : index
    %159 = vector.load %arg14[%158, %c0_56, %c0_57] : memref<8x8x128xf32, #tpu.memory_space<vmem>>, vector<1x8x128xf32>
    %160 = vector.shape_cast %159 : vector<1x8x128xf32> to vector<8x128xf32>
    %161 = vector.shape_cast %157 : vector<8x128xf32> to vector<1x8x128xf32>
    tpu.vector_store %arg14[%158, %c0_56, %c0_57], %161 {strides = array<i32>} : memref<8x8x128xf32, #tpu.memory_space<vmem>>, vector<1x8x128xf32>,
    %c4_i32 = arith.constant 4 : i32
    %162 = arith.index_cast %c4_i32 : i32 to index
    %c0_58 = arith.constant 0 : index
    %c0_59 = arith.constant 0 : index
    %163 = vector.load %arg13[%162, %c0_58, %c0_59] : memref<8x8x384xf32, #tpu.memory_space<vmem>>, vector<1x8x384xf32>
    %164 = vector.shape_cast %163 : vector<1x8x384xf32> to vector<8x384xf32>
    %c0_60 = arith.constant 0 : index
    %c0_61 = arith.constant 0 : index
    %165 = vector.load %arg3[%c0_60, %c0_61] : memref<128x384xf32, #tpu.memory_space<vmem>>, vector<128x384xf32>
    %cst_62 = arith.constant dense<0.000000e+00> : vector<8x384xf32>
    %166 = tpu.matmul %157, %165, %cst_62 {dimension_numbers = #tpu.dot_dimension_numbers<[1], [0], [0], [1], [0, 0, 1, 1], [], []>} : vector<8x128xf32>, vector<128x384xf32>, vector<8x384xf32> -> vector<8x384xf32>
    %c0_63 = arith.constant 0 : index
    %c0_64 = arith.constant 0 : index
    %167 = vector.load %arg5[%c0_63, %c0_64] : memref<1x384xf32, #tpu.memory_space<vmem>>, vector<1x384xf32>
    %168 = vector.broadcast %167 : vector<1x384xf32> to vector<8x384xf32>
    %169 = arith.addf %166, %168 : vector<8x384xf32>
    %170 = vector.extract_strided_slice %164 {offsets = [0, 0], sizes = [8, 128], strides = [1, 1]} : vector<8x384xf32> to vector<8x128xf32>
    %171 = vector.extract_strided_slice %164 {offsets = [0, 128], sizes = [8, 128], strides = [1, 1]} : vector<8x384xf32> to vector<8x128xf32>
    %172 = vector.extract_strided_slice %164 {offsets = [0, 256], sizes = [8, 128], strides = [1, 1]} : vector<8x384xf32> to vector<8x128xf32>
    %173 = vector.extract_strided_slice %169 {offsets = [0, 0], sizes = [8, 128], strides = [1, 1]} : vector<8x384xf32> to vector<8x128xf32>
    %174 = vector.extract_strided_slice %169 {offsets = [0, 128], sizes = [8, 128], strides = [1, 1]} : vector<8x384xf32> to vector<8x128xf32>
    %175 = vector.extract_strided_slice %169 {offsets = [0, 256], sizes = [8, 128], strides = [1, 1]} : vector<8x384xf32> to vector<8x128xf32>
    %176 = arith.addf %170, %173 : vector<8x128xf32>
    %177 = arith.negf %176 : vector<8x128xf32>
    %178 = math.exp %177 : vector<8x128xf32>
    %cst_65 = arith.constant 1.000000e+00 : f32
    %179 = vector.broadcast %cst_65 : f32 to vector<8x128xf32>
    %180 = arith.addf %179, %178 : vector<8x128xf32>
    %181 = arith.divf %179, %180 : vector<8x128xf32>
    %182 = arith.addf %171, %174 : vector<8x128xf32>
    %183 = arith.negf %182 : vector<8x128xf32>
    %184 = math.exp %183 : vector<8x128xf32>
    %cst_66 = arith.constant 1.000000e+00 : f32
    %185 = vector.broadcast %cst_66 : f32 to vector<8x128xf32>
    %186 = arith.addf %185, %184 : vector<8x128xf32>
    %187 = arith.divf %185, %186 : vector<8x128xf32>
    %188 = arith.mulf %181, %175 : vector<8x128xf32>
    %189 = arith.addf %172, %188 : vector<8x128xf32>
    %190 = math.tanh %189 : vector<8x128xf32>
    %cst_67 = arith.constant 1.000000e+00 : f32
    %191 = vector.broadcast %cst_67 : f32 to vector<8x128xf32>
    %192 = arith.subf %191, %187 : vector<8x128xf32>
    %193 = arith.mulf %192, %190 : vector<8x128xf32>
    %194 = arith.mulf %187, %157 : vector<8x128xf32>
    %195 = arith.addf %193, %194 : vector<8x128xf32>
    %196 = arith.index_cast %c4_i32 : i32 to index
    %c0_68 = arith.constant 0 : index
    %c0_69 = arith.constant 0 : index
    %197 = vector.load %arg14[%196, %c0_68, %c0_69] : memref<8x8x128xf32, #tpu.memory_space<vmem>>, vector<1x8x128xf32>
    %198 = vector.shape_cast %197 : vector<1x8x128xf32> to vector<8x128xf32>
    %199 = vector.shape_cast %195 : vector<8x128xf32> to vector<1x8x128xf32>
    tpu.vector_store %arg14[%196, %c0_68, %c0_69], %199 {strides = array<i32>} : memref<8x8x128xf32, #tpu.memory_space<vmem>>, vector<1x8x128xf32>,
    %c5_i32 = arith.constant 5 : i32
    %200 = arith.index_cast %c5_i32 : i32 to index
    %c0_70 = arith.constant 0 : index
    %c0_71 = arith.constant 0 : index
    %201 = vector.load %arg13[%200, %c0_70, %c0_71] : memref<8x8x384xf32, #tpu.memory_space<vmem>>, vector<1x8x384xf32>
    %202 = vector.shape_cast %201 : vector<1x8x384xf32> to vector<8x384xf32>
    %c0_72 = arith.constant 0 : index
    %c0_73 = arith.constant 0 : index
    %203 = vector.load %arg3[%c0_72, %c0_73] : memref<128x384xf32, #tpu.memory_space<vmem>>, vector<128x384xf32>
    %cst_74 = arith.constant dense<0.000000e+00> : vector<8x384xf32>
    %204 = tpu.matmul %195, %203, %cst_74 {dimension_numbers = #tpu.dot_dimension_numbers<[1], [0], [0], [1], [0, 0, 1, 1], [], []>} : vector<8x128xf32>, vector<128x384xf32>, vector<8x384xf32> -> vector<8x384xf32>
    %c0_75 = arith.constant 0 : index
    %c0_76 = arith.constant 0 : index
    %205 = vector.load %arg5[%c0_75, %c0_76] : memref<1x384xf32, #tpu.memory_space<vmem>>, vector<1x384xf32>
    %206 = vector.broadcast %205 : vector<1x384xf32> to vector<8x384xf32>
    %207 = arith.addf %204, %206 : vector<8x384xf32>
    %208 = vector.extract_strided_slice %202 {offsets = [0, 0], sizes = [8, 128], strides = [1, 1]} : vector<8x384xf32> to vector<8x128xf32>
    %209 = vector.extract_strided_slice %202 {offsets = [0, 128], sizes = [8, 128], strides = [1, 1]} : vector<8x384xf32> to vector<8x128xf32>
    %210 = vector.extract_strided_slice %202 {offsets = [0, 256], sizes = [8, 128], strides = [1, 1]} : vector<8x384xf32> to vector<8x128xf32>
    %211 = vector.extract_strided_slice %207 {offsets = [0, 0], sizes = [8, 128], strides = [1, 1]} : vector<8x384xf32> to vector<8x128xf32>
    %212 = vector.extract_strided_slice %207 {offsets = [0, 128], sizes = [8, 128], strides = [1, 1]} : vector<8x384xf32> to vector<8x128xf32>
    %213 = vector.extract_strided_slice %207 {offsets = [0, 256], sizes = [8, 128], strides = [1, 1]} : vector<8x384xf32> to vector<8x128xf32>
    %214 = arith.addf %208, %211 : vector<8x128xf32>
    %215 = arith.negf %214 : vector<8x128xf32>
    %216 = math.exp %215 : vector<8x128xf32>
    %cst_77 = arith.constant 1.000000e+00 : f32
    %217 = vector.broadcast %cst_77 : f32 to vector<8x128xf32>
    %218 = arith.addf %217, %216 : vector<8x128xf32>
    %219 = arith.divf %217, %218 : vector<8x128xf32>
    %220 = arith.addf %209, %212 : vector<8x128xf32>
    %221 = arith.negf %220 : vector<8x128xf32>
    %222 = math.exp %221 : vector<8x128xf32>
    %cst_78 = arith.constant 1.000000e+00 : f32
    %223 = vector.broadcast %cst_78 : f32 to vector<8x128xf32>
    %224 = arith.addf %223, %222 : vector<8x128xf32>
    %225 = arith.divf %223, %224 : vector<8x128xf32>
    %226 = arith.mulf %219, %213 : vector<8x128xf32>
    %227 = arith.addf %210, %226 : vector<8x128xf32>
    %228 = math.tanh %227 : vector<8x128xf32>
    %cst_79 = arith.constant 1.000000e+00 : f32
    %229 = vector.broadcast %cst_79 : f32 to vector<8x128xf32>
    %230 = arith.subf %229, %225 : vector<8x128xf32>
    %231 = arith.mulf %230, %228 : vector<8x128xf32>
    %232 = arith.mulf %225, %195 : vector<8x128xf32>
    %233 = arith.addf %231, %232 : vector<8x128xf32>
    %234 = arith.index_cast %c5_i32 : i32 to index
    %c0_80 = arith.constant 0 : index
    %c0_81 = arith.constant 0 : index
    %235 = vector.load %arg14[%234, %c0_80, %c0_81] : memref<8x8x128xf32, #tpu.memory_space<vmem>>, vector<1x8x128xf32>
    %236 = vector.shape_cast %235 : vector<1x8x128xf32> to vector<8x128xf32>
    %237 = vector.shape_cast %233 : vector<8x128xf32> to vector<1x8x128xf32>
    tpu.vector_store %arg14[%234, %c0_80, %c0_81], %237 {strides = array<i32>} : memref<8x8x128xf32, #tpu.memory_space<vmem>>, vector<1x8x128xf32>,
    %c6_i32 = arith.constant 6 : i32
    %238 = arith.index_cast %c6_i32 : i32 to index
    %c0_82 = arith.constant 0 : index
    %c0_83 = arith.constant 0 : index
    %239 = vector.load %arg13[%238, %c0_82, %c0_83] : memref<8x8x384xf32, #tpu.memory_space<vmem>>, vector<1x8x384xf32>
    %240 = vector.shape_cast %239 : vector<1x8x384xf32> to vector<8x384xf32>
    %c0_84 = arith.constant 0 : index
    %c0_85 = arith.constant 0 : index
    %241 = vector.load %arg3[%c0_84, %c0_85] : memref<128x384xf32, #tpu.memory_space<vmem>>, vector<128x384xf32>
    %cst_86 = arith.constant dense<0.000000e+00> : vector<8x384xf32>
    %242 = tpu.matmul %233, %241, %cst_86 {dimension_numbers = #tpu.dot_dimension_numbers<[1], [0], [0], [1], [0, 0, 1, 1], [], []>} : vector<8x128xf32>, vector<128x384xf32>, vector<8x384xf32> -> vector<8x384xf32>
    %c0_87 = arith.constant 0 : index
    %c0_88 = arith.constant 0 : index
    %243 = vector.load %arg5[%c0_87, %c0_88] : memref<1x384xf32, #tpu.memory_space<vmem>>, vector<1x384xf32>
    %244 = vector.broadcast %243 : vector<1x384xf32> to vector<8x384xf32>
    %245 = arith.addf %242, %244 : vector<8x384xf32>
    %246 = vector.extract_strided_slice %240 {offsets = [0, 0], sizes = [8, 128], strides = [1, 1]} : vector<8x384xf32> to vector<8x128xf32>
    %247 = vector.extract_strided_slice %240 {offsets = [0, 128], sizes = [8, 128], strides = [1, 1]} : vector<8x384xf32> to vector<8x128xf32>
    %248 = vector.extract_strided_slice %240 {offsets = [0, 256], sizes = [8, 128], strides = [1, 1]} : vector<8x384xf32> to vector<8x128xf32>
    %249 = vector.extract_strided_slice %245 {offsets = [0, 0], sizes = [8, 128], strides = [1, 1]} : vector<8x384xf32> to vector<8x128xf32>
    %250 = vector.extract_strided_slice %245 {offsets = [0, 128], sizes = [8, 128], strides = [1, 1]} : vector<8x384xf32> to vector<8x128xf32>
    %251 = vector.extract_strided_slice %245 {offsets = [0, 256], sizes = [8, 128], strides = [1, 1]} : vector<8x384xf32> to vector<8x128xf32>
    %252 = arith.addf %246, %249 : vector<8x128xf32>
    %253 = arith.negf %252 : vector<8x128xf32>
    %254 = math.exp %253 : vector<8x128xf32>
    %cst_89 = arith.constant 1.000000e+00 : f32
    %255 = vector.broadcast %cst_89 : f32 to vector<8x128xf32>
    %256 = arith.addf %255, %254 : vector<8x128xf32>
    %257 = arith.divf %255, %256 : vector<8x128xf32>
    %258 = arith.addf %247, %250 : vector<8x128xf32>
    %259 = arith.negf %258 : vector<8x128xf32>
    %260 = math.exp %259 : vector<8x128xf32>
    %cst_90 = arith.constant 1.000000e+00 : f32
    %261 = vector.broadcast %cst_90 : f32 to vector<8x128xf32>
    %262 = arith.addf %261, %260 : vector<8x128xf32>
    %263 = arith.divf %261, %262 : vector<8x128xf32>
    %264 = arith.mulf %257, %251 : vector<8x128xf32>
    %265 = arith.addf %248, %264 : vector<8x128xf32>
    %266 = math.tanh %265 : vector<8x128xf32>
    %cst_91 = arith.constant 1.000000e+00 : f32
    %267 = vector.broadcast %cst_91 : f32 to vector<8x128xf32>
    %268 = arith.subf %267, %263 : vector<8x128xf32>
    %269 = arith.mulf %268, %266 : vector<8x128xf32>
    %270 = arith.mulf %263, %233 : vector<8x128xf32>
    %271 = arith.addf %269, %270 : vector<8x128xf32>
    %272 = arith.index_cast %c6_i32 : i32 to index
    %c0_92 = arith.constant 0 : index
    %c0_93 = arith.constant 0 : index
    %273 = vector.load %arg14[%272, %c0_92, %c0_93] : memref<8x8x128xf32, #tpu.memory_space<vmem>>, vector<1x8x128xf32>
    %274 = vector.shape_cast %273 : vector<1x8x128xf32> to vector<8x128xf32>
    %275 = vector.shape_cast %271 : vector<8x128xf32> to vector<1x8x128xf32>
    tpu.vector_store %arg14[%272, %c0_92, %c0_93], %275 {strides = array<i32>} : memref<8x8x128xf32, #tpu.memory_space<vmem>>, vector<1x8x128xf32>,
    %c7_i32 = arith.constant 7 : i32
    %276 = arith.index_cast %c7_i32 : i32 to index
    %c0_94 = arith.constant 0 : index
    %c0_95 = arith.constant 0 : index
    %277 = vector.load %arg13[%276, %c0_94, %c0_95] : memref<8x8x384xf32, #tpu.memory_space<vmem>>, vector<1x8x384xf32>
    %278 = vector.shape_cast %277 : vector<1x8x384xf32> to vector<8x384xf32>
    %c0_96 = arith.constant 0 : index
    %c0_97 = arith.constant 0 : index
    %279 = vector.load %arg3[%c0_96, %c0_97] : memref<128x384xf32, #tpu.memory_space<vmem>>, vector<128x384xf32>
    %cst_98 = arith.constant dense<0.000000e+00> : vector<8x384xf32>
    %280 = tpu.matmul %271, %279, %cst_98 {dimension_numbers = #tpu.dot_dimension_numbers<[1], [0], [0], [1], [0, 0, 1, 1], [], []>} : vector<8x128xf32>, vector<128x384xf32>, vector<8x384xf32> -> vector<8x384xf32>
    %c0_99 = arith.constant 0 : index
    %c0_100 = arith.constant 0 : index
    %281 = vector.load %arg5[%c0_99, %c0_100] : memref<1x384xf32, #tpu.memory_space<vmem>>, vector<1x384xf32>
    %282 = vector.broadcast %281 : vector<1x384xf32> to vector<8x384xf32>
    %283 = arith.addf %280, %282 : vector<8x384xf32>
    %284 = vector.extract_strided_slice %278 {offsets = [0, 0], sizes = [8, 128], strides = [1, 1]} : vector<8x384xf32> to vector<8x128xf32>
    %285 = vector.extract_strided_slice %278 {offsets = [0, 128], sizes = [8, 128], strides = [1, 1]} : vector<8x384xf32> to vector<8x128xf32>
    %286 = vector.extract_strided_slice %278 {offsets = [0, 256], sizes = [8, 128], strides = [1, 1]} : vector<8x384xf32> to vector<8x128xf32>
    %287 = vector.extract_strided_slice %283 {offsets = [0, 0], sizes = [8, 128], strides = [1, 1]} : vector<8x384xf32> to vector<8x128xf32>
    %288 = vector.extract_strided_slice %283 {offsets = [0, 128], sizes = [8, 128], strides = [1, 1]} : vector<8x384xf32> to vector<8x128xf32>
    %289 = vector.extract_strided_slice %283 {offsets = [0, 256], sizes = [8, 128], strides = [1, 1]} : vector<8x384xf32> to vector<8x128xf32>
    %290 = arith.addf %284, %287 : vector<8x128xf32>
    %291 = arith.negf %290 : vector<8x128xf32>
    %292 = math.exp %291 : vector<8x128xf32>
    %cst_101 = arith.constant 1.000000e+00 : f32
    %293 = vector.broadcast %cst_101 : f32 to vector<8x128xf32>
    %294 = arith.addf %293, %292 : vector<8x128xf32>
    %295 = arith.divf %293, %294 : vector<8x128xf32>
    %296 = arith.addf %285, %288 : vector<8x128xf32>
    %297 = arith.negf %296 : vector<8x128xf32>
    %298 = math.exp %297 : vector<8x128xf32>
    %cst_102 = arith.constant 1.000000e+00 : f32
    %299 = vector.broadcast %cst_102 : f32 to vector<8x128xf32>
    %300 = arith.addf %299, %298 : vector<8x128xf32>
    %301 = arith.divf %299, %300 : vector<8x128xf32>
    %302 = arith.mulf %295, %289 : vector<8x128xf32>
    %303 = arith.addf %286, %302 : vector<8x128xf32>
    %304 = math.tanh %303 : vector<8x128xf32>
    %cst_103 = arith.constant 1.000000e+00 : f32
    %305 = vector.broadcast %cst_103 : f32 to vector<8x128xf32>
    %306 = arith.subf %305, %301 : vector<8x128xf32>
    %307 = arith.mulf %306, %304 : vector<8x128xf32>
    %308 = arith.mulf %301, %271 : vector<8x128xf32>
    %309 = arith.addf %307, %308 : vector<8x128xf32>
    %310 = arith.index_cast %c7_i32 : i32 to index
    %c0_104 = arith.constant 0 : index
    %c0_105 = arith.constant 0 : index
    %311 = vector.load %arg14[%310, %c0_104, %c0_105] : memref<8x8x128xf32, #tpu.memory_space<vmem>>, vector<1x8x128xf32>
    %312 = vector.shape_cast %311 : vector<1x8x128xf32> to vector<8x128xf32>
    %313 = vector.shape_cast %309 : vector<8x128xf32> to vector<1x8x128xf32>
    tpu.vector_store %arg14[%310, %c0_104, %c0_105], %313 {strides = array<i32>} : memref<8x8x128xf32, #tpu.memory_space<vmem>>, vector<1x8x128xf32>,
    %c8_i32 = arith.constant 8 : i32
    %c0_106 = arith.constant 0 : index
    %c0_107 = arith.constant 0 : index
    %c0_108 = arith.constant 0 : index
    %314 = vector.load %arg14[%c0_106, %c0_107, %c0_108] : memref<8x8x128xf32, #tpu.memory_space<vmem>>, vector<8x8x128xf32>
    %315 = vector.shape_cast %314 : vector<8x8x128xf32> to vector<64x128xf32>
    %c0_109 = arith.constant 0 : index
    %c0_110 = arith.constant 0 : index
    %316 = vector.load %arg6[%c0_109, %c0_110] : memref<128x384xf32, #tpu.memory_space<vmem>>, vector<128x384xf32>
    %cst_111 = arith.constant dense<0.000000e+00> : vector<64x384xf32>
    %317 = tpu.matmul %315, %316, %cst_111 {dimension_numbers = #tpu.dot_dimension_numbers<[1], [0], [0], [1], [0, 0, 1, 1], [], []>} : vector<64x128xf32>, vector<128x384xf32>, vector<64x384xf32> -> vector<64x384xf32>
    %c0_112 = arith.constant 0 : index
    %c0_113 = arith.constant 0 : index
    %318 = vector.load %arg8[%c0_112, %c0_113] : memref<1x384xf32, #tpu.memory_space<vmem>>, vector<1x384xf32>
    %319 = vector.broadcast %318 : vector<1x384xf32> to vector<64x384xf32>
    %320 = arith.addf %317, %319 : vector<64x384xf32>
    %321 = vector.shape_cast %320 : vector<64x384xf32> to vector<8x8x384xf32>
    %c0_114 = arith.constant 0 : index
    %c0_115 = arith.constant 0 : index
    %c0_116 = arith.constant 0 : index
    %322 = vector.load %arg13[%c0_114, %c0_115, %c0_116] : memref<8x8x384xf32, #tpu.memory_space<vmem>>, vector<8x8x384xf32>
    tpu.vector_store %arg13[%c0_114, %c0_115, %c0_116], %321 {strides = array<i32>} : memref<8x8x384xf32, #tpu.memory_space<vmem>>, vector<8x8x384xf32>,
    %cst_117 = arith.constant 0.000000e+00 : f32
    %323 = vector.broadcast %cst_117 : f32 to vector<8x128xf32>
    %c0_i32_118 = arith.constant 0 : i32
    %324 = arith.index_cast %c0_i32_118 : i32 to index
    %c0_119 = arith.constant 0 : index
    %c0_120 = arith.constant 0 : index
    %325 = vector.load %arg13[%324, %c0_119, %c0_120] : memref<8x8x384xf32, #tpu.memory_space<vmem>>, vector<1x8x384xf32>
    %326 = vector.shape_cast %325 : vector<1x8x384xf32> to vector<8x384xf32>
    %c0_121 = arith.constant 0 : index
    %c0_122 = arith.constant 0 : index
    %327 = vector.load %arg7[%c0_121, %c0_122] : memref<128x384xf32, #tpu.memory_space<vmem>>, vector<128x384xf32>
    %cst_123 = arith.constant dense<0.000000e+00> : vector<8x384xf32>
    %328 = tpu.matmul %323, %327, %cst_123 {dimension_numbers = #tpu.dot_dimension_numbers<[1], [0], [0], [1], [0, 0, 1, 1], [], []>} : vector<8x128xf32>, vector<128x384xf32>, vector<8x384xf32> -> vector<8x384xf32>
    %c0_124 = arith.constant 0 : index
    %c0_125 = arith.constant 0 : index
    %329 = vector.load %arg9[%c0_124, %c0_125] : memref<1x384xf32, #tpu.memory_space<vmem>>, vector<1x384xf32>
    %330 = vector.broadcast %329 : vector<1x384xf32> to vector<8x384xf32>
    %331 = arith.addf %328, %330 : vector<8x384xf32>
    %332 = vector.extract_strided_slice %326 {offsets = [0, 0], sizes = [8, 128], strides = [1, 1]} : vector<8x384xf32> to vector<8x128xf32>
    %333 = vector.extract_strided_slice %326 {offsets = [0, 128], sizes = [8, 128], strides = [1, 1]} : vector<8x384xf32> to vector<8x128xf32>
    %334 = vector.extract_strided_slice %326 {offsets = [0, 256], sizes = [8, 128], strides = [1, 1]} : vector<8x384xf32> to vector<8x128xf32>
    %335 = vector.extract_strided_slice %331 {offsets = [0, 0], sizes = [8, 128], strides = [1, 1]} : vector<8x384xf32> to vector<8x128xf32>
    %336 = vector.extract_strided_slice %331 {offsets = [0, 128], sizes = [8, 128], strides = [1, 1]} : vector<8x384xf32> to vector<8x128xf32>
    %337 = vector.extract_strided_slice %331 {offsets = [0, 256], sizes = [8, 128], strides = [1, 1]} : vector<8x384xf32> to vector<8x128xf32>
    %338 = arith.addf %332, %335 : vector<8x128xf32>
    %339 = arith.negf %338 : vector<8x128xf32>
    %340 = math.exp %339 : vector<8x128xf32>
    %cst_126 = arith.constant 1.000000e+00 : f32
    %341 = vector.broadcast %cst_126 : f32 to vector<8x128xf32>
    %342 = arith.addf %341, %340 : vector<8x128xf32>
    %343 = arith.divf %341, %342 : vector<8x128xf32>
    %344 = arith.addf %333, %336 : vector<8x128xf32>
    %345 = arith.negf %344 : vector<8x128xf32>
    %346 = math.exp %345 : vector<8x128xf32>
    %cst_127 = arith.constant 1.000000e+00 : f32
    %347 = vector.broadcast %cst_127 : f32 to vector<8x128xf32>
    %348 = arith.addf %347, %346 : vector<8x128xf32>
    %349 = arith.divf %347, %348 : vector<8x128xf32>
    %350 = arith.mulf %343, %337 : vector<8x128xf32>
    %351 = arith.addf %334, %350 : vector<8x128xf32>
    %352 = math.tanh %351 : vector<8x128xf32>
    %cst_128 = arith.constant 1.000000e+00 : f32
    %353 = vector.broadcast %cst_128 : f32 to vector<8x128xf32>
    %354 = arith.subf %353, %349 : vector<8x128xf32>
    %355 = arith.mulf %354, %352 : vector<8x128xf32>
    %356 = arith.mulf %349, %323 : vector<8x128xf32>
    %357 = arith.addf %355, %356 : vector<8x128xf32>
    %c1_i32_129 = arith.constant 1 : i32
    %358 = arith.index_cast %c1_i32_129 : i32 to index
    %c0_130 = arith.constant 0 : index
    %c0_131 = arith.constant 0 : index
    %359 = vector.load %arg13[%358, %c0_130, %c0_131] : memref<8x8x384xf32, #tpu.memory_space<vmem>>, vector<1x8x384xf32>
    %360 = vector.shape_cast %359 : vector<1x8x384xf32> to vector<8x384xf32>
    %c0_132 = arith.constant 0 : index
    %c0_133 = arith.constant 0 : index
    %361 = vector.load %arg7[%c0_132, %c0_133] : memref<128x384xf32, #tpu.memory_space<vmem>>, vector<128x384xf32>
    %cst_134 = arith.constant dense<0.000000e+00> : vector<8x384xf32>
    %362 = tpu.matmul %357, %361, %cst_134 {dimension_numbers = #tpu.dot_dimension_numbers<[1], [0], [0], [1], [0, 0, 1, 1], [], []>} : vector<8x128xf32>, vector<128x384xf32>, vector<8x384xf32> -> vector<8x384xf32>
    %c0_135 = arith.constant 0 : index
    %c0_136 = arith.constant 0 : index
    %363 = vector.load %arg9[%c0_135, %c0_136] : memref<1x384xf32, #tpu.memory_space<vmem>>, vector<1x384xf32>
    %364 = vector.broadcast %363 : vector<1x384xf32> to vector<8x384xf32>
    %365 = arith.addf %362, %364 : vector<8x384xf32>
    %366 = vector.extract_strided_slice %360 {offsets = [0, 0], sizes = [8, 128], strides = [1, 1]} : vector<8x384xf32> to vector<8x128xf32>
    %367 = vector.extract_strided_slice %360 {offsets = [0, 128], sizes = [8, 128], strides = [1, 1]} : vector<8x384xf32> to vector<8x128xf32>
    %368 = vector.extract_strided_slice %360 {offsets = [0, 256], sizes = [8, 128], strides = [1, 1]} : vector<8x384xf32> to vector<8x128xf32>
    %369 = vector.extract_strided_slice %365 {offsets = [0, 0], sizes = [8, 128], strides = [1, 1]} : vector<8x384xf32> to vector<8x128xf32>
    %370 = vector.extract_strided_slice %365 {offsets = [0, 128], sizes = [8, 128], strides = [1, 1]} : vector<8x384xf32> to vector<8x128xf32>
    %371 = vector.extract_strided_slice %365 {offsets = [0, 256], sizes = [8, 128], strides = [1, 1]} : vector<8x384xf32> to vector<8x128xf32>
    %372 = arith.addf %366, %369 : vector<8x128xf32>
    %373 = arith.negf %372 : vector<8x128xf32>
    %374 = math.exp %373 : vector<8x128xf32>
    %cst_137 = arith.constant 1.000000e+00 : f32
    %375 = vector.broadcast %cst_137 : f32 to vector<8x128xf32>
    %376 = arith.addf %375, %374 : vector<8x128xf32>
    %377 = arith.divf %375, %376 : vector<8x128xf32>
    %378 = arith.addf %367, %370 : vector<8x128xf32>
    %379 = arith.negf %378 : vector<8x128xf32>
    %380 = math.exp %379 : vector<8x128xf32>
    %cst_138 = arith.constant 1.000000e+00 : f32
    %381 = vector.broadcast %cst_138 : f32 to vector<8x128xf32>
    %382 = arith.addf %381, %380 : vector<8x128xf32>
    %383 = arith.divf %381, %382 : vector<8x128xf32>
    %384 = arith.mulf %377, %371 : vector<8x128xf32>
    %385 = arith.addf %368, %384 : vector<8x128xf32>
    %386 = math.tanh %385 : vector<8x128xf32>
    %cst_139 = arith.constant 1.000000e+00 : f32
    %387 = vector.broadcast %cst_139 : f32 to vector<8x128xf32>
    %388 = arith.subf %387, %383 : vector<8x128xf32>
    %389 = arith.mulf %388, %386 : vector<8x128xf32>
    %390 = arith.mulf %383, %357 : vector<8x128xf32>
    %391 = arith.addf %389, %390 : vector<8x128xf32>
    %c2_i32_140 = arith.constant 2 : i32
    %392 = arith.index_cast %c2_i32_140 : i32 to index
    %c0_141 = arith.constant 0 : index
    %c0_142 = arith.constant 0 : index
    %393 = vector.load %arg13[%392, %c0_141, %c0_142] : memref<8x8x384xf32, #tpu.memory_space<vmem>>, vector<1x8x384xf32>
    %394 = vector.shape_cast %393 : vector<1x8x384xf32> to vector<8x384xf32>
    %c0_143 = arith.constant 0 : index
    %c0_144 = arith.constant 0 : index
    %395 = vector.load %arg7[%c0_143, %c0_144] : memref<128x384xf32, #tpu.memory_space<vmem>>, vector<128x384xf32>
    %cst_145 = arith.constant dense<0.000000e+00> : vector<8x384xf32>
    %396 = tpu.matmul %391, %395, %cst_145 {dimension_numbers = #tpu.dot_dimension_numbers<[1], [0], [0], [1], [0, 0, 1, 1], [], []>} : vector<8x128xf32>, vector<128x384xf32>, vector<8x384xf32> -> vector<8x384xf32>
    %c0_146 = arith.constant 0 : index
    %c0_147 = arith.constant 0 : index
    %397 = vector.load %arg9[%c0_146, %c0_147] : memref<1x384xf32, #tpu.memory_space<vmem>>, vector<1x384xf32>
    %398 = vector.broadcast %397 : vector<1x384xf32> to vector<8x384xf32>
    %399 = arith.addf %396, %398 : vector<8x384xf32>
    %400 = vector.extract_strided_slice %394 {offsets = [0, 0], sizes = [8, 128], strides = [1, 1]} : vector<8x384xf32> to vector<8x128xf32>
    %401 = vector.extract_strided_slice %394 {offsets = [0, 128], sizes = [8, 128], strides = [1, 1]} : vector<8x384xf32> to vector<8x128xf32>
    %402 = vector.extract_strided_slice %394 {offsets = [0, 256], sizes = [8, 128], strides = [1, 1]} : vector<8x384xf32> to vector<8x128xf32>
    %403 = vector.extract_strided_slice %399 {offsets = [0, 0], sizes = [8, 128], strides = [1, 1]} : vector<8x384xf32> to vector<8x128xf32>
    %404 = vector.extract_strided_slice %399 {offsets = [0, 128], sizes = [8, 128], strides = [1, 1]} : vector<8x384xf32> to vector<8x128xf32>
    %405 = vector.extract_strided_slice %399 {offsets = [0, 256], sizes = [8, 128], strides = [1, 1]} : vector<8x384xf32> to vector<8x128xf32>
    %406 = arith.addf %400, %403 : vector<8x128xf32>
    %407 = arith.negf %406 : vector<8x128xf32>
    %408 = math.exp %407 : vector<8x128xf32>
    %cst_148 = arith.constant 1.000000e+00 : f32
    %409 = vector.broadcast %cst_148 : f32 to vector<8x128xf32>
    %410 = arith.addf %409, %408 : vector<8x128xf32>
    %411 = arith.divf %409, %410 : vector<8x128xf32>
    %412 = arith.addf %401, %404 : vector<8x128xf32>
    %413 = arith.negf %412 : vector<8x128xf32>
    %414 = math.exp %413 : vector<8x128xf32>
    %cst_149 = arith.constant 1.000000e+00 : f32
    %415 = vector.broadcast %cst_149 : f32 to vector<8x128xf32>
    %416 = arith.addf %415, %414 : vector<8x128xf32>
    %417 = arith.divf %415, %416 : vector<8x128xf32>
    %418 = arith.mulf %411, %405 : vector<8x128xf32>
    %419 = arith.addf %402, %418 : vector<8x128xf32>
    %420 = math.tanh %419 : vector<8x128xf32>
    %cst_150 = arith.constant 1.000000e+00 : f32
    %421 = vector.broadcast %cst_150 : f32 to vector<8x128xf32>
    %422 = arith.subf %421, %417 : vector<8x128xf32>
    %423 = arith.mulf %422, %420 : vector<8x128xf32>
    %424 = arith.mulf %417, %391 : vector<8x128xf32>
    %425 = arith.addf %423, %424 : vector<8x128xf32>
    %c3_i32_151 = arith.constant 3 : i32
    %426 = arith.index_cast %c3_i32_151 : i32 to index
    %c0_152 = arith.constant 0 : index
    %c0_153 = arith.constant 0 : index
    %427 = vector.load %arg13[%426, %c0_152, %c0_153] : memref<8x8x384xf32, #tpu.memory_space<vmem>>, vector<1x8x384xf32>
    %428 = vector.shape_cast %427 : vector<1x8x384xf32> to vector<8x384xf32>
    %c0_154 = arith.constant 0 : index
    %c0_155 = arith.constant 0 : index
    %429 = vector.load %arg7[%c0_154, %c0_155] : memref<128x384xf32, #tpu.memory_space<vmem>>, vector<128x384xf32>
    %cst_156 = arith.constant dense<0.000000e+00> : vector<8x384xf32>
    %430 = tpu.matmul %425, %429, %cst_156 {dimension_numbers = #tpu.dot_dimension_numbers<[1], [0], [0], [1], [0, 0, 1, 1], [], []>} : vector<8x128xf32>, vector<128x384xf32>, vector<8x384xf32> -> vector<8x384xf32>
    %c0_157 = arith.constant 0 : index
    %c0_158 = arith.constant 0 : index
    %431 = vector.load %arg9[%c0_157, %c0_158] : memref<1x384xf32, #tpu.memory_space<vmem>>, vector<1x384xf32>
    %432 = vector.broadcast %431 : vector<1x384xf32> to vector<8x384xf32>
    %433 = arith.addf %430, %432 : vector<8x384xf32>
    %434 = vector.extract_strided_slice %428 {offsets = [0, 0], sizes = [8, 128], strides = [1, 1]} : vector<8x384xf32> to vector<8x128xf32>
    %435 = vector.extract_strided_slice %428 {offsets = [0, 128], sizes = [8, 128], strides = [1, 1]} : vector<8x384xf32> to vector<8x128xf32>
    %436 = vector.extract_strided_slice %428 {offsets = [0, 256], sizes = [8, 128], strides = [1, 1]} : vector<8x384xf32> to vector<8x128xf32>
    %437 = vector.extract_strided_slice %433 {offsets = [0, 0], sizes = [8, 128], strides = [1, 1]} : vector<8x384xf32> to vector<8x128xf32>
    %438 = vector.extract_strided_slice %433 {offsets = [0, 128], sizes = [8, 128], strides = [1, 1]} : vector<8x384xf32> to vector<8x128xf32>
    %439 = vector.extract_strided_slice %433 {offsets = [0, 256], sizes = [8, 128], strides = [1, 1]} : vector<8x384xf32> to vector<8x128xf32>
    %440 = arith.addf %434, %437 : vector<8x128xf32>
    %441 = arith.negf %440 : vector<8x128xf32>
    %442 = math.exp %441 : vector<8x128xf32>
    %cst_159 = arith.constant 1.000000e+00 : f32
    %443 = vector.broadcast %cst_159 : f32 to vector<8x128xf32>
    %444 = arith.addf %443, %442 : vector<8x128xf32>
    %445 = arith.divf %443, %444 : vector<8x128xf32>
    %446 = arith.addf %435, %438 : vector<8x128xf32>
    %447 = arith.negf %446 : vector<8x128xf32>
    %448 = math.exp %447 : vector<8x128xf32>
    %cst_160 = arith.constant 1.000000e+00 : f32
    %449 = vector.broadcast %cst_160 : f32 to vector<8x128xf32>
    %450 = arith.addf %449, %448 : vector<8x128xf32>
    %451 = arith.divf %449, %450 : vector<8x128xf32>
    %452 = arith.mulf %445, %439 : vector<8x128xf32>
    %453 = arith.addf %436, %452 : vector<8x128xf32>
    %454 = math.tanh %453 : vector<8x128xf32>
    %cst_161 = arith.constant 1.000000e+00 : f32
    %455 = vector.broadcast %cst_161 : f32 to vector<8x128xf32>
    %456 = arith.subf %455, %451 : vector<8x128xf32>
    %457 = arith.mulf %456, %454 : vector<8x128xf32>
    %458 = arith.mulf %451, %425 : vector<8x128xf32>
    %459 = arith.addf %457, %458 : vector<8x128xf32>
    %c4_i32_162 = arith.constant 4 : i32
    %460 = arith.index_cast %c4_i32_162 : i32 to index
    %c0_163 = arith.constant 0 : index
    %c0_164 = arith.constant 0 : index
    %461 = vector.load %arg13[%460, %c0_163, %c0_164] : memref<8x8x384xf32, #tpu.memory_space<vmem>>, vector<1x8x384xf32>
    %462 = vector.shape_cast %461 : vector<1x8x384xf32> to vector<8x384xf32>
    %c0_165 = arith.constant 0 : index
    %c0_166 = arith.constant 0 : index
    %463 = vector.load %arg7[%c0_165, %c0_166] : memref<128x384xf32, #tpu.memory_space<vmem>>, vector<128x384xf32>
    %cst_167 = arith.constant dense<0.000000e+00> : vector<8x384xf32>
    %464 = tpu.matmul %459, %463, %cst_167 {dimension_numbers = #tpu.dot_dimension_numbers<[1], [0], [0], [1], [0, 0, 1, 1], [], []>} : vector<8x128xf32>, vector<128x384xf32>, vector<8x384xf32> -> vector<8x384xf32>
    %c0_168 = arith.constant 0 : index
    %c0_169 = arith.constant 0 : index
    %465 = vector.load %arg9[%c0_168, %c0_169] : memref<1x384xf32, #tpu.memory_space<vmem>>, vector<1x384xf32>
    %466 = vector.broadcast %465 : vector<1x384xf32> to vector<8x384xf32>
    %467 = arith.addf %464, %466 : vector<8x384xf32>
    %468 = vector.extract_strided_slice %462 {offsets = [0, 0], sizes = [8, 128], strides = [1, 1]} : vector<8x384xf32> to vector<8x128xf32>
    %469 = vector.extract_strided_slice %462 {offsets = [0, 128], sizes = [8, 128], strides = [1, 1]} : vector<8x384xf32> to vector<8x128xf32>
    %470 = vector.extract_strided_slice %462 {offsets = [0, 256], sizes = [8, 128], strides = [1, 1]} : vector<8x384xf32> to vector<8x128xf32>
    %471 = vector.extract_strided_slice %467 {offsets = [0, 0], sizes = [8, 128], strides = [1, 1]} : vector<8x384xf32> to vector<8x128xf32>
    %472 = vector.extract_strided_slice %467 {offsets = [0, 128], sizes = [8, 128], strides = [1, 1]} : vector<8x384xf32> to vector<8x128xf32>
    %473 = vector.extract_strided_slice %467 {offsets = [0, 256], sizes = [8, 128], strides = [1, 1]} : vector<8x384xf32> to vector<8x128xf32>
    %474 = arith.addf %468, %471 : vector<8x128xf32>
    %475 = arith.negf %474 : vector<8x128xf32>
    %476 = math.exp %475 : vector<8x128xf32>
    %cst_170 = arith.constant 1.000000e+00 : f32
    %477 = vector.broadcast %cst_170 : f32 to vector<8x128xf32>
    %478 = arith.addf %477, %476 : vector<8x128xf32>
    %479 = arith.divf %477, %478 : vector<8x128xf32>
    %480 = arith.addf %469, %472 : vector<8x128xf32>
    %481 = arith.negf %480 : vector<8x128xf32>
    %482 = math.exp %481 : vector<8x128xf32>
    %cst_171 = arith.constant 1.000000e+00 : f32
    %483 = vector.broadcast %cst_171 : f32 to vector<8x128xf32>
    %484 = arith.addf %483, %482 : vector<8x128xf32>
    %485 = arith.divf %483, %484 : vector<8x128xf32>
    %486 = arith.mulf %479, %473 : vector<8x128xf32>
    %487 = arith.addf %470, %486 : vector<8x128xf32>
    %488 = math.tanh %487 : vector<8x128xf32>
    %cst_172 = arith.constant 1.000000e+00 : f32
    %489 = vector.broadcast %cst_172 : f32 to vector<8x128xf32>
    %490 = arith.subf %489, %485 : vector<8x128xf32>
    %491 = arith.mulf %490, %488 : vector<8x128xf32>
    %492 = arith.mulf %485, %459 : vector<8x128xf32>
    %493 = arith.addf %491, %492 : vector<8x128xf32>
    %c5_i32_173 = arith.constant 5 : i32
    %494 = arith.index_cast %c5_i32_173 : i32 to index
    %c0_174 = arith.constant 0 : index
    %c0_175 = arith.constant 0 : index
    %495 = vector.load %arg13[%494, %c0_174, %c0_175] : memref<8x8x384xf32, #tpu.memory_space<vmem>>, vector<1x8x384xf32>
    %496 = vector.shape_cast %495 : vector<1x8x384xf32> to vector<8x384xf32>
    %c0_176 = arith.constant 0 : index
    %c0_177 = arith.constant 0 : index
    %497 = vector.load %arg7[%c0_176, %c0_177] : memref<128x384xf32, #tpu.memory_space<vmem>>, vector<128x384xf32>
    %cst_178 = arith.constant dense<0.000000e+00> : vector<8x384xf32>
    %498 = tpu.matmul %493, %497, %cst_178 {dimension_numbers = #tpu.dot_dimension_numbers<[1], [0], [0], [1], [0, 0, 1, 1], [], []>} : vector<8x128xf32>, vector<128x384xf32>, vector<8x384xf32> -> vector<8x384xf32>
    %c0_179 = arith.constant 0 : index
    %c0_180 = arith.constant 0 : index
    %499 = vector.load %arg9[%c0_179, %c0_180] : memref<1x384xf32, #tpu.memory_space<vmem>>, vector<1x384xf32>
    %500 = vector.broadcast %499 : vector<1x384xf32> to vector<8x384xf32>
    %501 = arith.addf %498, %500 : vector<8x384xf32>
    %502 = vector.extract_strided_slice %496 {offsets = [0, 0], sizes = [8, 128], strides = [1, 1]} : vector<8x384xf32> to vector<8x128xf32>
    %503 = vector.extract_strided_slice %496 {offsets = [0, 128], sizes = [8, 128], strides = [1, 1]} : vector<8x384xf32> to vector<8x128xf32>
    %504 = vector.extract_strided_slice %496 {offsets = [0, 256], sizes = [8, 128], strides = [1, 1]} : vector<8x384xf32> to vector<8x128xf32>
    %505 = vector.extract_strided_slice %501 {offsets = [0, 0], sizes = [8, 128], strides = [1, 1]} : vector<8x384xf32> to vector<8x128xf32>
    %506 = vector.extract_strided_slice %501 {offsets = [0, 128], sizes = [8, 128], strides = [1, 1]} : vector<8x384xf32> to vector<8x128xf32>
    %507 = vector.extract_strided_slice %501 {offsets = [0, 256], sizes = [8, 128], strides = [1, 1]} : vector<8x384xf32> to vector<8x128xf32>
    %508 = arith.addf %502, %505 : vector<8x128xf32>
    %509 = arith.negf %508 : vector<8x128xf32>
    %510 = math.exp %509 : vector<8x128xf32>
    %cst_181 = arith.constant 1.000000e+00 : f32
    %511 = vector.broadcast %cst_181 : f32 to vector<8x128xf32>
    %512 = arith.addf %511, %510 : vector<8x128xf32>
    %513 = arith.divf %511, %512 : vector<8x128xf32>
    %514 = arith.addf %503, %506 : vector<8x128xf32>
    %515 = arith.negf %514 : vector<8x128xf32>
    %516 = math.exp %515 : vector<8x128xf32>
    %cst_182 = arith.constant 1.000000e+00 : f32
    %517 = vector.broadcast %cst_182 : f32 to vector<8x128xf32>
    %518 = arith.addf %517, %516 : vector<8x128xf32>
    %519 = arith.divf %517, %518 : vector<8x128xf32>
    %520 = arith.mulf %513, %507 : vector<8x128xf32>
    %521 = arith.addf %504, %520 : vector<8x128xf32>
    %522 = math.tanh %521 : vector<8x128xf32>
    %cst_183 = arith.constant 1.000000e+00 : f32
    %523 = vector.broadcast %cst_183 : f32 to vector<8x128xf32>
    %524 = arith.subf %523, %519 : vector<8x128xf32>
    %525 = arith.mulf %524, %522 : vector<8x128xf32>
    %526 = arith.mulf %519, %493 : vector<8x128xf32>
    %527 = arith.addf %525, %526 : vector<8x128xf32>
    %c6_i32_184 = arith.constant 6 : i32
    %528 = arith.index_cast %c6_i32_184 : i32 to index
    %c0_185 = arith.constant 0 : index
    %c0_186 = arith.constant 0 : index
    %529 = vector.load %arg13[%528, %c0_185, %c0_186] : memref<8x8x384xf32, #tpu.memory_space<vmem>>, vector<1x8x384xf32>
    %530 = vector.shape_cast %529 : vector<1x8x384xf32> to vector<8x384xf32>
    %c0_187 = arith.constant 0 : index
    %c0_188 = arith.constant 0 : index
    %531 = vector.load %arg7[%c0_187, %c0_188] : memref<128x384xf32, #tpu.memory_space<vmem>>, vector<128x384xf32>
    %cst_189 = arith.constant dense<0.000000e+00> : vector<8x384xf32>
    %532 = tpu.matmul %527, %531, %cst_189 {dimension_numbers = #tpu.dot_dimension_numbers<[1], [0], [0], [1], [0, 0, 1, 1], [], []>} : vector<8x128xf32>, vector<128x384xf32>, vector<8x384xf32> -> vector<8x384xf32>
    %c0_190 = arith.constant 0 : index
    %c0_191 = arith.constant 0 : index
    %533 = vector.load %arg9[%c0_190, %c0_191] : memref<1x384xf32, #tpu.memory_space<vmem>>, vector<1x384xf32>
    %534 = vector.broadcast %533 : vector<1x384xf32> to vector<8x384xf32>
    %535 = arith.addf %532, %534 : vector<8x384xf32>
    %536 = vector.extract_strided_slice %530 {offsets = [0, 0], sizes = [8, 128], strides = [1, 1]} : vector<8x384xf32> to vector<8x128xf32>
    %537 = vector.extract_strided_slice %530 {offsets = [0, 128], sizes = [8, 128], strides = [1, 1]} : vector<8x384xf32> to vector<8x128xf32>
    %538 = vector.extract_strided_slice %530 {offsets = [0, 256], sizes = [8, 128], strides = [1, 1]} : vector<8x384xf32> to vector<8x128xf32>
    %539 = vector.extract_strided_slice %535 {offsets = [0, 0], sizes = [8, 128], strides = [1, 1]} : vector<8x384xf32> to vector<8x128xf32>
    %540 = vector.extract_strided_slice %535 {offsets = [0, 128], sizes = [8, 128], strides = [1, 1]} : vector<8x384xf32> to vector<8x128xf32>
    %541 = vector.extract_strided_slice %535 {offsets = [0, 256], sizes = [8, 128], strides = [1, 1]} : vector<8x384xf32> to vector<8x128xf32>
    %542 = arith.addf %536, %539 : vector<8x128xf32>
    %543 = arith.negf %542 : vector<8x128xf32>
    %544 = math.exp %543 : vector<8x128xf32>
    %cst_192 = arith.constant 1.000000e+00 : f32
    %545 = vector.broadcast %cst_192 : f32 to vector<8x128xf32>
    %546 = arith.addf %545, %544 : vector<8x128xf32>
    %547 = arith.divf %545, %546 : vector<8x128xf32>
    %548 = arith.addf %537, %540 : vector<8x128xf32>
    %549 = arith.negf %548 : vector<8x128xf32>
    %550 = math.exp %549 : vector<8x128xf32>
    %cst_193 = arith.constant 1.000000e+00 : f32
    %551 = vector.broadcast %cst_193 : f32 to vector<8x128xf32>
    %552 = arith.addf %551, %550 : vector<8x128xf32>
    %553 = arith.divf %551, %552 : vector<8x128xf32>
    %554 = arith.mulf %547, %541 : vector<8x128xf32>
    %555 = arith.addf %538, %554 : vector<8x128xf32>
    %556 = math.tanh %555 : vector<8x128xf32>
    %cst_194 = arith.constant 1.000000e+00 : f32
    %557 = vector.broadcast %cst_194 : f32 to vector<8x128xf32>
    %558 = arith.subf %557, %553 : vector<8x128xf32>
    %559 = arith.mulf %558, %556 : vector<8x128xf32>
    %560 = arith.mulf %553, %527 : vector<8x128xf32>
    %561 = arith.addf %559, %560 : vector<8x128xf32>
    %c7_i32_195 = arith.constant 7 : i32
    %562 = arith.index_cast %c7_i32_195 : i32 to index
    %c0_196 = arith.constant 0 : index
    %c0_197 = arith.constant 0 : index
    %563 = vector.load %arg13[%562, %c0_196, %c0_197] : memref<8x8x384xf32, #tpu.memory_space<vmem>>, vector<1x8x384xf32>
    %564 = vector.shape_cast %563 : vector<1x8x384xf32> to vector<8x384xf32>
    %c0_198 = arith.constant 0 : index
    %c0_199 = arith.constant 0 : index
    %565 = vector.load %arg7[%c0_198, %c0_199] : memref<128x384xf32, #tpu.memory_space<vmem>>, vector<128x384xf32>
    %cst_200 = arith.constant dense<0.000000e+00> : vector<8x384xf32>
    %566 = tpu.matmul %561, %565, %cst_200 {dimension_numbers = #tpu.dot_dimension_numbers<[1], [0], [0], [1], [0, 0, 1, 1], [], []>} : vector<8x128xf32>, vector<128x384xf32>, vector<8x384xf32> -> vector<8x384xf32>
    %c0_201 = arith.constant 0 : index
    %c0_202 = arith.constant 0 : index
    %567 = vector.load %arg9[%c0_201, %c0_202] : memref<1x384xf32, #tpu.memory_space<vmem>>, vector<1x384xf32>
    %568 = vector.broadcast %567 : vector<1x384xf32> to vector<8x384xf32>
    %569 = arith.addf %566, %568 : vector<8x384xf32>
    %570 = vector.extract_strided_slice %564 {offsets = [0, 0], sizes = [8, 128], strides = [1, 1]} : vector<8x384xf32> to vector<8x128xf32>
    %571 = vector.extract_strided_slice %564 {offsets = [0, 128], sizes = [8, 128], strides = [1, 1]} : vector<8x384xf32> to vector<8x128xf32>
    %572 = vector.extract_strided_slice %564 {offsets = [0, 256], sizes = [8, 128], strides = [1, 1]} : vector<8x384xf32> to vector<8x128xf32>
    %573 = vector.extract_strided_slice %569 {offsets = [0, 0], sizes = [8, 128], strides = [1, 1]} : vector<8x384xf32> to vector<8x128xf32>
    %574 = vector.extract_strided_slice %569 {offsets = [0, 128], sizes = [8, 128], strides = [1, 1]} : vector<8x384xf32> to vector<8x128xf32>
    %575 = vector.extract_strided_slice %569 {offsets = [0, 256], sizes = [8, 128], strides = [1, 1]} : vector<8x384xf32> to vector<8x128xf32>
    %576 = arith.addf %570, %573 : vector<8x128xf32>
    %577 = arith.negf %576 : vector<8x128xf32>
    %578 = math.exp %577 : vector<8x128xf32>
    %cst_203 = arith.constant 1.000000e+00 : f32
    %579 = vector.broadcast %cst_203 : f32 to vector<8x128xf32>
    %580 = arith.addf %579, %578 : vector<8x128xf32>
    %581 = arith.divf %579, %580 : vector<8x128xf32>
    %582 = arith.addf %571, %574 : vector<8x128xf32>
    %583 = arith.negf %582 : vector<8x128xf32>
    %584 = math.exp %583 : vector<8x128xf32>
    %cst_204 = arith.constant 1.000000e+00 : f32
    %585 = vector.broadcast %cst_204 : f32 to vector<8x128xf32>
    %586 = arith.addf %585, %584 : vector<8x128xf32>
    %587 = arith.divf %585, %586 : vector<8x128xf32>
    %588 = arith.mulf %581, %575 : vector<8x128xf32>
    %589 = arith.addf %572, %588 : vector<8x128xf32>
    %590 = math.tanh %589 : vector<8x128xf32>
    %cst_205 = arith.constant 1.000000e+00 : f32
    %591 = vector.broadcast %cst_205 : f32 to vector<8x128xf32>
    %592 = arith.subf %591, %587 : vector<8x128xf32>
    %593 = arith.mulf %592, %590 : vector<8x128xf32>
    %594 = arith.mulf %587, %561 : vector<8x128xf32>
    %595 = arith.addf %593, %594 : vector<8x128xf32>
    %c8_i32_206 = arith.constant 8 : i32
    %cst_207 = arith.constant 0.000000e+00 : f32
    %596 = vector.broadcast %cst_207 : f32 to vector<8x128xf32>
    %597 = arith.maximumf %595, %596 : vector<8x128xf32>
    %c0_208 = arith.constant 0 : index
    %c0_209 = arith.constant 0 : index
    %598 = vector.load %arg10[%c0_208, %c0_209] : memref<128x128xf32, #tpu.memory_space<vmem>>, vector<128x128xf32>
    %cst_210 = arith.constant dense<0.000000e+00> : vector<8x128xf32>
    %599 = tpu.matmul %597, %598, %cst_210 {dimension_numbers = #tpu.dot_dimension_numbers<[1], [0], [0], [1], [0, 0, 1, 1], [], []>} : vector<8x128xf32>, vector<128x128xf32>, vector<8x128xf32> -> vector<8x128xf32>
    %c0_211 = arith.constant 0 : index
    %c0_212 = arith.constant 0 : index
    %600 = vector.load %arg11[%c0_211, %c0_212] : memref<1x128xf32, #tpu.memory_space<vmem>>, vector<1x128xf32>
    %601 = vector.broadcast %600 : vector<1x128xf32> to vector<8x128xf32>
    %602 = arith.addf %599, %601 : vector<8x128xf32>
    %c0_213 = arith.constant 0 : index
    %c0_214 = arith.constant 0 : index
    %603 = vector.load %arg12[%c0_213, %c0_214] : memref<8x128xf32, #tpu.memory_space<vmem>>, vector<8x128xf32>
    tpu.vector_store %arg12[%c0_213, %c0_214], %602 {strides = array<i32>} : memref<8x128xf32, #tpu.memory_space<vmem>>, vector<8x128xf32>,
    return
  }
  func.func @transform_0(%arg0: i32) -> (i32, i32, i32) {
    %c0_i32 = arith.constant 0 : i32
    %c0_i32_0 = arith.constant 0 : i32
    %c0_i32_1 = arith.constant 0 : i32
    return %c0_i32, %arg0, %c0_i32_0 : i32, i32, i32
  }
  func.func @transform_1(%arg0: i32) -> (i32, i32) {
    %c0_i32 = arith.constant 0 : i32
    %c0_i32_0 = arith.constant 0 : i32
    %c0_i32_1 = arith.constant 0 : i32
    return %c0_i32, %c0_i32_0 : i32, i32
  }
  func.func @transform_2(%arg0: i32) -> (i32, i32) {
    %c0_i32 = arith.constant 0 : i32
    %c0_i32_0 = arith.constant 0 : i32
    %c0_i32_1 = arith.constant 0 : i32
    return %c0_i32, %c0_i32_0 : i32, i32
  }
  func.func @transform_3(%arg0: i32) -> (i32, i32) {
    %c0_i32 = arith.constant 0 : i32
    %c0_i32_0 = arith.constant 0 : i32
    %c0_i32_1 = arith.constant 0 : i32
    return %c0_i32, %c0_i32_0 : i32, i32
  }
  func.func @transform_4(%arg0: i32) -> (i32, i32) {
    %c0_i32 = arith.constant 0 : i32
    %c0_i32_0 = arith.constant 0 : i32
    %c0_i32_1 = arith.constant 0 : i32
    return %c0_i32, %c0_i32_0 : i32, i32
  }
  func.func @transform_5(%arg0: i32) -> (i32, i32) {
    %c0_i32 = arith.constant 0 : i32
    %c0_i32_0 = arith.constant 0 : i32
    %c0_i32_1 = arith.constant 0 : i32
    return %c0_i32, %c0_i32_0 : i32, i32
  }
  func.func @transform_6(%arg0: i32) -> (i32, i32) {
    %c0_i32 = arith.constant 0 : i32
    %c0_i32_0 = arith.constant 0 : i32
    %c0_i32_1 = arith.constant 0 : i32
    return %c0_i32, %c0_i32_0 : i32, i32
  }
  func.func @transform_7(%arg0: i32) -> (i32, i32) {
    %c0_i32 = arith.constant 0 : i32
    %c0_i32_0 = arith.constant 0 : i32
    %c0_i32_1 = arith.constant 0 : i32
    return %c0_i32, %c0_i32_0 : i32, i32
  }
  func.func @transform_8(%arg0: i32) -> (i32, i32) {
    %c0_i32 = arith.constant 0 : i32
    %c0_i32_0 = arith.constant 0 : i32
    %c0_i32_1 = arith.constant 0 : i32
    return %c0_i32, %c0_i32_0 : i32, i32
  }
  func.func @transform_9(%arg0: i32) -> (i32, i32) {
    %c0_i32 = arith.constant 0 : i32
    %c0_i32_0 = arith.constant 0 : i32
    %c0_i32_1 = arith.constant 0 : i32
    return %c0_i32, %c0_i32_0 : i32, i32
  }
  func.func @transform_10(%arg0: i32) -> (i32, i32) {
    %c0_i32 = arith.constant 0 : i32
    %c0_i32_0 = arith.constant 0 : i32
    %c0_i32_1 = arith.constant 0 : i32
    return %c0_i32, %c0_i32_0 : i32, i32
  }
  func.func @transform_11(%arg0: i32) -> (i32, i32) {
    %c0_i32 = arith.constant 0 : i32
    %c0_i32_0 = arith.constant 0 : i32
    return %arg0, %c0_i32 : i32, i32
  }
}

</mosaic_0001>

<llo_original>
// kernel: tpu_custom_call.1
$region0: #{tpu_custom_call.1}
  #allocation0 [shape = 'u32[]', space=smem, size = 0x4, offset = 0x4, fixed_abs, tag = 'smem constant byte address 0x4 - core index']
  #allocation1 [shape = 'u32[144,128]{1,0:T(1,128)}', space=vmem, size = 0x12000, scoped, tag = 'internal scratch']
  #allocation2 [shape = 'f32[8,8,384]{2,1,0:T(8,128)}', space=vmem, size = 0x18000, scoped, tag = 'scratch operand']
  #allocation3 [shape = 'f32[8,8,128]{2,1,0:T(8,128)}', space=vmem, size = 0x8000, scoped, tag = 'scratch operand']
  %s0 = inlined_call_operand.hbm [shape: f32[8,8,128], index: 0, kind: input, shape index: {}]
  %s1 = inlined_call_operand.hbm [shape: f32[128,384], index: 1, kind: input, shape index: {}]
  %s2 = inlined_call_operand.hbm [shape: f32[128,384], index: 2, kind: input, shape index: {}]
  %s3 = inlined_call_operand.vmem [shape: f32[1,384], index: 3, kind: input, shape index: {}]
  %s4 = inlined_call_operand.vmem [shape: f32[1,384], index: 4, kind: input, shape index: {}]
  %s5 = inlined_call_operand.hbm [shape: f32[128,384], index: 5, kind: input, shape index: {}]
  %s6 = inlined_call_operand.hbm [shape: f32[128,384], index: 6, kind: input, shape index: {}]
  %s7 = inlined_call_operand.vmem [shape: f32[1,384], index: 7, kind: input, shape index: {}]
  %s8 = inlined_call_operand.vmem [shape: f32[1,384], index: 8, kind: input, shape index: {}]
  %s9 = inlined_call_operand.hbm [shape: f32[128,128], index: 9, kind: input, shape index: {}]
  %s10 = inlined_call_operand.vmem [shape: f32[1,128], index: 10, kind: input, shape index: {}]
  %s11 = inlined_call_operand.hbm [shape: f32[8,128], index: 11, kind: output, shape index: {}]
  %s12 = sld [smem:[#allocation0]]
  $region78: #{tpu_custom_call.1} parent=0
    _
  %s14 = ssub.s32 1, %s12
  %s15 = scalar_select 0, %s14, %s12
  $region1: #{tpu_custom_call.1} parent=0
    #allocation4 [shape = 'u8[32768]{0}', space=vmem, size = 0x8000, scoped, tag = 'input window, operand 0, single buffered']
    #allocation5 [shape = 's32[1]{0}', space=sflag, size = 0x4, scoped, tag = 'scoped memory for tpu_custom_call.1']
    #allocation6 [shape = 's32[1]{0}', space=sflag, size = 0x4, scoped, tag = 'scoped memory for tpu_custom_call.1']
    #allocation7 [shape = 'u8[196608]{0}', space=vmem, size = 0x30000, scoped, tag = 'input window, operand 1, single buffered']
    #allocation8 [shape = 's32[1]{0}', space=sflag, size = 0x4, scoped, tag = 'scoped memory for tpu_custom_call.1']
    #allocation9 [shape = 'u8[196608]{0}', space=vmem, size = 0x30000, scoped, tag = 'input window, operand 2, single buffered']
    #allocation10 [shape = 'u8[196608]{0}', space=vmem, size = 0x30000, scoped, tag = 'input window, operand 5, single buffered']
    #allocation11 [shape = 's32[1]{0}', space=sflag, size = 0x4, scoped, tag = 'scoped memory for tpu_custom_call.1']
    #allocation12 [shape = 'u8[196608]{0}', space=vmem, size = 0x30000, scoped, tag = 'input window, operand 6, single buffered']
    #allocation13 [shape = 'u8[65536]{0}', space=vmem, size = 0x10000, scoped, tag = 'input window, operand 9, single buffered']
    #allocation14 [shape = 's32[1]{0}', space=sflag, size = 0x4, scoped, tag = 'scoped memory for tpu_custom_call.1']
    #allocation15 [shape = 'u8[4096]{0}', space=vmem, size = 0x1000, scoped, tag = 'output window, operand 0, single buffered']
    %16 = vsyncpa [#allocation5], 0
    %17 = vsyncpa [#allocation8], 0
    %18 = vsyncpa [#allocation11], 0
    %19 = vsyncpa [#allocation14], 0
    %20 = vsyncpa [#allocation6], 0
    // Predicated region
    $region2: #{tpu_custom_call.1} parent=1 // pred_check
      _
    $region3: #{tpu_custom_call.1} parent=1 // pred_check_branch
      %22 = sbr.rel (0) target = $region5
    $region4: #{tpu_custom_call.1} parent=1 // pred_region
      %s24 = ssub.s32 1024, 1024
      %25 = vsyncadd [#allocation5], %s24
      %s26 = sshll.u32 [#allocation4], 4
      %s27 = int_to_ptr.vmem [resolvable:$true] %s26
      %32 = dma.hbm_to_vmem [thread:$0]  %s0, 1024, %s27, [#allocation5], 128, 128, 8
    $region5: #{tpu_custom_call.1} parent=1 // pred_fallthru
      _
    // Predicated region
    $region6: #{tpu_custom_call.1} parent=1 // pred_check
      _
    $region7: #{tpu_custom_call.1} parent=1 // pred_check_branch
      %34 = sbr.rel (0) target = $region9
    $region8: #{tpu_custom_call.1} parent=1 // pred_region
      %s36 = ssub.s32 6144, 6144
      %37 = vsyncadd [#allocation8], %s36
      %s38 = sshll.u32 [#allocation7], 4
      %s39 = int_to_ptr.vmem [resolvable:$true] %s38
      %44 = dma.hbm_to_vmem [thread:$0]  %s1, 6144, %s39, [#allocation8], 384, 384, 24
    $region9: #{tpu_custom_call.1} parent=1 // pred_fallthru
      _
    // Predicated region
    $region10: #{tpu_custom_call.1} parent=1 // pred_check
      _
    $region11: #{tpu_custom_call.1} parent=1 // pred_check_branch
      %46 = sbr.rel (0) target = $region13
    $region12: #{tpu_custom_call.1} parent=1 // pred_region
      %s48 = ssub.s32 6144, 6144
      %49 = vsyncadd [#allocation8], %s48
      %s50 = sshll.u32 [#allocation9], 4
      %s51 = int_to_ptr.vmem [resolvable:$true] %s50
      %56 = dma.hbm_to_vmem [thread:$0]  %s2, 6144, %s51, [#allocation8], 384, 384, 24
    $region13: #{tpu_custom_call.1} parent=1 // pred_fallthru
      _
    // Predicated region
    $region14: #{tpu_custom_call.1} parent=1 // pred_check
      _
    $region15: #{tpu_custom_call.1} parent=1 // pred_check_branch
      %58 = sbr.rel (0) target = $region17
    $region16: #{tpu_custom_call.1} parent=1 // pred_region
      _
    $region17: #{tpu_custom_call.1} parent=1 // pred_fallthru
      _
    // Predicated region
    $region18: #{tpu_custom_call.1} parent=1 // pred_check
      _
    $region19: #{tpu_custom_call.1} parent=1 // pred_check_branch
      %60 = sbr.rel (0) target = $region21
    $region20: #{tpu_custom_call.1} parent=1 // pred_region
      _
    $region21: #{tpu_custom_call.1} parent=1 // pred_fallthru
      _
    // Predicated region
    $region22: #{tpu_custom_call.1} parent=1 // pred_check
      _
    $region23: #{tpu_custom_call.1} parent=1 // pred_check_branch
      %62 = sbr.rel (0) target = $region25
    $region24: #{tpu_custom_call.1} parent=1 // pred_region
      %s64 = ssub.s32 6144, 6144
      %65 = vsyncadd [#allocation11], %s64
      %s66 = sshll.u32 [#allocation10], 4
      %s67 = int_to_ptr.vmem [resolvable:$true] %s66
      %72 = dma.hbm_to_vmem [thread:$0]  %s5, 6144, %s67, [#allocation11], 384, 384, 24
    $region25: #{tpu_custom_call.1} parent=1 // pred_fallthru
      _
    // Predicated region
    $region26: #{tpu_custom_call.1} parent=1 // pred_check
      _
    $region27: #{tpu_custom_call.1} parent=1 // pred_check_branch
      %74 = sbr.rel (0) target = $region29
    $region28: #{tpu_custom_call.1} parent=1 // pred_region
      %s76 = ssub.s32 6144, 6144
      %77 = vsyncadd [#allocation11], %s76
      %s78 = sshll.u32 [#allocation12], 4
      %s79 = int_to_ptr.vmem [resolvable:$true] %s78
      %84 = dma.hbm_to_vmem [thread:$0]  %s6, 6144, %s79, [#allocation11], 384, 384, 24
    $region29: #{tpu_custom_call.1} parent=1 // pred_fallthru
      _
    // Predicated region
    $region30: #{tpu_custom_call.1} parent=1 // pred_check
      _
    $region31: #{tpu_custom_call.1} parent=1 // pred_check_branch
      %86 = sbr.rel (0) target = $region33
    $region32: #{tpu_custom_call.1} parent=1 // pred_region
      _
    $region33: #{tpu_custom_call.1} parent=1 // pred_fallthru
      _
    // Predicated region
    $region34: #{tpu_custom_call.1} parent=1 // pred_check
      _
    $region35: #{tpu_custom_call.1} parent=1 // pred_check_branch
      %88 = sbr.rel (0) target = $region37
    $region36: #{tpu_custom_call.1} parent=1 // pred_region
      _
    $region37: #{tpu_custom_call.1} parent=1 // pred_fallthru
      _
    // Predicated region
    $region38: #{tpu_custom_call.1} parent=1 // pred_check
      _
    $region39: #{tpu_custom_call.1} parent=1 // pred_check_branch
      %90 = sbr.rel (0) target = $region41
    $region40: #{tpu_custom_call.1} parent=1 // pred_region
      %s92 = ssub.s32 2048, 2048
      %93 = vsyncadd [#allocation14], %s92
      %s94 = sshll.u32 [#allocation13], 4
      %s95 = int_to_ptr.vmem [resolvable:$true] %s94
      %100 = dma.hbm_to_vmem [thread:$0]  %s9, 2048, %s95, [#allocation14], 128, 128, 8
    $region41: #{tpu_custom_call.1} parent=1 // pred_fallthru
      _
    // Predicated region
    $region42: #{tpu_custom_call.1} parent=1 // pred_check
      _
    $region43: #{tpu_custom_call.1} parent=1 // pred_check_branch
      %102 = sbr.rel (0) target = $region45
    $region44: #{tpu_custom_call.1} parent=1 // pred_region
      _
    $region45: #{tpu_custom_call.1} parent=1 // pred_fallthru
      _
    // Predicated region
    $region46: #{tpu_custom_call.1} parent=1 // pred_check
      _
    $region47: #{tpu_custom_call.1} parent=1 // pred_check_branch
      %104 = sbr.rel (0) target = $region49
    $region48: #{tpu_custom_call.1} parent=1 // pred_region
      %105 = dma.done [#allocation5], 1024
    $region49: #{tpu_custom_call.1} parent=1 // pred_fallthru
      _
    // Predicated region
    $region50: #{tpu_custom_call.1} parent=1 // pred_check
      _
    $region51: #{tpu_custom_call.1} parent=1 // pred_check_branch
      %107 = sbr.rel (0) target = $region53
    $region52: #{tpu_custom_call.1} parent=1 // pred_region
      %108 = dma.done [#allocation8], 6144
    $region53: #{tpu_custom_call.1} parent=1 // pred_fallthru
      _
    // Predicated region
    $region54: #{tpu_custom_call.1} parent=1 // pred_check
      _
    $region55: #{tpu_custom_call.1} parent=1 // pred_check_branch
      %110 = sbr.rel (0) target = $region57
    $region56: #{tpu_custom_call.1} parent=1 // pred_region
      %111 = dma.done [#allocation8], 6144
    $region57: #{tpu_custom_call.1} parent=1 // pred_fallthru
      _
    // Predicated region
    $region58: #{tpu_custom_call.1} parent=1 // pred_check
      _
    $region59: #{tpu_custom_call.1} parent=1 // pred_check_branch
      %113 = sbr.rel (0) target = $region61
    $region60: #{tpu_custom_call.1} parent=1 // pred_region
      %114 = dma.done [#allocation11], 6144
    $region61: #{tpu_custom_call.1} parent=1 // pred_fallthru
      _
    // Predicated region
    $region62: #{tpu_custom_call.1} parent=1 // pred_check
      _
    $region63: #{tpu_custom_call.1} parent=1 // pred_check_branch
      %116 = sbr.rel (0) target = $region65
    $region64: #{tpu_custom_call.1} parent=1 // pred_region
      %117 = dma.done [#allocation11], 6144
    $region65: #{tpu_custom_call.1} parent=1 // pred_fallthru
      _
    // Predicated region
    $region66: #{tpu_custom_call.1} parent=1 // pred_check
      _
    $region67: #{tpu_custom_call.1} parent=1 // pred_check_branch
      %119 = sbr.rel (0) target = $region69
    $region68: #{tpu_custom_call.1} parent=1 // pred_region
      %120 = dma.done [#allocation14], 2048
    $region69: #{tpu_custom_call.1} parent=1 // pred_fallthru
      _
    %v121 = vld [vmem:[#allocation4] sm:$0xff]
    %v122 = vld [vmem:[#allocation4 + $0x8] sm:$0xff]
    %v123 = vld [vmem:[#allocation4 + $0x10] sm:$0xff]
    %v124 = vld [vmem:[#allocation4 + $0x18] sm:$0xff]
    %v125 = vld [vmem:[#allocation4 + $0x20] sm:$0xff]
    %v126 = vld [vmem:[#allocation4 + $0x28] sm:$0xff]
    %v127 = vld [vmem:[#allocation4 + $0x30] sm:$0xff]
    %v128 = vld [vmem:[#allocation4 + $0x38] sm:$0xff]
    %v129 = vld [vmem:[#allocation7] sm:$0xff]
    %v130 = vld [vmem:[#allocation7 + $0x8] sm:$0xff]
    %v131 = vld [vmem:[#allocation7 + $0x10] sm:$0xff]
    %v132 = vld [vmem:[#allocation7 + $0x18] sm:$0xff]
    %v133 = vld [vmem:[#allocation7 + $0x20] sm:$0xff]
    %v134 = vld [vmem:[#allocation7 + $0x28] sm:$0xff]
    %v135 = vld [vmem:[#allocation7 + $0x30] sm:$0xff]
    %v136 = vld [vmem:[#allocation7 + $0x38] sm:$0xff]
    %v137 = vld [vmem:[#allocation7 + $0x40] sm:$0xff]
    %v138 = vld [vmem:[#allocation7 + $0x48] sm:$0xff]
    %v139 = vld [vmem:[#allocation7 + $0x50] sm:$0xff]
    %v140 = vld [vmem:[#allocation7 + $0x58] sm:$0xff]
    %v141 = vld [vmem:[#allocation7 + $0x60] sm:$0xff]
    %v142 = vld [vmem:[#allocation7 + $0x68] sm:$0xff]
    %v143 = vld [vmem:[#allocation7 + $0x70] sm:$0xff]
    %v144 = vld [vmem:[#allocation7 + $0x78] sm:$0xff]
    %v145 = vld [vmem:[#allocation7 + $0x80] sm:$0xff]
    %v146 = vld [vmem:[#allocation7 + $0x88] sm:$0xff]
    %v147 = vld [vmem:[#allocation7 + $0x90] sm:$0xff]
    %v148 = vld [vmem:[#allocation7 + $0x98] sm:$0xff]
    %v149 = vld [vmem:[#allocation7 + $0xa0] sm:$0xff]
    %v150 = vld [vmem:[#allocation7 + $0xa8] sm:$0xff]
    %v151 = vld [vmem:[#allocation7 + $0xb0] sm:$0xff]
    %v152 = vld [vmem:[#allocation7 + $0xb8] sm:$0xff]
    %v153 = vld [vmem:[#allocation7 + $0xc0] sm:$0xff]
    %v154 = vld [vmem:[#allocation7 + $0xc8] sm:$0xff]
    %v155 = vld [vmem:[#allocation7 + $0xd0] sm:$0xff]
    %v156 = vld [vmem:[#allocation7 + $0xd8] sm:$0xff]
    %v157 = vld [vmem:[#allocation7 + $0xe0] sm:$0xff]
    %v158 = vld [vmem:[#allocation7 + $0xe8] sm:$0xff]
    %v159 = vld [vmem:[#allocation7 + $0xf0] sm:$0xff]
    %v160 = vld [vmem:[#allocation7 + $0xf8] sm:$0xff]
    %v161 = vld [vmem:[#allocation7 + $0x100] sm:$0xff]
    %v162 = vld [vmem:[#allocation7 + $0x108] sm:$0xff]
    %v163 = vld [vmem:[#allocation7 + $0x110] sm:$0xff]
    %v164 = vld [vmem:[#allocation7 + $0x118] sm:$0xff]
    %v165 = vld [vmem:[#allocation7 + $0x120] sm:$0xff]
    %v166 = vld [vmem:[#allocation7 + $0x128] sm:$0xff]
    %v167 = vld [vmem:[#allocation7 + $0x130] sm:$0xff]
    %v168 = vld [vmem:[#allocation7 + $0x138] sm:$0xff]
    %v169 = vld [vmem:[#allocation7 + $0x140] sm:$0xff]
    %v170 = vld [vmem:[#allocation7 + $0x148] sm:$0xff]
    %v171 = vld [vmem:[#allocation7 + $0x150] sm:$0xff]
    %v172 = vld [vmem:[#allocation7 + $0x158] sm:$0xff]
    %v173 = vld [vmem:[#allocation7 + $0x160] sm:$0xff]
    %v174 = vld [vmem:[#allocation7 + $0x168] sm:$0xff]
    %v175 = vld [vmem:[#allocation7 + $0x170] sm:$0xff]
    %v176 = vld [vmem:[#allocation7 + $0x178] sm:$0xff]
    %v177 = vld [vmem:[%s3] sm:$0x7]
    %v179 = vlaneseq
    %v180 = vshrl.u32 %v179, 7
    %v181 = vsub.s32 0, %v180
    %v182 = vrot.slane %v177, %v181
    %v183 = vlaneseq
    %v184 = vshrl.u32 %v183, 7
    %v185 = vsub.s32 1, %v184
    %v186 = vrot.slane %v177, %v185
    %v187 = vlaneseq
    %v188 = vshrl.u32 %v187, 7
    %v189 = vsub.s32 2, %v188
    %v190 = vrot.slane %v177, %v189
    %194 = vmatprep.subr.mxu0 %v130
    %195 = vmatpush1.msra.mxu0 %v129
    %196 = vmatprep.subr.mxu0 %v133
    %197 = vmatpush1.msra.mxu0 %v132
    %198 = vmatprep.subr.mxu0 %v136
    %199 = vmatpush1.msra.mxu0 %v135
    %200 = vmatprep.subr.mxu0 %v139
    %201 = vmatpush1.msra.mxu0 %v138
    %202 = vmatprep.subr.mxu0 %v142
    %203 = vmatpush1.msra.mxu0 %v141
    %204 = vmatprep.subr.mxu0 %v145
    %205 = vmatpush1.msra.mxu0 %v144
    %206 = vmatprep.subr.mxu0 %v148
    %207 = vmatpush1.msra.mxu0 %v147
    %208 = vmatprep.subr.mxu0 %v151
    %209 = vmatpush1.msra.mxu0 %v150
    %210 = vmatprep.subr.mxu0 %v154
    %211 = vmatpush1.msra.mxu0 %v153
    %212 = vmatprep.subr.mxu0 %v157
    %213 = vmatpush1.msra.mxu0 %v156
    %214 = vmatprep.subr.mxu0 %v160
    %215 = vmatpush1.msra.mxu0 %v159
    %216 = vmatprep.subr.mxu0 %v163
    %217 = vmatpush1.msra.mxu0 %v162
    %218 = vmatprep.subr.mxu0 %v166
    %219 = vmatpush1.msra.mxu0 %v165
    %220 = vmatprep.subr.mxu0 %v169
    %221 = vmatpush1.msra.mxu0 %v168
    %222 = vmatprep.subr.mxu0 %v172
    %223 = vmatpush1.msra.mxu0 %v171
    %224 = vmatprep.subr.mxu0 %v175
    %225 = vmatpush1.msra.mxu0 %v174
    %226 = vmatprep.subr.mxu0 0.0
    %227 = vmatpush1.msra.mxu0 0.0
    %228 = vmatprep.subr.mxu0 0.0
    %229 = vmatpush1.msra.mxu0 0.0
    %230 = vmatprep.subr.mxu0 0.0
    %231 = vmatpush1.msra.mxu0 0.0
    %232 = vmatprep.subr.mxu0 0.0
    %233 = vmatpush1.msra.mxu0 0.0
    %234 = vmatprep.subr.mxu0 0.0
    %235 = vmatpush1.msra.mxu0 0.0
    %236 = vmatprep.subr.mxu0 0.0
    %237 = vmatpush1.msra.mxu0 0.0
    %238 = vmatprep.subr.mxu0 0.0
    %239 = vmatpush1.msra.mxu0 0.0
    %240 = vmatprep.subr.mxu0 0.0
    %241 = vmatpush1.msra.mxu0 0.0
    %242 = vmatprep.subr.mxu0 0.0
    %243 = vmatpush1.msra.mxu0 0.0
    %244 = vmatprep.subr.mxu0 0.0
    %245 = vmatpush1.msra.mxu0 0.0
    %246 = vmatprep.subr.mxu0 0.0
    %247 = vmatpush1.msra.mxu0 0.0
    %248 = vmatprep.subr.mxu0 0.0
    %249 = vmatpush1.msra.mxu0 0.0
    %250 = vmatprep.subr.mxu0 0.0
    %251 = vmatpush1.msra.mxu0 0.0
    %252 = vmatprep.subr.mxu0 0.0
    %253 = vmatpush1.msra.mxu0 0.0
    %254 = vmatprep.subr.mxu0 0.0
    %255 = vmatpush1.msra.mxu0 0.0
    %256 = vmatprep.subr.mxu0 0.0
    %257 = vmatpush1.msra.mxu0 0.0
    %258 = vmatprep.mubr.f32.mxu0 0.0
    %259 = vmatmul.mubr.f32.gmra.mrb[0].mxu0 %v121
    %v260 = vpop.f32.mrb[0].mxu0
    %v261 = vadd.f32 %v182, %v260
    %v262 = vpop.f32.mrb[0].mxu0
    %v263 = vadd.f32 %v186, %v262
    %264 = vmatprep.mubr.f32.mxu0 0.0
    %265 = vmatmul.mubr.f32.gmra.mrb[0].mxu0 %v122
    %v266 = vpop.f32.mrb[0].mxu0
    %v267 = vadd.f32 %v182, %v266
    %v268 = vpop.f32.mrb[0].mxu0
    %v269 = vadd.f32 %v186, %v268
    %270 = vmatprep.mubr.f32.mxu0 0.0
    %271 = vmatmul.mubr.f32.gmra.mrb[0].mxu0 %v123
    %v272 = vpop.f32.mrb[0].mxu0
    %v273 = vadd.f32 %v182, %v272
    %v274 = vpop.f32.mrb[0].mxu0
    %v275 = vadd.f32 %v186, %v274
    %276 = vmatprep.mubr.f32.mxu0 0.0
    %277 = vmatmul.mubr.f32.gmra.mrb[0].mxu0 %v124
    %v278 = vpop.f32.mrb[0].mxu0
    %v279 = vadd.f32 %v182, %v278
    %v280 = vpop.f32.mrb[0].mxu0
    %v281 = vadd.f32 %v186, %v280
    %282 = vmatprep.mubr.f32.mxu0 0.0
    %283 = vmatmul.mubr.f32.gmra.mrb[0].mxu0 %v125
    %v284 = vpop.f32.mrb[0].mxu0
    %v285 = vadd.f32 %v182, %v284
    %v286 = vpop.f32.mrb[0].mxu0
    %v287 = vadd.f32 %v186, %v286
    %288 = vmatprep.mubr.f32.mxu0 0.0
    %289 = vmatmul.mubr.f32.gmra.mrb[0].mxu0 %v126
    %v290 = vpop.f32.mrb[0].mxu0
    %v291 = vadd.f32 %v182, %v290
    %v292 = vpop.f32.mrb[0].mxu0
    %v293 = vadd.f32 %v186, %v292
    %294 = vmatprep.mubr.f32.mxu0 0.0
    %295 = vmatmul.mubr.f32.gmra.mrb[0].mxu0 %v127
    %v296 = vpop.f32.mrb[0].mxu0
    %v297 = vadd.f32 %v182, %v296
    %v298 = vpop.f32.mrb[0].mxu0
    %v299 = vadd.f32 %v186, %v298
    %300 = vmatprep.mubr.f32.mxu0 0.0
    %301 = vmatmul.mubr.f32.gmra.mrb[0].mxu0 %v128
    %v302 = vpop.f32.mrb[0].mxu0
    %v303 = vadd.f32 %v182, %v302
    %v304 = vpop.f32.mrb[0].mxu0
    %v305 = vadd.f32 %v186, %v304
    %306 = vdwg.mxu0
    %307 = vmatprep.subr.mxu0 0.0
    %308 = vmatpush1.msra.mxu0 %v131
    %309 = vmatprep.subr.mxu0 0.0
    %310 = vmatpush1.msra.mxu0 %v134
    %311 = vmatprep.subr.mxu0 0.0
    %312 = vmatpush1.msra.mxu0 %v137
    %313 = vmatprep.subr.mxu0 0.0
    %314 = vmatpush1.msra.mxu0 %v140
    %315 = vmatprep.subr.mxu0 0.0
    %316 = vmatpush1.msra.mxu0 %v143
    %317 = vmatprep.subr.mxu0 0.0
    %318 = vmatpush1.msra.mxu0 %v146
    %319 = vmatprep.subr.mxu0 0.0
    %320 = vmatpush1.msra.mxu0 %v149
    %321 = vmatprep.subr.mxu0 0.0
    %322 = vmatpush1.msra.mxu0 %v152
    %323 = vmatprep.subr.mxu0 0.0
    %324 = vmatpush1.msra.mxu0 %v155
    %325 = vmatprep.subr.mxu0 0.0
    %326 = vmatpush1.msra.mxu0 %v158
    %327 = vmatprep.subr.mxu0 0.0
    %328 = vmatpush1.msra.mxu0 %v161
    %329 = vmatprep.subr.mxu0 0.0
    %330 = vmatpush1.msra.mxu0 %v164
    %331 = vmatprep.subr.mxu0 0.0
    %332 = vmatpush1.msra.mxu0 %v167
    %333 = vmatprep.subr.mxu0 0.0
    %334 = vmatpush1.msra.mxu0 %v170
    %335 = vmatprep.subr.mxu0 0.0
    %336 = vmatpush1.msra.mxu0 %v173
    %337 = vmatprep.subr.mxu0 0.0
    %338 = vmatpush1.msra.mxu0 %v176
    %339 = vmatprep.subr.mxu0 0.0
    %340 = vmatpush1.msra.mxu0 0.0
    %341 = vmatprep.subr.mxu0 0.0
    %342 = vmatpush1.msra.mxu0 0.0
    %343 = vmatprep.subr.mxu0 0.0
    %344 = vmatpush1.msra.mxu0 0.0
    %345 = vmatprep.subr.mxu0 0.0
    %346 = vmatpush1.msra.mxu0 0.0
    %347 = vmatprep.subr.mxu0 0.0
    %348 = vmatpush1.msra.mxu0 0.0
    %349 = vmatprep.subr.mxu0 0.0
    %350 = vmatpush1.msra.mxu0 0.0
    %351 = vmatprep.subr.mxu0 0.0
    %352 = vmatpush1.msra.mxu0 0.0
    %353 = vmatprep.subr.mxu0 0.0
    %354 = vmatpush1.msra.mxu0 0.0
    %355 = vmatprep.subr.mxu0 0.0
    %356 = vmatpush1.msra.mxu0 0.0
    %357 = vmatprep.subr.mxu0 0.0
    %358 = vmatpush1.msra.mxu0 0.0
    %359 = vmatprep.subr.mxu0 0.0
    %360 = vmatpush1.msra.mxu0 0.0
    %361 = vmatprep.subr.mxu0 0.0
    %362 = vmatpush1.msra.mxu0 0.0
    %363 = vmatprep.subr.mxu0 0.0
    %364 = vmatpush1.msra.mxu0 0.0
    %365 = vmatprep.subr.mxu0 0.0
    %366 = vmatpush1.msra.mxu0 0.0
    %367 = vmatprep.subr.mxu0 0.0
    %368 = vmatpush1.msra.mxu0 0.0
    %369 = vmatprep.subr.mxu0 0.0
    %370 = vmatpush1.msra.mxu0 0.0
    %371 = vmatprep.mubr.f32.mxu0 0.0
    %372 = vmatmul.mubr.f32.gmra.mrb[0].mxu0 %v121
    %v373 = vpop.f32.mrb[0].mxu0
    %v374 = vadd.f32 %v190, %v373
    %v375 = vpop.f32.mrb[0].mxu0
    %376 = vmatprep.mubr.f32.mxu0 0.0
    %377 = vmatmul.mubr.f32.gmra.mrb[0].mxu0 %v122
    %v378 = vpop.f32.mrb[0].mxu0
    %v379 = vadd.f32 %v190, %v378
    %v380 = vpop.f32.mrb[0].mxu0
    %381 = vmatprep.mubr.f32.mxu0 0.0
    %382 = vmatmul.mubr.f32.gmra.mrb[0].mxu0 %v123
    %v383 = vpop.f32.mrb[0].mxu0
    %v384 = vadd.f32 %v190, %v383
    %v385 = vpop.f32.mrb[0].mxu0
    %386 = vmatprep.mubr.f32.mxu0 0.0
    %387 = vmatmul.mubr.f32.gmra.mrb[0].mxu0 %v124
    %v388 = vpop.f32.mrb[0].mxu0
    %v389 = vadd.f32 %v190, %v388
    %v390 = vpop.f32.mrb[0].mxu0
    %391 = vmatprep.mubr.f32.mxu0 0.0
    %392 = vmatmul.mubr.f32.gmra.mrb[0].mxu0 %v125
    %v393 = vpop.f32.mrb[0].mxu0
    %v394 = vadd.f32 %v190, %v393
    %v395 = vpop.f32.mrb[0].mxu0
    %396 = vmatprep.mubr.f32.mxu0 0.0
    %397 = vmatmul.mubr.f32.gmra.mrb[0].mxu0 %v126
    %v398 = vpop.f32.mrb[0].mxu0
    %v399 = vadd.f32 %v190, %v398
    %v400 = vpop.f32.mrb[0].mxu0
    %401 = vmatprep.mubr.f32.mxu0 0.0
    %402 = vmatmul.mubr.f32.gmra.mrb[0].mxu0 %v127
    %v403 = vpop.f32.mrb[0].mxu0
    %v404 = vadd.f32 %v190, %v403
    %v405 = vpop.f32.mrb[0].mxu0
    %406 = vmatprep.mubr.f32.mxu0 0.0
    %407 = vmatmul.mubr.f32.gmra.mrb[0].mxu0 %v128
    %v408 = vpop.f32.mrb[0].mxu0
    %v409 = vadd.f32 %v190, %v408
    %v410 = vpop.f32.mrb[0].mxu0
    %411 = vdwg.mxu0
    %412 = vst [vmem:[#allocation2] sm:$0xff] %v261
    %413 = vst [vmem:[#allocation2 + $0x8] sm:$0xff] %v263
    %414 = vst [vmem:[#allocation2 + $0x10] sm:$0xff] %v374
    %415 = vst [vmem:[#allocation2 + $0x18] sm:$0xff] %v267
    %416 = vst [vmem:[#allocation2 + $0x20] sm:$0xff] %v269
    %417 = vst [vmem:[#allocation2 + $0x28] sm:$0xff] %v379
    %418 = vst [vmem:[#allocation2 + $0x30] sm:$0xff] %v273
    %419 = vst [vmem:[#allocation2 + $0x38] sm:$0xff] %v275
    %420 = vst [vmem:[#allocation2 + $0x40] sm:$0xff] %v384
    %421 = vst [vmem:[#allocation2 + $0x48] sm:$0xff] %v279
    %422 = vst [vmem:[#allocation2 + $0x50] sm:$0xff] %v281
    %423 = vst [vmem:[#allocation2 + $0x58] sm:$0xff] %v389
    %424 = vst [vmem:[#allocation2 + $0x60] sm:$0xff] %v285
    %425 = vst [vmem:[#allocation2 + $0x68] sm:$0xff] %v287
    %426 = vst [vmem:[#allocation2 + $0x70] sm:$0xff] %v394
    %427 = vst [vmem:[#allocation2 + $0x78] sm:$0xff] %v291
    %428 = vst [vmem:[#allocation2 + $0x80] sm:$0xff] %v293
    %429 = vst [vmem:[#allocation2 + $0x88] sm:$0xff] %v399
    %430 = vst [vmem:[#allocation2 + $0x90] sm:$0xff] %v297
    %431 = vst [vmem:[#allocation2 + $0x98] sm:$0xff] %v299
    %432 = vst [vmem:[#allocation2 + $0xa0] sm:$0xff] %v404
    %433 = vst [vmem:[#allocation2 + $0xa8] sm:$0xff] %v303
    %434 = vst [vmem:[#allocation2 + $0xb0] sm:$0xff] %v305
    %435 = vst [vmem:[#allocation2 + $0xb8] sm:$0xff] %v409
    %v436 = vld [vmem:[#allocation2] sm:$0xff]
    %v437 = vld [vmem:[#allocation2 + $0x8] sm:$0xff]
    %v438 = vld [vmem:[#allocation2 + $0x10] sm:$0xff]
    %v439 = vld [vmem:[#allocation9] sm:$0xff]
    %v440 = vld [vmem:[#allocation9 + $0x8] sm:$0xff]
    %v441 = vld [vmem:[#allocation9 + $0x10] sm:$0xff]
    %v442 = vld [vmem:[#allocation9 + $0x18] sm:$0xff]
    %v443 = vld [vmem:[#allocation9 + $0x20] sm:$0xff]
    %v444 = vld [vmem:[#allocation9 + $0x28] sm:$0xff]
    %v445 = vld [vmem:[#allocation9 + $0x30] sm:$0xff]
    %v446 = vld [vmem:[#allocation9 + $0x38] sm:$0xff]
    %v447 = vld [vmem:[#allocation9 + $0x40] sm:$0xff]
    %v448 = vld [vmem:[#allocation9 + $0x48] sm:$0xff]
    %v449 = vld [vmem:[#allocation9 + $0x50] sm:$0xff]
    %v450 = vld [vmem:[#allocation9 + $0x58] sm:$0xff]
    %v451 = vld [vmem:[#allocation9 + $0x60] sm:$0xff]
    %v452 = vld [vmem:[#allocation9 + $0x68] sm:$0xff]
    %v453 = vld [vmem:[#allocation9 + $0x70] sm:$0xff]
    %v454 = vld [vmem:[#allocation9 + $0x78] sm:$0xff]
    %v455 = vld [vmem:[#allocation9 + $0x80] sm:$0xff]
    %v456 = vld [vmem:[#allocation9 + $0x88] sm:$0xff]
    %v457 = vld [vmem:[#allocation9 + $0x90] sm:$0xff]
    %v458 = vld [vmem:[#allocation9 + $0x98] sm:$0xff]
    %v459 = vld [vmem:[#allocation9 + $0xa0] sm:$0xff]
    %v460 = vld [vmem:[#allocation9 + $0xa8] sm:$0xff]
    %v461 = vld [vmem:[#allocation9 + $0xb0] sm:$0xff]
    %v462 = vld [vmem:[#allocation9 + $0xb8] sm:$0xff]
    %v463 = vld [vmem:[#allocation9 + $0xc0] sm:$0xff]
    %v464 = vld [vmem:[#allocation9 + $0xc8] sm:$0xff]
    %v465 = vld [vmem:[#allocation9 + $0xd0] sm:$0xff]
    %v466 = vld [vmem:[#allocation9 + $0xd8] sm:$0xff]
    %v467 = vld [vmem:[#allocation9 + $0xe0] sm:$0xff]
    %v468 = vld [vmem:[#allocation9 + $0xe8] sm:$0xff]
    %v469 = vld [vmem:[#allocation9 + $0xf0] sm:$0xff]
    %v470 = vld [vmem:[#allocation9 + $0xf8] sm:$0xff]
    %v471 = vld [vmem:[#allocation9 + $0x100] sm:$0xff]
    %v472 = vld [vmem:[#allocation9 + $0x108] sm:$0xff]
    %v473 = vld [vmem:[#allocation9 + $0x110] sm:$0xff]
    %v474 = vld [vmem:[#allocation9 + $0x118] sm:$0xff]
    %v475 = vld [vmem:[#allocation9 + $0x120] sm:$0xff]
    %v476 = vld [vmem:[#allocation9 + $0x128] sm:$0xff]
    %v477 = vld [vmem:[#allocation9 + $0x130] sm:$0xff]
    %v478 = vld [vmem:[#allocation9 + $0x138] sm:$0xff]
    %v479 = vld [vmem:[#allocation9 + $0x140] sm:$0xff]
    %v480 = vld [vmem:[#allocation9 + $0x148] sm:$0xff]
    %v481 = vld [vmem:[#allocation9 + $0x150] sm:$0xff]
    %v482 = vld [vmem:[#allocation9 + $0x158] sm:$0xff]
    %v483 = vld [vmem:[#allocation9 + $0x160] sm:$0xff]
    %v484 = vld [vmem:[#allocation9 + $0x168] sm:$0xff]
    %v485 = vld [vmem:[#allocation9 + $0x170] sm:$0xff]
    %v486 = vld [vmem:[#allocation9 + $0x178] sm:$0xff]
    %v487 = vld [vmem:[%s4] sm:$0x7]
    %v489 = vlaneseq
    %v490 = vshrl.u32 %v489, 7
    %v491 = vsub.s32 0, %v490
    %v492 = vrot.slane %v487, %v491
    %v493 = vlaneseq
    %v494 = vshrl.u32 %v493, 7
    %v495 = vsub.s32 1, %v494
    %v496 = vrot.slane %v487, %v495
    %v497 = vlaneseq
    %v498 = vshrl.u32 %v497, 7
    %v499 = vsub.s32 2, %v498
    %v500 = vrot.slane %v487, %v499
    %504 = vmatprep.subr.mxu0 %v440
    %505 = vmatpush1.msra.mxu0 %v439
    %506 = vmatprep.subr.mxu0 %v443
    %507 = vmatpush1.msra.mxu0 %v442
    %508 = vmatprep.subr.mxu0 %v446
    %509 = vmatpush1.msra.mxu0 %v445
    %510 = vmatprep.subr.mxu0 %v449
    %511 = vmatpush1.msra.mxu0 %v448
    %512 = vmatprep.subr.mxu0 %v452
    %513 = vmatpush1.msra.mxu0 %v451
    %514 = vmatprep.subr.mxu0 %v455
    %515 = vmatpush1.msra.mxu0 %v454
    %516 = vmatprep.subr.mxu0 %v458
    %517 = vmatpush1.msra.mxu0 %v457
    %518 = vmatprep.subr.mxu0 %v461
    %519 = vmatpush1.msra.mxu0 %v460
    %520 = vmatprep.subr.mxu0 %v464
    %521 = vmatpush1.msra.mxu0 %v463
    %522 = vmatprep.subr.mxu0 %v467
    %523 = vmatpush1.msra.mxu0 %v466
    %524 = vmatprep.subr.mxu0 %v470
    %525 = vmatpush1.msra.mxu0 %v469
    %526 = vmatprep.subr.mxu0 %v473
    %527 = vmatpush1.msra.mxu0 %v472
    %528 = vmatprep.subr.mxu0 %v476
    %529 = vmatpush1.msra.mxu0 %v475
    %530 = vmatprep.subr.mxu0 %v479
    %531 = vmatpush1.msra.mxu0 %v478
    %532 = vmatprep.subr.mxu0 %v482
    %533 = vmatpush1.msra.mxu0 %v481
    %534 = vmatprep.subr.mxu0 %v485
    %535 = vmatpush1.msra.mxu0 %v484
    %536 = vmatprep.subr.mxu0 0.0
    %537 = vmatpush1.msra.mxu0 0.0
    %538 = vmatprep.subr.mxu0 0.0
    %539 = vmatpush1.msra.mxu0 0.0
    %540 = vmatprep.subr.mxu0 0.0
    %541 = vmatpush1.msra.mxu0 0.0
    %542 = vmatprep.subr.mxu0 0.0
    %543 = vmatpush1.msra.mxu0 0.0
    %544 = vmatprep.subr.mxu0 0.0
    %545 = vmatpush1.msra.mxu0 0.0
    %546 = vmatprep.subr.mxu0 0.0
    %547 = vmatpush1.msra.mxu0 0.0
    %548 = vmatprep.subr.mxu0 0.0
    %549 = vmatpush1.msra.mxu0 0.0
    %550 = vmatprep.subr.mxu0 0.0
    %551 = vmatpush1.msra.mxu0 0.0
    %552 = vmatprep.subr.mxu0 0.0
    %553 = vmatpush1.msra.mxu0 0.0
    %554 = vmatprep.subr.mxu0 0.0
    %555 = vmatpush1.msra.mxu0 0.0
    %556 = vmatprep.subr.mxu0 0.0
    %557 = vmatpush1.msra.mxu0 0.0
    %558 = vmatprep.subr.mxu0 0.0
    %559 = vmatpush1.msra.mxu0 0.0
    %560 = vmatprep.subr.mxu0 0.0
    %561 = vmatpush1.msra.mxu0 0.0
    %562 = vmatprep.subr.mxu0 0.0
    %563 = vmatpush1.msra.mxu0 0.0
    %564 = vmatprep.subr.mxu0 0.0
    %565 = vmatpush1.msra.mxu0 0.0
    %566 = vmatprep.subr.mxu0 0.0
    %567 = vmatpush1.msra.mxu0 0.0
    %568 = vmatprep.mubr.f32.mxu0 0.0
    %569 = vmatmul.mubr.f32.gmra.mrb[0].mxu0 0.0
    %v570 = vpop.f32.mrb[0].mxu0
    %v571 = vadd.f32 %v492, %v570
    %v572 = vpop.f32.mrb[0].mxu0
    %v573 = vadd.f32 %v496, %v572
    %574 = vdwg.mxu0
    %575 = vmatprep.subr.mxu0 0.0
    %576 = vmatpush1.msra.mxu0 %v441
    %577 = vmatprep.subr.mxu0 0.0
    %578 = vmatpush1.msra.mxu0 %v444
    %579 = vmatprep.subr.mxu0 0.0
    %580 = vmatpush1.msra.mxu0 %v447
    %581 = vmatprep.subr.mxu0 0.0
    %582 = vmatpush1.msra.mxu0 %v450
    %583 = vmatprep.subr.mxu0 0.0
    %584 = vmatpush1.msra.mxu0 %v453
    %585 = vmatprep.subr.mxu0 0.0
    %586 = vmatpush1.msra.mxu0 %v456
    %587 = vmatprep.subr.mxu0 0.0
    %588 = vmatpush1.msra.mxu0 %v459
    %589 = vmatprep.subr.mxu0 0.0
    %590 = vmatpush1.msra.mxu0 %v462
    %591 = vmatprep.subr.mxu0 0.0
    %592 = vmatpush1.msra.mxu0 %v465
    %593 = vmatprep.subr.mxu0 0.0
    %594 = vmatpush1.msra.mxu0 %v468
    %595 = vmatprep.subr.mxu0 0.0
    %596 = vmatpush1.msra.mxu0 %v471
    %597 = vmatprep.subr.mxu0 0.0
    %598 = vmatpush1.msra.mxu0 %v474
    %599 = vmatprep.subr.mxu0 0.0
    %600 = vmatpush1.msra.mxu0 %v477
    %601 = vmatprep.subr.mxu0 0.0
    %602 = vmatpush1.msra.mxu0 %v480
    %603 = vmatprep.subr.mxu0 0.0
    %604 = vmatpush1.msra.mxu0 %v483
    %605 = vmatprep.subr.mxu0 0.0
    %606 = vmatpush1.msra.mxu0 %v486
    %607 = vmatprep.subr.mxu0 0.0
    %608 = vmatpush1.msra.mxu0 0.0
    %609 = vmatprep.subr.mxu0 0.0
    %610 = vmatpush1.msra.mxu0 0.0
    %611 = vmatprep.subr.mxu0 0.0
    %612 = vmatpush1.msra.mxu0 0.0
    %613 = vmatprep.subr.mxu0 0.0
    %614 = vmatpush1.msra.mxu0 0.0
    %615 = vmatprep.subr.mxu0 0.0
    %616 = vmatpush1.msra.mxu0 0.0
    %617 = vmatprep.subr.mxu0 0.0
    %618 = vmatpush1.msra.mxu0 0.0
    %619 = vmatprep.subr.mxu0 0.0
    %620 = vmatpush1.msra.mxu0 0.0
    %621 = vmatprep.subr.mxu0 0.0
    %622 = vmatpush1.msra.mxu0 0.0
    %623 = vmatprep.subr.mxu0 0.0
    %624 = vmatpush1.msra.mxu0 0.0
    %625 = vmatprep.subr.mxu0 0.0
    %626 = vmatpush1.msra.mxu0 0.0
    %627 = vmatprep.subr.mxu0 0.0
    %628 = vmatpush1.msra.mxu0 0.0
    %629 = vmatprep.subr.mxu0 0.0
    %630 = vmatpush1.msra.mxu0 0.0
    %631 = vmatprep.subr.mxu0 0.0
    %632 = vmatpush1.msra.mxu0 0.0
    %633 = vmatprep.subr.mxu0 0.0
    %634 = vmatpush1.msra.mxu0 0.0
    %635 = vmatprep.subr.mxu0 0.0
    %636 = vmatpush1.msra.mxu0 0.0
    %637 = vmatprep.subr.mxu0 0.0
    %638 = vmatpush1.msra.mxu0 0.0
    %639 = vmatprep.mubr.f32.mxu0 0.0
    %640 = vmatmul.mubr.f32.gmra.mrb[0].mxu0 0.0
    %v641 = vpop.f32.mrb[0].mxu0
    %v642 = vadd.f32 %v500, %v641
    %v643 = vpop.f32.mrb[0].mxu0
    %644 = vdwg.mxu0
    %v645 = vadd.f32 %v436, %v571
    %v646 = vxor.u32 %v645, 2147483648
    %v647 = vmul.f32 %v646, 1.442695
    %v648 = vpow.pop %v647
    %v649 = vadd.f32 %v648, 1.0
    %v650 = vrcp.pop %v649
    %v651 = vmul.f32 1.0, %v650
    %v652 = vadd.f32 %v437, %v573
    %v653 = vxor.u32 %v652, 2147483648
    %v654 = vmul.f32 %v653, 1.442695
    %v655 = vpow.pop %v654
    %v656 = vadd.f32 %v655, 1.0
    %v657 = vrcp.pop %v656
    %v658 = vmul.f32 1.0, %v657
    %v659 = vmul.f32 %v651, %v642
    %v660 = vadd.f32 %v438, %v659
    %v661 = vtanh.pop %v660
    %v662 = vsub.f32 1.0, %v658
    %v663 = vmul.f32 %v662, %v661
    %v664 = vmul.f32 %v658, 0.0
    %v665 = vadd.f32 %v663, %v664
    %666 = vst [vmem:[#allocation3] sm:$0xff] %v665
    %s667 = scalar_lea.vmem [#allocation2], 24
    %v668 = vld [vmem:[%s667] sm:$0xff]
    %v669 = vld [vmem:[%s667 + $0x8] sm:$0xff]
    %v670 = vld [vmem:[%s667 + $0x10] sm:$0xff]
    %v671 = vld [vmem:[#allocation9] sm:$0xff]
    %v672 = vld [vmem:[#allocation9 + $0x8] sm:$0xff]
    %v673 = vld [vmem:[#allocation9 + $0x10] sm:$0xff]
    %v674 = vld [vmem:[#allocation9 + $0x18] sm:$0xff]
    %v675 = vld [vmem:[#allocation9 + $0x20] sm:$0xff]
    %v676 = vld [vmem:[#allocation9 + $0x28] sm:$0xff]
    %v677 = vld [vmem:[#allocation9 + $0x30] sm:$0xff]
    %v678 = vld [vmem:[#allocation9 + $0x38] sm:$0xff]
    %v679 = vld [vmem:[#allocation9 + $0x40] sm:$0xff]
    %v680 = vld [vmem:[#allocation9 + $0x48] sm:$0xff]
    %v681 = vld [vmem:[#allocation9 + $0x50] sm:$0xff]
    %v682 = vld [vmem:[#allocation9 + $0x58] sm:$0xff]
    %v683 = vld [vmem:[#allocation9 + $0x60] sm:$0xff]
    %v684 = vld [vmem:[#allocation9 + $0x68] sm:$0xff]
    %v685 = vld [vmem:[#allocation9 + $0x70] sm:$0xff]
    %v686 = vld [vmem:[#allocation9 + $0x78] sm:$0xff]
    %v687 = vld [vmem:[#allocation9 + $0x80] sm:$0xff]
    %v688 = vld [vmem:[#allocation9 + $0x88] sm:$0xff]
    %v689 = vld [vmem:[#allocation9 + $0x90] sm:$0xff]
    %v690 = vld [vmem:[#allocation9 + $0x98] sm:$0xff]
    %v691 = vld [vmem:[#allocation9 + $0xa0] sm:$0xff]
    %v692 = vld [vmem:[#allocation9 + $0xa8] sm:$0xff]
    %v693 = vld [vmem:[#allocation9 + $0xb0] sm:$0xff]
    %v694 = vld [vmem:[#allocation9 + $0xb8] sm:$0xff]
    %v695 = vld [vmem:[#allocation9 + $0xc0] sm:$0xff]
    %v696 = vld [vmem:[#allocation9 + $0xc8] sm:$0xff]
    %v697 = vld [vmem:[#allocation9 + $0xd0] sm:$0xff]
    %v698 = vld [vmem:[#allocation9 + $0xd8] sm:$0xff]
    %v699 = vld [vmem:[#allocation9 + $0xe0] sm:$0xff]
    %v700 = vld [vmem:[#allocation9 + $0xe8] sm:$0xff]
    %v701 = vld [vmem:[#allocation9 + $0xf0] sm:$0xff]
    %v702 = vld [vmem:[#allocation9 + $0xf8] sm:$0xff]
    %v703 = vld [vmem:[#allocation9 + $0x100] sm:$0xff]
    %v704 = vld [vmem:[#allocation9 + $0x108] sm:$0xff]
    %v705 = vld [vmem:[#allocation9 + $0x110] sm:$0xff]
    %v706 = vld [vmem:[#allocation9 + $0x118] sm:$0xff]
    %v707 = vld [vmem:[#allocation9 + $0x120] sm:$0xff]
    %v708 = vld [vmem:[#allocation9 + $0x128] sm:$0xff]
    %v709 = vld [vmem:[#allocation9 + $0x130] sm:$0xff]
    %v710 = vld [vmem:[#allocation9 + $0x138] sm:$0xff]
    %v711 = vld [vmem:[#allocation9 + $0x140] sm:$0xff]
    %v712 = vld [vmem:[#allocation9 + $0x148] sm:$0xff]
    %v713 = vld [vmem:[#allocation9 + $0x150] sm:$0xff]
    %v714 = vld [vmem:[#allocation9 + $0x158] sm:$0xff]
    %v715 = vld [vmem:[#allocation9 + $0x160] sm:$0xff]
    %v716 = vld [vmem:[#allocation9 + $0x168] sm:$0xff]
    %v717 = vld [vmem:[#allocation9 + $0x170] sm:$0xff]
    %v718 = vld [vmem:[#allocation9 + $0x178] sm:$0xff]
    %v719 = vld [vmem:[%s4] sm:$0x7]
    %v721 = vlaneseq
    %v722 = vshrl.u32 %v721, 7
    %v723 = vsub.s32 0, %v722
    %v724 = vrot.slane %v719, %v723
    %v725 = vlaneseq
    %v726 = vshrl.u32 %v725, 7
    %v727 = vsub.s32 1, %v726
    %v728 = vrot.slane %v719, %v727
    %v729 = vlaneseq
    %v730 = vshrl.u32 %v729, 7
    %v731 = vsub.s32 2, %v730
    %v732 = vrot.slane %v719, %v731
    %736 = vmatprep.subr.mxu0 %v672
    %737 = vmatpush1.msra.mxu0 %v671
    %738 = vmatprep.subr.mxu0 %v675
    %739 = vmatpush1.msra.mxu0 %v674
    %740 = vmatprep.subr.mxu0 %v678
    %741 = vmatpush1.msra.mxu0 %v677
    %742 = vmatprep.subr.mxu0 %v681
    %743 = vmatpush1.msra.mxu0 %v680
    %744 = vmatprep.subr.mxu0 %v684
    %745 = vmatpush1.msra.mxu0 %v683
    %746 = vmatprep.subr.mxu0 %v687
    %747 = vmatpush1.msra.mxu0 %v686
    %748 = vmatprep.subr.mxu0 %v690
    %749 = vmatpush1.msra.mxu0 %v689
    %750 = vmatprep.subr.mxu0 %v693
    %751 = vmatpush1.msra.mxu0 %v692
    %752 = vmatprep.subr.mxu0 %v696
    %753 = vmatpush1.msra.mxu0 %v695
    %754 = vmatprep.subr.mxu0 %v699
    %755 = vmatpush1.msra.mxu0 %v698
    %756 = vmatprep.subr.mxu0 %v702
    %757 = vmatpush1.msra.mxu0 %v701
    %758 = vmatprep.subr.mxu0 %v705
    %759 = vmatpush1.msra.mxu0 %v704
    %760 = vmatprep.subr.mxu0 %v708
    %761 = vmatpush1.msra.mxu0 %v707
    %762 = vmatprep.subr.mxu0 %v711
    %763 = vmatpush1.msra.mxu0 %v710
    %764 = vmatprep.subr.mxu0 %v714
    %765 = vmatpush1.msra.mxu0 %v713
    %766 = vmatprep.subr.mxu0 %v717
    %767 = vmatpush1.msra.mxu0 %v716
    %768 = vmatprep.subr.mxu0 0.0
    %769 = vmatpush1.msra.mxu0 0.0
    %770 = vmatprep.subr.mxu0 0.0
    %771 = vmatpush1.msra.mxu0 0.0
    %772 = vmatprep.subr.mxu0 0.0
    %773 = vmatpush1.msra.mxu0 0.0
    %774 = vmatprep.subr.mxu0 0.0
    %775 = vmatpush1.msra.mxu0 0.0
    %776 = vmatprep.subr.mxu0 0.0
    %777 = vmatpush1.msra.mxu0 0.0
    %778 = vmatprep.subr.mxu0 0.0
    %779 = vmatpush1.msra.mxu0 0.0
    %780 = vmatprep.subr.mxu0 0.0
    %781 = vmatpush1.msra.mxu0 0.0
    %782 = vmatprep.subr.mxu0 0.0
    %783 = vmatpush1.msra.mxu0 0.0
    %784 = vmatprep.subr.mxu0 0.0
    %785 = vmatpush1.msra.mxu0 0.0
    %786 = vmatprep.subr.mxu0 0.0
    %787 = vmatpush1.msra.mxu0 0.0
    %788 = vmatprep.subr.mxu0 0.0
    %789 = vmatpush1.msra.mxu0 0.0
    %790 = vmatprep.subr.mxu0 0.0
    %791 = vmatpush1.msra.mxu0 0.0
    %792 = vmatprep.subr.mxu0 0.0
    %793 = vmatpush1.msra.mxu0 0.0
    %794 = vmatprep.subr.mxu0 0.0
    %795 = vmatpush1.msra.mxu0 0.0
    %796 = vmatprep.subr.mxu0 0.0
    %797 = vmatpush1.msra.mxu0 0.0
    %798 = vmatprep.subr.mxu0 0.0
    %799 = vmatpush1.msra.mxu0 0.0
    %800 = vmatprep.mubr.f32.mxu0 0.0
    %801 = vmatmul.mubr.f32.gmra.mrb[0].mxu0 %v665
    %v802 = vpop.f32.mrb[0].mxu0
    %v803 = vadd.f32 %v724, %v802
    %v804 = vpop.f32.mrb[0].mxu0
    %v805 = vadd.f32 %v728, %v804
    %806 = vdwg.mxu0
    %807 = vmatprep.subr.mxu0 0.0
    %808 = vmatpush1.msra.mxu0 %v673
    %809 = vmatprep.subr.mxu0 0.0
    %810 = vmatpush1.msra.mxu0 %v676
    %811 = vmatprep.subr.mxu0 0.0
    %812 = vmatpush1.msra.mxu0 %v679
    %813 = vmatprep.subr.mxu0 0.0
    %814 = vmatpush1.msra.mxu0 %v682
    %815 = vmatprep.subr.mxu0 0.0
    %816 = vmatpush1.msra.mxu0 %v685
    %817 = vmatprep.subr.mxu0 0.0
    %818 = vmatpush1.msra.mxu0 %v688
    %819 = vmatprep.subr.mxu0 0.0
    %820 = vmatpush1.msra.mxu0 %v691
    %821 = vmatprep.subr.mxu0 0.0
    %822 = vmatpush1.msra.mxu0 %v694
    %823 = vmatprep.subr.mxu0 0.0
    %824 = vmatpush1.msra.mxu0 %v697
    %825 = vmatprep.subr.mxu0 0.0
    %826 = vmatpush1.msra.mxu0 %v700
    %827 = vmatprep.subr.mxu0 0.0
    %828 = vmatpush1.msra.mxu0 %v703
    %829 = vmatprep.subr.mxu0 0.0
    %830 = vmatpush1.msra.mxu0 %v706
    %831 = vmatprep.subr.mxu0 0.0
    %832 = vmatpush1.msra.mxu0 %v709
    %833 = vmatprep.subr.mxu0 0.0
    %834 = vmatpush1.msra.mxu0 %v712
    %835 = vmatprep.subr.mxu0 0.0
    %836 = vmatpush1.msra.mxu0 %v715
    %837 = vmatprep.subr.mxu0 0.0
    %838 = vmatpush1.msra.mxu0 %v718
    %839 = vmatprep.subr.mxu0 0.0
    %840 = vmatpush1.msra.mxu0 0.0
    %841 = vmatprep.subr.mxu0 0.0
    %842 = vmatpush1.msra.mxu0 0.0
    %843 = vmatprep.subr.mxu0 0.0
    %844 = vmatpush1.msra.mxu0 0.0
    %845 = vmatprep.subr.mxu0 0.0
    %846 = vmatpush1.msra.mxu0 0.0
    %847 = vmatprep.subr.mxu0 0.0
    %848 = vmatpush1.msra.mxu0 0.0
    %849 = vmatprep.subr.mxu0 0.0
    %850 = vmatpush1.msra.mxu0 0.0
    %851 = vmatprep.subr.mxu0 0.0
    %852 = vmatpush1.msra.mxu0 0.0
    %853 = vmatprep.subr.mxu0 0.0
    %854 = vmatpush1.msra.mxu0 0.0
    %855 = vmatprep.subr.mxu0 0.0
    %856 = vmatpush1.msra.mxu0 0.0
    %857 = vmatprep.subr.mxu0 0.0
    %858 = vmatpush1.msra.mxu0 0.0
    %859 = vmatprep.subr.mxu0 0.0
    %860 = vmatpush1.msra.mxu0 0.0
    %861 = vmatprep.subr.mxu0 0.0
    %862 = vmatpush1.msra.mxu0 0.0
    %863 = vmatprep.subr.mxu0 0.0
    %864 = vmatpush1.msra.mxu0 0.0
    %865 = vmatprep.subr.mxu0 0.0
    %866 = vmatpush1.msra.mxu0 0.0
    %867 = vmatprep.subr.mxu0 0.0
    %868 = vmatpush1.msra.mxu0 0.0
    %869 = vmatprep.subr.mxu0 0.0
    %870 = vmatpush1.msra.mxu0 0.0
    %871 = vmatprep.mubr.f32.mxu0 0.0
    %872 = vmatmul.mubr.f32.gmra.mrb[0].mxu0 %v665
    %v873 = vpop.f32.mrb[0].mxu0
    %v874 = vadd.f32 %v732, %v873
    %v875 = vpop.f32.mrb[0].mxu0
    %876 = vdwg.mxu0
    %v877 = vadd.f32 %v668, %v803
    %v878 = vxor.u32 %v877, 2147483648
    %v879 = vmul.f32 %v878, 1.442695
    %v880 = vpow.pop %v879
    %v881 = vadd.f32 %v880, 1.0
    %v882 = vrcp.pop %v881
    %v883 = vmul.f32 1.0, %v882
    %v884 = vadd.f32 %v669, %v805
    %v885 = vxor.u32 %v884, 2147483648
    %v886 = vmul.f32 %v885, 1.442695
    %v887 = vpow.pop %v886
    %v888 = vadd.f32 %v887, 1.0
    %v889 = vrcp.pop %v888
    %v890 = vmul.f32 1.0, %v889
    %v891 = vmul.f32 %v883, %v874
    %v892 = vadd.f32 %v670, %v891
    %v893 = vtanh.pop %v892
    %v894 = vsub.f32 1.0, %v890
    %v895 = vmul.f32 %v894, %v893
    %v896 = vmul.f32 %v890, %v665
    %v897 = vadd.f32 %v895, %v896
    %s898 = scalar_lea.vmem [#allocation3], 8
    %899 = vst [vmem:[%s898] sm:$0xff] %v897
    %s900 = scalar_lea.vmem [#allocation2], 48
    %v901 = vld [vmem:[%s900] sm:$0xff]
    %v902 = vld [vmem:[%s900 + $0x8] sm:$0xff]
    %v903 = vld [vmem:[%s900 + $0x10] sm:$0xff]
    %v904 = vld [vmem:[#allocation9] sm:$0xff]
    %v905 = vld [vmem:[#allocation9 + $0x8] sm:$0xff]
    %v906 = vld [vmem:[#allocation9 + $0x10] sm:$0xff]
    %v907 = vld [vmem:[#allocation9 + $0x18] sm:$0xff]
    %v908 = vld [vmem:[#allocation9 + $0x20] sm:$0xff]
    %v909 = vld [vmem:[#allocation9 + $0x28] sm:$0xff]
    %v910 = vld [vmem:[#allocation9 + $0x30] sm:$0xff]
    %v911 = vld [vmem:[#allocation9 + $0x38] sm:$0xff]
    %v912 = vld [vmem:[#allocation9 + $0x40] sm:$0xff]
    %v913 = vld [vmem:[#allocation9 + $0x48] sm:$0xff]
    %v914 = vld [vmem:[#allocation9 + $0x50] sm:$0xff]
    %v915 = vld [vmem:[#allocation9 + $0x58] sm:$0xff]
    %v916 = vld [vmem:[#allocation9 + $0x60] sm:$0xff]
    %v917 = vld [vmem:[#allocation9 + $0x68] sm:$0xff]
    %v918 = vld [vmem:[#allocation9 + $0x70] sm:$0xff]
    %v919 = vld [vmem:[#allocation9 + $0x78] sm:$0xff]
    %v920 = vld [vmem:[#allocation9 + $0x80] sm:$0xff]
    %v921 = vld [vmem:[#allocation9 + $0x88] sm:$0xff]
    %v922 = vld [vmem:[#allocation9 + $0x90] sm:$0xff]
    %v923 = vld [vmem:[#allocation9 + $0x98] sm:$0xff]
    %v924 = vld [vmem:[#allocation9 + $0xa0] sm:$0xff]
    %v925 = vld [vmem:[#allocation9 + $0xa8] sm:$0xff]
    %v926 = vld [vmem:[#allocation9 + $0xb0] sm:$0xff]
    %v927 = vld [vmem:[#allocation9 + $0xb8] sm:$0xff]
    %v928 = vld [vmem:[#allocation9 + $0xc0] sm:$0xff]
    %v929 = vld [vmem:[#allocation9 + $0xc8] sm:$0xff]
    %v930 = vld [vmem:[#allocation9 + $0xd0] sm:$0xff]
    %v931 = vld [vmem:[#allocation9 + $0xd8] sm:$0xff]
    %v932 = vld [vmem:[#allocation9 + $0xe0] sm:$0xff]
    %v933 = vld [vmem:[#allocation9 + $0xe8] sm:$0xff]
    %v934 = vld [vmem:[#allocation9 + $0xf0] sm:$0xff]
    %v935 = vld [vmem:[#allocation9 + $0xf8] sm:$0xff]
    %v936 = vld [vmem:[#allocation9 + $0x100] sm:$0xff]
    %v937 = vld [vmem:[#allocation9 + $0x108] sm:$0xff]
    %v938 = vld [vmem:[#allocation9 + $0x110] sm:$0xff]
    %v939 = vld [vmem:[#allocation9 + $0x118] sm:$0xff]
    %v940 = vld [vmem:[#allocation9 + $0x120] sm:$0xff]
    %v941 = vld [vmem:[#allocation9 + $0x128] sm:$0xff]
    %v942 = vld [vmem:[#allocation9 + $0x130] sm:$0xff]
    %v943 = vld [vmem:[#allocation9 + $0x138] sm:$0xff]
    %v944 = vld [vmem:[#allocation9 + $0x140] sm:$0xff]
    %v945 = vld [vmem:[#allocation9 + $0x148] sm:$0xff]
    %v946 = vld [vmem:[#allocation9 + $0x150] sm:$0xff]
    %v947 = vld [vmem:[#allocation9 + $0x158] sm:$0xff]
    %v948 = vld [vmem:[#allocation9 + $0x160] sm:$0xff]
    %v949 = vld [vmem:[#allocation9 + $0x168] sm:$0xff]
    %v950 = vld [vmem:[#allocation9 + $0x170] sm:$0xff]
    %v951 = vld [vmem:[#allocation9 + $0x178] sm:$0xff]
    %v952 = vld [vmem:[%s4] sm:$0x7]
    %v954 = vlaneseq
    %v955 = vshrl.u32 %v954, 7
    %v956 = vsub.s32 0, %v955
    %v957 = vrot.slane %v952, %v956
    %v958 = vlaneseq
    %v959 = vshrl.u32 %v958, 7
    %v960 = vsub.s32 1, %v959
    %v961 = vrot.slane %v952, %v960
    %v962 = vlaneseq
    %v963 = vshrl.u32 %v962, 7
    %v964 = vsub.s32 2, %v963
    %v965 = vrot.slane %v952, %v964
    %969 = vmatprep.subr.mxu0 %v905
    %970 = vmatpush1.msra.mxu0 %v904
    %971 = vmatprep.subr.mxu0 %v908
    %972 = vmatpush1.msra.mxu0 %v907
    %973 = vmatprep.subr.mxu0 %v911
    %974 = vmatpush1.msra.mxu0 %v910
    %975 = vmatprep.subr.mxu0 %v914
    %976 = vmatpush1.msra.mxu0 %v913
    %977 = vmatprep.subr.mxu0 %v917
    %978 = vmatpush1.msra.mxu0 %v916
    %979 = vmatprep.subr.mxu0 %v920
    %980 = vmatpush1.msra.mxu0 %v919
    %981 = vmatprep.subr.mxu0 %v923
    %982 = vmatpush1.msra.mxu0 %v922
    %983 = vmatprep.subr.mxu0 %v926
    %984 = vmatpush1.msra.mxu0 %v925
    %985 = vmatprep.subr.mxu0 %v929
    %986 = vmatpush1.msra.mxu0 %v928
    %987 = vmatprep.subr.mxu0 %v932
    %988 = vmatpush1.msra.mxu0 %v931
    %989 = vmatprep.subr.mxu0 %v935
    %990 = vmatpush1.msra.mxu0 %v934
    %991 = vmatprep.subr.mxu0 %v938
    %992 = vmatpush1.msra.mxu0 %v937
    %993 = vmatprep.subr.mxu0 %v941
    %994 = vmatpush1.msra.mxu0 %v940
    %995 = vmatprep.subr.mxu0 %v944
    %996 = vmatpush1.msra.mxu0 %v943
    %997 = vmatprep.subr.mxu0 %v947
    %998 = vmatpush1.msra.mxu0 %v946
    %999 = vmatprep.subr.mxu0 %v950
    %1000 = vmatpush1.msra.mxu0 %v949
    %1001 = vmatprep.subr.mxu0 0.0
    %1002 = vmatpush1.msra.mxu0 0.0
    %1003 = vmatprep.subr.mxu0 0.0
    %1004 = vmatpush1.msra.mxu0 0.0
    %1005 = vmatprep.subr.mxu0 0.0
    %1006 = vmatpush1.msra.mxu0 0.0
    %1007 = vmatprep.subr.mxu0 0.0
    %1008 = vmatpush1.msra.mxu0 0.0
    %1009 = vmatprep.subr.mxu0 0.0
    %1010 = vmatpush1.msra.mxu0 0.0
    %1011 = vmatprep.subr.mxu0 0.0
    %1012 = vmatpush1.msra.mxu0 0.0
    %1013 = vmatprep.subr.mxu0 0.0
    %1014 = vmatpush1.msra.mxu0 0.0
    %1015 = vmatprep.subr.mxu0 0.0
    %1016 = vmatpush1.msra.mxu0 0.0
    %1017 = vmatprep.subr.mxu0 0.0
    %1018 = vmatpush1.msra.mxu0 0.0
    %1019 = vmatprep.subr.mxu0 0.0
    %1020 = vmatpush1.msra.mxu0 0.0
    %1021 = vmatprep.subr.mxu0 0.0
    %1022 = vmatpush1.msra.mxu0 0.0
    %1023 = vmatprep.subr.mxu0 0.0
    %1024 = vmatpush1.msra.mxu0 0.0
    %1025 = vmatprep.subr.mxu0 0.0
    %1026 = vmatpush1.msra.mxu0 0.0
    %1027 = vmatprep.subr.mxu0 0.0
    %1028 = vmatpush1.msra.mxu0 0.0
    %1029 = vmatprep.subr.mxu0 0.0
    %1030 = vmatpush1.msra.mxu0 0.0
    %1031 = vmatprep.subr.mxu0 0.0
    %1032 = vmatpush1.msra.mxu0 0.0
    %1033 = vmatprep.mubr.f32.mxu0 0.0
    %1034 = vmatmul.mubr.f32.gmra.mrb[0].mxu0 %v897
    %v1035 = vpop.f32.mrb[0].mxu0
    %v1036 = vadd.f32 %v957, %v1035
    %v1037 = vpop.f32.mrb[0].mxu0
    %v1038 = vadd.f32 %v961, %v1037
    %1039 = vdwg.mxu0
    %1040 = vmatprep.subr.mxu0 0.0
    %1041 = vmatpush1.msra.mxu0 %v906
    %1042 = vmatprep.subr.mxu0 0.0
    %1043 = vmatpush1.msra.mxu0 %v909
    %1044 = vmatprep.subr.mxu0 0.0
    %1045 = vmatpush1.msra.mxu0 %v912
    %1046 = vmatprep.subr.mxu0 0.0
    %1047 = vmatpush1.msra.mxu0 %v915
    %1048 = vmatprep.subr.mxu0 0.0
    %1049 = vmatpush1.msra.mxu0 %v918
    %1050 = vmatprep.subr.mxu0 0.0
    %1051 = vmatpush1.msra.mxu0 %v921
    %1052 = vmatprep.subr.mxu0 0.0
    %1053 = vmatpush1.msra.mxu0 %v924
    %1054 = vmatprep.subr.mxu0 0.0
    %1055 = vmatpush1.msra.mxu0 %v927
    %1056 = vmatprep.subr.mxu0 0.0
    %1057 = vmatpush1.msra.mxu0 %v930
    %1058 = vmatprep.subr.mxu0 0.0
    %1059 = vmatpush1.msra.mxu0 %v933
    %1060 = vmatprep.subr.mxu0 0.0
    %1061 = vmatpush1.msra.mxu0 %v936
    %1062 = vmatprep.subr.mxu0 0.0
    %1063 = vmatpush1.msra.mxu0 %v939
    %1064 = vmatprep.subr.mxu0 0.0
    %1065 = vmatpush1.msra.mxu0 %v942
    %1066 = vmatprep.subr.mxu0 0.0
    %1067 = vmatpush1.msra.mxu0 %v945
    %1068 = vmatprep.subr.mxu0 0.0
    %1069 = vmatpush1.msra.mxu0 %v948
    %1070 = vmatprep.subr.mxu0 0.0
    %1071 = vmatpush1.msra.mxu0 %v951
    %1072 = vmatprep.subr.mxu0 0.0
    %1073 = vmatpush1.msra.mxu0 0.0
    %1074 = vmatprep.subr.mxu0 0.0
    %1075 = vmatpush1.msra.mxu0 0.0
    %1076 = vmatprep.subr.mxu0 0.0
    %1077 = vmatpush1.msra.mxu0 0.0
    %1078 = vmatprep.subr.mxu0 0.0
    %1079 = vmatpush1.msra.mxu0 0.0
    %1080 = vmatprep.subr.mxu0 0.0
    %1081 = vmatpush1.msra.mxu0 0.0
    %1082 = vmatprep.subr.mxu0 0.0
    %1083 = vmatpush1.msra.mxu0 0.0
    %1084 = vmatprep.subr.mxu0 0.0
    %1085 = vmatpush1.msra.mxu0 0.0
    %1086 = vmatprep.subr.mxu0 0.0
    %1087 = vmatpush1.msra.mxu0 0.0
    %1088 = vmatprep.subr.mxu0 0.0
    %1089 = vmatpush1.msra.mxu0 0.0
    %1090 = vmatprep.subr.mxu0 0.0
    %1091 = vmatpush1.msra.mxu0 0.0
    %1092 = vmatprep.subr.mxu0 0.0
    %1093 = vmatpush1.msra.mxu0 0.0
    %1094 = vmatprep.subr.mxu0 0.0
    %1095 = vmatpush1.msra.mxu0 0.0
    %1096 = vmatprep.subr.mxu0 0.0
    %1097 = vmatpush1.msra.mxu0 0.0
    %1098 = vmatprep.subr.mxu0 0.0
    %1099 = vmatpush1.msra.mxu0 0.0
    %1100 = vmatprep.subr.mxu0 0.0
    %1101 = vmatpush1.msra.mxu0 0.0
    %1102 = vmatprep.subr.mxu0 0.0
    %1103 = vmatpush1.msra.mxu0 0.0
    %1104 = vmatprep.mubr.f32.mxu0 0.0
    %1105 = vmatmul.mubr.f32.gmra.mrb[0].mxu0 %v897
    %v1106 = vpop.f32.mrb[0].mxu0
    %v1107 = vadd.f32 %v965, %v1106
    %v1108 = vpop.f32.mrb[0].mxu0
    %1109 = vdwg.mxu0
    %v1110 = vadd.f32 %v901, %v1036
    %v1111 = vxor.u32 %v1110, 2147483648
    %v1112 = vmul.f32 %v1111, 1.442695
    %v1113 = vpow.pop %v1112
    %v1114 = vadd.f32 %v1113, 1.0
    %v1115 = vrcp.pop %v1114
    %v1116 = vmul.f32 1.0, %v1115
    %v1117 = vadd.f32 %v902, %v1038
    %v1118 = vxor.u32 %v1117, 2147483648
    %v1119 = vmul.f32 %v1118, 1.442695
    %v1120 = vpow.pop %v1119
    %v1121 = vadd.f32 %v1120, 1.0
    %v1122 = vrcp.pop %v1121
    %v1123 = vmul.f32 1.0, %v1122
    %v1124 = vmul.f32 %v1116, %v1107
    %v1125 = vadd.f32 %v903, %v1124
    %v1126 = vtanh.pop %v1125
    %v1127 = vsub.f32 1.0, %v1123
    %v1128 = vmul.f32 %v1127, %v1126
    %v1129 = vmul.f32 %v1123, %v897
    %v1130 = vadd.f32 %v1128, %v1129
    %s1131 = scalar_lea.vmem [#allocation3], 16
    %1132 = vst [vmem:[%s1131] sm:$0xff] %v1130
    %s1133 = scalar_lea.vmem [#allocation2], 72
    %v1134 = vld [vmem:[%s1133] sm:$0xff]
    %v1135 = vld [vmem:[%s1133 + $0x8] sm:$0xff]
    %v1136 = vld [vmem:[%s1133 + $0x10] sm:$0xff]
    %v1137 = vld [vmem:[#allocation9] sm:$0xff]
    %v1138 = vld [vmem:[#allocation9 + $0x8] sm:$0xff]
    %v1139 = vld [vmem:[#allocation9 + $0x10] sm:$0xff]
    %v1140 = vld [vmem:[#allocation9 + $0x18] sm:$0xff]
    %v1141 = vld [vmem:[#allocation9 + $0x20] sm:$0xff]
    %v1142 = vld [vmem:[#allocation9 + $0x28] sm:$0xff]
    %v1143 = vld [vmem:[#allocation9 + $0x30] sm:$0xff]
    %v1144 = vld [vmem:[#allocation9 + $0x38] sm:$0xff]
    %v1145 = vld [vmem:[#allocation9 + $0x40] sm:$0xff]
    %v1146 = vld [vmem:[#allocation9 + $0x48] sm:$0xff]
    %v1147 = vld [vmem:[#allocation9 + $0x50] sm:$0xff]
    %v1148 = vld [vmem:[#allocation9 + $0x58] sm:$0xff]
    %v1149 = vld [vmem:[#allocation9 + $0x60] sm:$0xff]
    %v1150 = vld [vmem:[#allocation9 + $0x68] sm:$0xff]
    %v1151 = vld [vmem:[#allocation9 + $0x70] sm:$0xff]
    %v1152 = vld [vmem:[#allocation9 + $0x78] sm:$0xff]
    %v1153 = vld [vmem:[#allocation9 + $0x80] sm:$0xff]
    %v1154 = vld [vmem:[#allocation9 + $0x88] sm:$0xff]
    %v1155 = vld [vmem:[#allocation9 + $0x90] sm:$0xff]
    %v1156 = vld [vmem:[#allocation9 + $0x98] sm:$0xff]
    %v1157 = vld [vmem:[#allocation9 + $0xa0] sm:$0xff]
    %v1158 = vld [vmem:[#allocation9 + $0xa8] sm:$0xff]
    %v1159 = vld [vmem:[#allocation9 + $0xb0] sm:$0xff]
    %v1160 = vld [vmem:[#allocation9 + $0xb8] sm:$0xff]
    %v1161 = vld [vmem:[#allocation9 + $0xc0] sm:$0xff]
    %v1162 = vld [vmem:[#allocation9 + $0xc8] sm:$0xff]
    %v1163 = vld [vmem:[#allocation9 + $0xd0] sm:$0xff]
    %v1164 = vld [vmem:[#allocation9 + $0xd8] sm:$0xff]
    %v1165 = vld [vmem:[#allocation9 + $0xe0] sm:$0xff]
    %v1166 = vld [vmem:[#allocation9 + $0xe8] sm:$0xff]
    %v1167 = vld [vmem:[#allocation9 + $0xf0] sm:$0xff]
    %v1168 = vld [vmem:[#allocation9 + $0xf8] sm:$0xff]
    %v1169 = vld [vmem:[#allocation9 + $0x100] sm:$0xff]
    %v1170 = vld [vmem:[#allocation9 + $0x108] sm:$0xff]
    %v1171 = vld [vmem:[#allocation9 + $0x110] sm:$0xff]
    %v1172 = vld [vmem:[#allocation9 + $0x118] sm:$0xff]
    %v1173 = vld [vmem:[#allocation9 + $0x120] sm:$0xff]
    %v1174 = vld [vmem:[#allocation9 + $0x128] sm:$0xff]
    %v1175 = vld [vmem:[#allocation9 + $0x130] sm:$0xff]
    %v1176 = vld [vmem:[#allocation9 + $0x138] sm:$0xff]
    %v1177 = vld [vmem:[#allocation9 + $0x140] sm:$0xff]
    %v1178 = vld [vmem:[#allocation9 + $0x148] sm:$0xff]
    %v1179 = vld [vmem:[#allocation9 + $0x150] sm:$0xff]
    %v1180 = vld [vmem:[#allocation9 + $0x158] sm:$0xff]
    %v1181 = vld [vmem:[#allocation9 + $0x160] sm:$0xff]
    %v1182 = vld [vmem:[#allocation9 + $0x168] sm:$0xff]
    %v1183 = vld [vmem:[#allocation9 + $0x170] sm:$0xff]
    %v1184 = vld [vmem:[#allocation9 + $0x178] sm:$0xff]
    %v1185 = vld [vmem:[%s4] sm:$0x7]
    %v1187 = vlaneseq
    %v1188 = vshrl.u32 %v1187, 7
    %v1189 = vsub.s32 0, %v1188
    %v1190 = vrot.slane %v1185, %v1189
    %v1191 = vlaneseq
    %v1192 = vshrl.u32 %v1191, 7
    %v1193 = vsub.s32 1, %v1192
    %v1194 = vrot.slane %v1185, %v1193
    %v1195 = vlaneseq
    %v1196 = vshrl.u32 %v1195, 7
    %v1197 = vsub.s32 2, %v1196
    %v1198 = vrot.slane %v1185, %v1197
    %1202 = vmatprep.subr.mxu0 %v1138
    %1203 = vmatpush1.msra.mxu0 %v1137
    %1204 = vmatprep.subr.mxu0 %v1141
    %1205 = vmatpush1.msra.mxu0 %v1140
    %1206 = vmatprep.subr.mxu0 %v1144
    %1207 = vmatpush1.msra.mxu0 %v1143
    %1208 = vmatprep.subr.mxu0 %v1147
    %1209 = vmatpush1.msra.mxu0 %v1146
    %1210 = vmatprep.subr.mxu0 %v1150
    %1211 = vmatpush1.msra.mxu0 %v1149
    %1212 = vmatprep.subr.mxu0 %v1153
    %1213 = vmatpush1.msra.mxu0 %v1152
    %1214 = vmatprep.subr.mxu0 %v1156
    %1215 = vmatpush1.msra.mxu0 %v1155
    %1216 = vmatprep.subr.mxu0 %v1159
    %1217 = vmatpush1.msra.mxu0 %v1158
    %1218 = vmatprep.subr.mxu0 %v1162
    %1219 = vmatpush1.msra.mxu0 %v1161
    %1220 = vmatprep.subr.mxu0 %v1165
    %1221 = vmatpush1.msra.mxu0 %v1164
    %1222 = vmatprep.subr.mxu0 %v1168
    %1223 = vmatpush1.msra.mxu0 %v1167
    %1224 = vmatprep.subr.mxu0 %v1171
    %1225 = vmatpush1.msra.mxu0 %v1170
    %1226 = vmatprep.subr.mxu0 %v1174
    %1227 = vmatpush1.msra.mxu0 %v1173
    %1228 = vmatprep.subr.mxu0 %v1177
    %1229 = vmatpush1.msra.mxu0 %v1176
    %1230 = vmatprep.subr.mxu0 %v1180
    %1231 = vmatpush1.msra.mxu0 %v1179
    %1232 = vmatprep.subr.mxu0 %v1183
    %1233 = vmatpush1.msra.mxu0 %v1182
    %1234 = vmatprep.subr.mxu0 0.0
    %1235 = vmatpush1.msra.mxu0 0.0
    %1236 = vmatprep.subr.mxu0 0.0
    %1237 = vmatpush1.msra.mxu0 0.0
    %1238 = vmatprep.subr.mxu0 0.0
    %1239 = vmatpush1.msra.mxu0 0.0
    %1240 = vmatprep.subr.mxu0 0.0
    %1241 = vmatpush1.msra.mxu0 0.0
    %1242 = vmatprep.subr.mxu0 0.0
    %1243 = vmatpush1.msra.mxu0 0.0
    %1244 = vmatprep.subr.mxu0 0.0
    %1245 = vmatpush1.msra.mxu0 0.0
    %1246 = vmatprep.subr.mxu0 0.0
    %1247 = vmatpush1.msra.mxu0 0.0
    %1248 = vmatprep.subr.mxu0 0.0
    %1249 = vmatpush1.msra.mxu0 0.0
    %1250 = vmatprep.subr.mxu0 0.0
    %1251 = vmatpush1.msra.mxu0 0.0
    %1252 = vmatprep.subr.mxu0 0.0
    %1253 = vmatpush1.msra.mxu0 0.0
    %1254 = vmatprep.subr.mxu0 0.0
    %1255 = vmatpush1.msra.mxu0 0.0
    %1256 = vmatprep.subr.mxu0 0.0
    %1257 = vmatpush1.msra.mxu0 0.0
    %1258 = vmatprep.subr.mxu0 0.0
    %1259 = vmatpush1.msra.mxu0 0.0
    %1260 = vmatprep.subr.mxu0 0.0
    %1261 = vmatpush1.msra.mxu0 0.0
    %1262 = vmatprep.subr.mxu0 0.0
    %1263 = vmatpush1.msra.mxu0 0.0
    %1264 = vmatprep.subr.mxu0 0.0
    %1265 = vmatpush1.msra.mxu0 0.0
    %1266 = vmatprep.mubr.f32.mxu0 0.0
    %1267 = vmatmul.mubr.f32.gmra.mrb[0].mxu0 %v1130
    %v1268 = vpop.f32.mrb[0].mxu0
    %v1269 = vadd.f32 %v1190, %v1268
    %v1270 = vpop.f32.mrb[0].mxu0
    %v1271 = vadd.f32 %v1194, %v1270
    %1272 = vdwg.mxu0
    %1273 = vmatprep.subr.mxu0 0.0
    %1274 = vmatpush1.msra.mxu0 %v1139
    %1275 = vmatprep.subr.mxu0 0.0
    %1276 = vmatpush1.msra.mxu0 %v1142
    %1277 = vmatprep.subr.mxu0 0.0
    %1278 = vmatpush1.msra.mxu0 %v1145
    %1279 = vmatprep.subr.mxu0 0.0
    %1280 = vmatpush1.msra.mxu0 %v1148
    %1281 = vmatprep.subr.mxu0 0.0
    %1282 = vmatpush1.msra.mxu0 %v1151
    %1283 = vmatprep.subr.mxu0 0.0
    %1284 = vmatpush1.msra.mxu0 %v1154
    %1285 = vmatprep.subr.mxu0 0.0
    %1286 = vmatpush1.msra.mxu0 %v1157
    %1287 = vmatprep.subr.mxu0 0.0
    %1288 = vmatpush1.msra.mxu0 %v1160
    %1289 = vmatprep.subr.mxu0 0.0
    %1290 = vmatpush1.msra.mxu0 %v1163
    %1291 = vmatprep.subr.mxu0 0.0
    %1292 = vmatpush1.msra.mxu0 %v1166
    %1293 = vmatprep.subr.mxu0 0.0
    %1294 = vmatpush1.msra.mxu0 %v1169
    %1295 = vmatprep.subr.mxu0 0.0
    %1296 = vmatpush1.msra.mxu0 %v1172
    %1297 = vmatprep.subr.mxu0 0.0
    %1298 = vmatpush1.msra.mxu0 %v1175
    %1299 = vmatprep.subr.mxu0 0.0
    %1300 = vmatpush1.msra.mxu0 %v1178
    %1301 = vmatprep.subr.mxu0 0.0
    %1302 = vmatpush1.msra.mxu0 %v1181
    %1303 = vmatprep.subr.mxu0 0.0
    %1304 = vmatpush1.msra.mxu0 %v1184
    %1305 = vmatprep.subr.mxu0 0.0
    %1306 = vmatpush1.msra.mxu0 0.0
    %1307 = vmatprep.subr.mxu0 0.0
    %1308 = vmatpush1.msra.mxu0 0.0
    %1309 = vmatprep.subr.mxu0 0.0
    %1310 = vmatpush1.msra.mxu0 0.0
    %1311 = vmatprep.subr.mxu0 0.0
    %1312 = vmatpush1.msra.mxu0 0.0
    %1313 = vmatprep.subr.mxu0 0.0
    %1314 = vmatpush1.msra.mxu0 0.0
    %1315 = vmatprep.subr.mxu0 0.0
    %1316 = vmatpush1.msra.mxu0 0.0
    %1317 = vmatprep.subr.mxu0 0.0
    %1318 = vmatpush1.msra.mxu0 0.0
    %1319 = vmatprep.subr.mxu0 0.0
    %1320 = vmatpush1.msra.mxu0 0.0
    %1321 = vmatprep.subr.mxu0 0.0
    %1322 = vmatpush1.msra.mxu0 0.0
    %1323 = vmatprep.subr.mxu0 0.0
    %1324 = vmatpush1.msra.mxu0 0.0
    %1325 = vmatprep.subr.mxu0 0.0
    %1326 = vmatpush1.msra.mxu0 0.0
    %1327 = vmatprep.subr.mxu0 0.0
    %1328 = vmatpush1.msra.mxu0 0.0
    %1329 = vmatprep.subr.mxu0 0.0
    %1330 = vmatpush1.msra.mxu0 0.0
    %1331 = vmatprep.subr.mxu0 0.0
    %1332 = vmatpush1.msra.mxu0 0.0
    %1333 = vmatprep.subr.mxu0 0.0
    %1334 = vmatpush1.msra.mxu0 0.0
    %1335 = vmatprep.subr.mxu0 0.0
    %1336 = vmatpush1.msra.mxu0 0.0
    %1337 = vmatprep.mubr.f32.mxu0 0.0
    %1338 = vmatmul.mubr.f32.gmra.mrb[0].mxu0 %v1130
    %v1339 = vpop.f32.mrb[0].mxu0
    %v1340 = vadd.f32 %v1198, %v1339
    %v1341 = vpop.f32.mrb[0].mxu0
    %1342 = vdwg.mxu0
    %v1343 = vadd.f32 %v1134, %v1269
    %v1344 = vxor.u32 %v1343, 2147483648
    %v1345 = vmul.f32 %v1344, 1.442695
    %v1346 = vpow.pop %v1345
    %v1347 = vadd.f32 %v1346, 1.0
    %v1348 = vrcp.pop %v1347
    %v1349 = vmul.f32 1.0, %v1348
    %v1350 = vadd.f32 %v1135, %v1271
    %v1351 = vxor.u32 %v1350, 2147483648
    %v1352 = vmul.f32 %v1351, 1.442695
    %v1353 = vpow.pop %v1352
    %v1354 = vadd.f32 %v1353, 1.0
    %v1355 = vrcp.pop %v1354
    %v1356 = vmul.f32 1.0, %v1355
    %v1357 = vmul.f32 %v1349, %v1340
    %v1358 = vadd.f32 %v1136, %v1357
    %v1359 = vtanh.pop %v1358
    %v1360 = vsub.f32 1.0, %v1356
    %v1361 = vmul.f32 %v1360, %v1359
    %v1362 = vmul.f32 %v1356, %v1130
    %v1363 = vadd.f32 %v1361, %v1362
    %s1364 = scalar_lea.vmem [#allocation3], 24
    %1365 = vst [vmem:[%s1364] sm:$0xff] %v1363
    %s1366 = scalar_lea.vmem [#allocation2], 96
    %v1367 = vld [vmem:[%s1366] sm:$0xff]
    %v1368 = vld [vmem:[%s1366 + $0x8] sm:$0xff]
    %v1369 = vld [vmem:[%s1366 + $0x10] sm:$0xff]
    %v1370 = vld [vmem:[#allocation9] sm:$0xff]
    %v1371 = vld [vmem:[#allocation9 + $0x8] sm:$0xff]
    %v1372 = vld [vmem:[#allocation9 + $0x10] sm:$0xff]
    %v1373 = vld [vmem:[#allocation9 + $0x18] sm:$0xff]
    %v1374 = vld [vmem:[#allocation9 + $0x20] sm:$0xff]
    %v1375 = vld [vmem:[#allocation9 + $0x28] sm:$0xff]
    %v1376 = vld [vmem:[#allocation9 + $0x30] sm:$0xff]
    %v1377 = vld [vmem:[#allocation9 + $0x38] sm:$0xff]
    %v1378 = vld [vmem:[#allocation9 + $0x40] sm:$0xff]
    %v1379 = vld [vmem:[#allocation9 + $0x48] sm:$0xff]
    %v1380 = vld [vmem:[#allocation9 + $0x50] sm:$0xff]
    %v1381 = vld [vmem:[#allocation9 + $0x58] sm:$0xff]
    %v1382 = vld [vmem:[#allocation9 + $0x60] sm:$0xff]
    %v1383 = vld [vmem:[#allocation9 + $0x68] sm:$0xff]
    %v1384 = vld [vmem:[#allocation9 + $0x70] sm:$0xff]
    %v1385 = vld [vmem:[#allocation9 + $0x78] sm:$0xff]
    %v1386 = vld [vmem:[#allocation9 + $0x80] sm:$0xff]
    %v1387 = vld [vmem:[#allocation9 + $0x88] sm:$0xff]
    %v1388 = vld [vmem:[#allocation9 + $0x90] sm:$0xff]
    %v1389 = vld [vmem:[#allocation9 + $0x98] sm:$0xff]
    %v1390 = vld [vmem:[#allocation9 + $0xa0] sm:$0xff]
    %v1391 = vld [vmem:[#allocation9 + $0xa8] sm:$0xff]
    %v1392 = vld [vmem:[#allocation9 + $0xb0] sm:$0xff]
    %v1393 = vld [vmem:[#allocation9 + $0xb8] sm:$0xff]
    %v1394 = vld [vmem:[#allocation9 + $0xc0] sm:$0xff]
    %v1395 = vld [vmem:[#allocation9 + $0xc8] sm:$0xff]
    %v1396 = vld [vmem:[#allocation9 + $0xd0] sm:$0xff]
    %v1397 = vld [vmem:[#allocation9 + $0xd8] sm:$0xff]
    %v1398 = vld [vmem:[#allocation9 + $0xe0] sm:$0xff]
    %v1399 = vld [vmem:[#allocation9 + $0xe8] sm:$0xff]
    %v1400 = vld [vmem:[#allocation9 + $0xf0] sm:$0xff]
    %v1401 = vld [vmem:[#allocation9 + $0xf8] sm:$0xff]
    %v1402 = vld [vmem:[#allocation9 + $0x100] sm:$0xff]
    %v1403 = vld [vmem:[#allocation9 + $0x108] sm:$0xff]
    %v1404 = vld [vmem:[#allocation9 + $0x110] sm:$0xff]
    %v1405 = vld [vmem:[#allocation9 + $0x118] sm:$0xff]
    %v1406 = vld [vmem:[#allocation9 + $0x120] sm:$0xff]
    %v1407 = vld [vmem:[#allocation9 + $0x128] sm:$0xff]
    %v1408 = vld [vmem:[#allocation9 + $0x130] sm:$0xff]
    %v1409 = vld [vmem:[#allocation9 + $0x138] sm:$0xff]
    %v1410 = vld [vmem:[#allocation9 + $0x140] sm:$0xff]
    %v1411 = vld [vmem:[#allocation9 + $0x148] sm:$0xff]
    %v1412 = vld [vmem:[#allocation9 + $0x150] sm:$0xff]
    %v1413 = vld [vmem:[#allocation9 + $0x158] sm:$0xff]
    %v1414 = vld [vmem:[#allocation9 + $0x160] sm:$0xff]
    %v1415 = vld [vmem:[#allocation9 + $0x168] sm:$0xff]
    %v1416 = vld [vmem:[#allocation9 + $0x170] sm:$0xff]
    %v1417 = vld [vmem:[#allocation9 + $0x178] sm:$0xff]
    %v1418 = vld [vmem:[%s4] sm:$0x7]
    %v1420 = vlaneseq
    %v1421 = vshrl.u32 %v1420, 7
    %v1422 = vsub.s32 0, %v1421
    %v1423 = vrot.slane %v1418, %v1422
    %v1424 = vlaneseq
    %v1425 = vshrl.u32 %v1424, 7
    %v1426 = vsub.s32 1, %v1425
    %v1427 = vrot.slane %v1418, %v1426
    %v1428 = vlaneseq
    %v1429 = vshrl.u32 %v1428, 7
    %v1430 = vsub.s32 2, %v1429
    %v1431 = vrot.slane %v1418, %v1430
    %1435 = vmatprep.subr.mxu0 %v1371
    %1436 = vmatpush1.msra.mxu0 %v1370
    %1437 = vmatprep.subr.mxu0 %v1374
    %1438 = vmatpush1.msra.mxu0 %v1373
    %1439 = vmatprep.subr.mxu0 %v1377
    %1440 = vmatpush1.msra.mxu0 %v1376
    %1441 = vmatprep.subr.mxu0 %v1380
    %1442 = vmatpush1.msra.mxu0 %v1379
    %1443 = vmatprep.subr.mxu0 %v1383
    %1444 = vmatpush1.msra.mxu0 %v1382
    %1445 = vmatprep.subr.mxu0 %v1386
    %1446 = vmatpush1.msra.mxu0 %v1385
    %1447 = vmatprep.subr.mxu0 %v1389
    %1448 = vmatpush1.msra.mxu0 %v1388
    %1449 = vmatprep.subr.mxu0 %v1392
    %1450 = vmatpush1.msra.mxu0 %v1391
    %1451 = vmatprep.subr.mxu0 %v1395
    %1452 = vmatpush1.msra.mxu0 %v1394
    %1453 = vmatprep.subr.mxu0 %v1398
    %1454 = vmatpush1.msra.mxu0 %v1397
    %1455 = vmatprep.subr.mxu0 %v1401
    %1456 = vmatpush1.msra.mxu0 %v1400
    %1457 = vmatprep.subr.mxu0 %v1404
    %1458 = vmatpush1.msra.mxu0 %v1403
    %1459 = vmatprep.subr.mxu0 %v1407
    %1460 = vmatpush1.msra.mxu0 %v1406
    %1461 = vmatprep.subr.mxu0 %v1410
    %1462 = vmatpush1.msra.mxu0 %v1409
    %1463 = vmatprep.subr.mxu0 %v1413
    %1464 = vmatpush1.msra.mxu0 %v1412
    %1465 = vmatprep.subr.mxu0 %v1416
    %1466 = vmatpush1.msra.mxu0 %v1415
    %1467 = vmatprep.subr.mxu0 0.0
    %1468 = vmatpush1.msra.mxu0 0.0
    %1469 = vmatprep.subr.mxu0 0.0
    %1470 = vmatpush1.msra.mxu0 0.0
    %1471 = vmatprep.subr.mxu0 0.0
    %1472 = vmatpush1.msra.mxu0 0.0
    %1473 = vmatprep.subr.mxu0 0.0
    %1474 = vmatpush1.msra.mxu0 0.0
    %1475 = vmatprep.subr.mxu0 0.0
    %1476 = vmatpush1.msra.mxu0 0.0
    %1477 = vmatprep.subr.mxu0 0.0
    %1478 = vmatpush1.msra.mxu0 0.0
    %1479 = vmatprep.subr.mxu0 0.0
    %1480 = vmatpush1.msra.mxu0 0.0
    %1481 = vmatprep.subr.mxu0 0.0
    %1482 = vmatpush1.msra.mxu0 0.0
    %1483 = vmatprep.subr.mxu0 0.0
    %1484 = vmatpush1.msra.mxu0 0.0
    %1485 = vmatprep.subr.mxu0 0.0
    %1486 = vmatpush1.msra.mxu0 0.0
    %1487 = vmatprep.subr.mxu0 0.0
    %1488 = vmatpush1.msra.mxu0 0.0
    %1489 = vmatprep.subr.mxu0 0.0
    %1490 = vmatpush1.msra.mxu0 0.0
    %1491 = vmatprep.subr.mxu0 0.0
    %1492 = vmatpush1.msra.mxu0 0.0
    %1493 = vmatprep.subr.mxu0 0.0
    %1494 = vmatpush1.msra.mxu0 0.0
    %1495 = vmatprep.subr.mxu0 0.0
    %1496 = vmatpush1.msra.mxu0 0.0
    %1497 = vmatprep.subr.mxu0 0.0
    %1498 = vmatpush1.msra.mxu0 0.0
    %1499 = vmatprep.mubr.f32.mxu0 0.0
    %1500 = vmatmul.mubr.f32.gmra.mrb[0].mxu0 %v1363
    %v1501 = vpop.f32.mrb[0].mxu0
    %v1502 = vadd.f32 %v1423, %v1501
    %v1503 = vpop.f32.mrb[0].mxu0
    %v1504 = vadd.f32 %v1427, %v1503
    %1505 = vdwg.mxu0
    %1506 = vmatprep.subr.mxu0 0.0
    %1507 = vmatpush1.msra.mxu0 %v1372
    %1508 = vmatprep.subr.mxu0 0.0
    %1509 = vmatpush1.msra.mxu0 %v1375
    %1510 = vmatprep.subr.mxu0 0.0
    %1511 = vmatpush1.msra.mxu0 %v1378
    %1512 = vmatprep.subr.mxu0 0.0
    %1513 = vmatpush1.msra.mxu0 %v1381
    %1514 = vmatprep.subr.mxu0 0.0
    %1515 = vmatpush1.msra.mxu0 %v1384
    %1516 = vmatprep.subr.mxu0 0.0
    %1517 = vmatpush1.msra.mxu0 %v1387
    %1518 = vmatprep.subr.mxu0 0.0
    %1519 = vmatpush1.msra.mxu0 %v1390
    %1520 = vmatprep.subr.mxu0 0.0
    %1521 = vmatpush1.msra.mxu0 %v1393
    %1522 = vmatprep.subr.mxu0 0.0
    %1523 = vmatpush1.msra.mxu0 %v1396
    %1524 = vmatprep.subr.mxu0 0.0
    %1525 = vmatpush1.msra.mxu0 %v1399
    %1526 = vmatprep.subr.mxu0 0.0
    %1527 = vmatpush1.msra.mxu0 %v1402
    %1528 = vmatprep.subr.mxu0 0.0
    %1529 = vmatpush1.msra.mxu0 %v1405
    %1530 = vmatprep.subr.mxu0 0.0
    %1531 = vmatpush1.msra.mxu0 %v1408
    %1532 = vmatprep.subr.mxu0 0.0
    %1533 = vmatpush1.msra.mxu0 %v1411
    %1534 = vmatprep.subr.mxu0 0.0
    %1535 = vmatpush1.msra.mxu0 %v1414
    %1536 = vmatprep.subr.mxu0 0.0
    %1537 = vmatpush1.msra.mxu0 %v1417
    %1538 = vmatprep.subr.mxu0 0.0
    %1539 = vmatpush1.msra.mxu0 0.0
    %1540 = vmatprep.subr.mxu0 0.0
    %1541 = vmatpush1.msra.mxu0 0.0
    %1542 = vmatprep.subr.mxu0 0.0
    %1543 = vmatpush1.msra.mxu0 0.0
    %1544 = vmatprep.subr.mxu0 0.0
    %1545 = vmatpush1.msra.mxu0 0.0
    %1546 = vmatprep.subr.mxu0 0.0
    %1547 = vmatpush1.msra.mxu0 0.0
    %1548 = vmatprep.subr.mxu0 0.0
    %1549 = vmatpush1.msra.mxu0 0.0
    %1550 = vmatprep.subr.mxu0 0.0
    %1551 = vmatpush1.msra.mxu0 0.0
    %1552 = vmatprep.subr.mxu0 0.0
    %1553 = vmatpush1.msra.mxu0 0.0
    %1554 = vmatprep.subr.mxu0 0.0
    %1555 = vmatpush1.msra.mxu0 0.0
    %1556 = vmatprep.subr.mxu0 0.0
    %1557 = vmatpush1.msra.mxu0 0.0
    %1558 = vmatprep.subr.mxu0 0.0
    %1559 = vmatpush1.msra.mxu0 0.0
    %1560 = vmatprep.subr.mxu0 0.0
    %1561 = vmatpush1.msra.mxu0 0.0
    %1562 = vmatprep.subr.mxu0 0.0
    %1563 = vmatpush1.msra.mxu0 0.0
    %1564 = vmatprep.subr.mxu0 0.0
    %1565 = vmatpush1.msra.mxu0 0.0
    %1566 = vmatprep.subr.mxu0 0.0
    %1567 = vmatpush1.msra.mxu0 0.0
    %1568 = vmatprep.subr.mxu0 0.0
    %1569 = vmatpush1.msra.mxu0 0.0
    %1570 = vmatprep.mubr.f32.mxu0 0.0
    %1571 = vmatmul.mubr.f32.gmra.mrb[0].mxu0 %v1363
    %v1572 = vpop.f32.mrb[0].mxu0
    %v1573 = vadd.f32 %v1431, %v1572
    %v1574 = vpop.f32.mrb[0].mxu0
    %1575 = vdwg.mxu0
    %v1576 = vadd.f32 %v1367, %v1502
    %v1577 = vxor.u32 %v1576, 2147483648
    %v1578 = vmul.f32 %v1577, 1.442695
    %v1579 = vpow.pop %v1578
    %v1580 = vadd.f32 %v1579, 1.0
    %v1581 = vrcp.pop %v1580
    %v1582 = vmul.f32 1.0, %v1581
    %v1583 = vadd.f32 %v1368, %v1504
    %v1584 = vxor.u32 %v1583, 2147483648
    %v1585 = vmul.f32 %v1584, 1.442695
    %v1586 = vpow.pop %v1585
    %v1587 = vadd.f32 %v1586, 1.0
    %v1588 = vrcp.pop %v1587
    %v1589 = vmul.f32 1.0, %v1588
    %v1590 = vmul.f32 %v1582, %v1573
    %v1591 = vadd.f32 %v1369, %v1590
    %v1592 = vtanh.pop %v1591
    %v1593 = vsub.f32 1.0, %v1589
    %v1594 = vmul.f32 %v1593, %v1592
    %v1595 = vmul.f32 %v1589, %v1363
    %v1596 = vadd.f32 %v1594, %v1595
    %s1597 = scalar_lea.vmem [#allocation3], 32
    %1598 = vst [vmem:[%s1597] sm:$0xff] %v1596
    %s1599 = scalar_lea.vmem [#allocation2], 120
    %v1600 = vld [vmem:[%s1599] sm:$0xff]
    %v1601 = vld [vmem:[%s1599 + $0x8] sm:$0xff]
    %v1602 = vld [vmem:[%s1599 + $0x10] sm:$0xff]
    %v1603 = vld [vmem:[#allocation9] sm:$0xff]
    %v1604 = vld [vmem:[#allocation9 + $0x8] sm:$0xff]
    %v1605 = vld [vmem:[#allocation9 + $0x10] sm:$0xff]
    %v1606 = vld [vmem:[#allocation9 + $0x18] sm:$0xff]
    %v1607 = vld [vmem:[#allocation9 + $0x20] sm:$0xff]
    %v1608 = vld [vmem:[#allocation9 + $0x28] sm:$0xff]
    %v1609 = vld [vmem:[#allocation9 + $0x30] sm:$0xff]
    %v1610 = vld [vmem:[#allocation9 + $0x38] sm:$0xff]
    %v1611 = vld [vmem:[#allocation9 + $0x40] sm:$0xff]
    %v1612 = vld [vmem:[#allocation9 + $0x48] sm:$0xff]
    %v1613 = vld [vmem:[#allocation9 + $0x50] sm:$0xff]
    %v1614 = vld [vmem:[#allocation9 + $0x58] sm:$0xff]
    %v1615 = vld [vmem:[#allocation9 + $0x60] sm:$0xff]
    %v1616 = vld [vmem:[#allocation9 + $0x68] sm:$0xff]
    %v1617 = vld [vmem:[#allocation9 + $0x70] sm:$0xff]
    %v1618 = vld [vmem:[#allocation9 + $0x78] sm:$0xff]
    %v1619 = vld [vmem:[#allocation9 + $0x80] sm:$0xff]
    %v1620 = vld [vmem:[#allocation9 + $0x88] sm:$0xff]
    %v1621 = vld [vmem:[#allocation9 + $0x90] sm:$0xff]
    %v1622 = vld [vmem:[#allocation9 + $0x98] sm:$0xff]
    %v1623 = vld [vmem:[#allocation9 + $0xa0] sm:$0xff]
    %v1624 = vld [vmem:[#allocation9 + $0xa8] sm:$0xff]
    %v1625 = vld [vmem:[#allocation9 + $0xb0] sm:$0xff]
    %v1626 = vld [vmem:[#allocation9 + $0xb8] sm:$0xff]
    %v1627 = vld [vmem:[#allocation9 + $0xc0] sm:$0xff]
    %v1628 = vld [vmem:[#allocation9 + $0xc8] sm:$0xff]
    %v1629 = vld [vmem:[#allocation9 + $0xd0] sm:$0xff]
    %v1630 = vld [vmem:[#allocation9 + $0xd8] sm:$0xff]
    %v1631 = vld [vmem:[#allocation9 + $0xe0] sm:$0xff]
    %v1632 = vld [vmem:[#allocation9 + $0xe8] sm:$0xff]
    %v1633 = vld [vmem:[#allocation9 + $0xf0] sm:$0xff]
    %v1634 = vld [vmem:[#allocation9 + $0xf8] sm:$0xff]
    %v1635 = vld [vmem:[#allocation9 + $0x100] sm:$0xff]
    %v1636 = vld [vmem:[#allocation9 + $0x108] sm:$0xff]
    %v1637 = vld [vmem:[#allocation9 + $0x110] sm:$0xff]
    %v1638 = vld [vmem:[#allocation9 + $0x118] sm:$0xff]
    %v1639 = vld [vmem:[#allocation9 + $0x120] sm:$0xff]
    %v1640 = vld [vmem:[#allocation9 + $0x128] sm:$0xff]
    %v1641 = vld [vmem:[#allocation9 + $0x130] sm:$0xff]
    %v1642 = vld [vmem:[#allocation9 + $0x138] sm:$0xff]
    %v1643 = vld [vmem:[#allocation9 + $0x140] sm:$0xff]
    %v1644 = vld [vmem:[#allocation9 + $0x148] sm:$0xff]
    %v1645 = vld [vmem:[#allocation9 + $0x150] sm:$0xff]
    %v1646 = vld [vmem:[#allocation9 + $0x158] sm:$0xff]
    %v1647 = vld [vmem:[#allocation9 + $0x160] sm:$0xff]
    %v1648 = vld [vmem:[#allocation9 + $0x168] sm:$0xff]
    %v1649 = vld [vmem:[#allocation9 + $0x170] sm:$0xff]
    %v1650 = vld [vmem:[#allocation9 + $0x178] sm:$0xff]
    %v1651 = vld [vmem:[%s4] sm:$0x7]
    %v1653 = vlaneseq
    %v1654 = vshrl.u32 %v1653, 7
    %v1655 = vsub.s32 0, %v1654
    %v1656 = vrot.slane %v1651, %v1655
    %v1657 = vlaneseq
    %v1658 = vshrl.u32 %v1657, 7
    %v1659 = vsub.s32 1, %v1658
    %v1660 = vrot.slane %v1651, %v1659
    %v1661 = vlaneseq
    %v1662 = vshrl.u32 %v1661, 7
    %v1663 = vsub.s32 2, %v1662
    %v1664 = vrot.slane %v1651, %v1663
    %1668 = vmatprep.subr.mxu0 %v1604
    %1669 = vmatpush1.msra.mxu0 %v1603
    %1670 = vmatprep.subr.mxu0 %v1607
    %1671 = vmatpush1.msra.mxu0 %v1606
    %1672 = vmatprep.subr.mxu0 %v1610
    %1673 = vmatpush1.msra.mxu0 %v1609
    %1674 = vmatprep.subr.mxu0 %v1613
    %1675 = vmatpush1.msra.mxu0 %v1612
    %1676 = vmatprep.subr.mxu0 %v1616
    %1677 = vmatpush1.msra.mxu0 %v1615
    %1678 = vmatprep.subr.mxu0 %v1619
    %1679 = vmatpush1.msra.mxu0 %v1618
    %1680 = vmatprep.subr.mxu0 %v1622
    %1681 = vmatpush1.msra.mxu0 %v1621
    %1682 = vmatprep.subr.mxu0 %v1625
    %1683 = vmatpush1.msra.mxu0 %v1624
    %1684 = vmatprep.subr.mxu0 %v1628
    %1685 = vmatpush1.msra.mxu0 %v1627
    %1686 = vmatprep.subr.mxu0 %v1631
    %1687 = vmatpush1.msra.mxu0 %v1630
    %1688 = vmatprep.subr.mxu0 %v1634
    %1689 = vmatpush1.msra.mxu0 %v1633
    %1690 = vmatprep.subr.mxu0 %v1637
    %1691 = vmatpush1.msra.mxu0 %v1636
    %1692 = vmatprep.subr.mxu0 %v1640
    %1693 = vmatpush1.msra.mxu0 %v1639
    %1694 = vmatprep.subr.mxu0 %v1643
    %1695 = vmatpush1.msra.mxu0 %v1642
    %1696 = vmatprep.subr.mxu0 %v1646
    %1697 = vmatpush1.msra.mxu0 %v1645
    %1698 = vmatprep.subr.mxu0 %v1649
    %1699 = vmatpush1.msra.mxu0 %v1648
    %1700 = vmatprep.subr.mxu0 0.0
    %1701 = vmatpush1.msra.mxu0 0.0
    %1702 = vmatprep.subr.mxu0 0.0
    %1703 = vmatpush1.msra.mxu0 0.0
    %1704 = vmatprep.subr.mxu0 0.0
    %1705 = vmatpush1.msra.mxu0 0.0
    %1706 = vmatprep.subr.mxu0 0.0
    %1707 = vmatpush1.msra.mxu0 0.0
    %1708 = vmatprep.subr.mxu0 0.0
    %1709 = vmatpush1.msra.mxu0 0.0
    %1710 = vmatprep.subr.mxu0 0.0
    %1711 = vmatpush1.msra.mxu0 0.0
    %1712 = vmatprep.subr.mxu0 0.0
    %1713 = vmatpush1.msra.mxu0 0.0
    %1714 = vmatprep.subr.mxu0 0.0
    %1715 = vmatpush1.msra.mxu0 0.0
    %1716 = vmatprep.subr.mxu0 0.0
    %1717 = vmatpush1.msra.mxu0 0.0
    %1718 = vmatprep.subr.mxu0 0.0
    %1719 = vmatpush1.msra.mxu0 0.0
    %1720 = vmatprep.subr.mxu0 0.0
    %1721 = vmatpush1.msra.mxu0 0.0
    %1722 = vmatprep.subr.mxu0 0.0
    %1723 = vmatpush1.msra.mxu0 0.0
    %1724 = vmatprep.subr.mxu0 0.0
    %1725 = vmatpush1.msra.mxu0 0.0
    %1726 = vmatprep.subr.mxu0 0.0
    %1727 = vmatpush1.msra.mxu0 0.0
    %1728 = vmatprep.subr.mxu0 0.0
    %1729 = vmatpush1.msra.mxu0 0.0
    %1730 = vmatprep.subr.mxu0 0.0
    %1731 = vmatpush1.msra.mxu0 0.0
    %1732 = vmatprep.mubr.f32.mxu0 0.0
    %1733 = vmatmul.mubr.f32.gmra.mrb[0].mxu0 %v1596
    %v1734 = vpop.f32.mrb[0].mxu0
    %v1735 = vadd.f32 %v1656, %v1734
    %v1736 = vpop.f32.mrb[0].mxu0
    %v1737 = vadd.f32 %v1660, %v1736
    %1738 = vdwg.mxu0
    %1739 = vmatprep.subr.mxu0 0.0
    %1740 = vmatpush1.msra.mxu0 %v1605
    %1741 = vmatprep.subr.mxu0 0.0
    %1742 = vmatpush1.msra.mxu0 %v1608
    %1743 = vmatprep.subr.mxu0 0.0
    %1744 = vmatpush1.msra.mxu0 %v1611
    %1745 = vmatprep.subr.mxu0 0.0
    %1746 = vmatpush1.msra.mxu0 %v1614
    %1747 = vmatprep.subr.mxu0 0.0
    %1748 = vmatpush1.msra.mxu0 %v1617
    %1749 = vmatprep.subr.mxu0 0.0
    %1750 = vmatpush1.msra.mxu0 %v1620
    %1751 = vmatprep.subr.mxu0 0.0
    %1752 = vmatpush1.msra.mxu0 %v1623
    %1753 = vmatprep.subr.mxu0 0.0
    %1754 = vmatpush1.msra.mxu0 %v1626
    %1755 = vmatprep.subr.mxu0 0.0
    %1756 = vmatpush1.msra.mxu0 %v1629
    %1757 = vmatprep.subr.mxu0 0.0
    %1758 = vmatpush1.msra.mxu0 %v1632
    %1759 = vmatprep.subr.mxu0 0.0
    %1760 = vmatpush1.msra.mxu0 %v1635
    %1761 = vmatprep.subr.mxu0 0.0
    %1762 = vmatpush1.msra.mxu0 %v1638
    %1763 = vmatprep.subr.mxu0 0.0
    %1764 = vmatpush1.msra.mxu0 %v1641
    %1765 = vmatprep.subr.mxu0 0.0
    %1766 = vmatpush1.msra.mxu0 %v1644
    %1767 = vmatprep.subr.mxu0 0.0
    %1768 = vmatpush1.msra.mxu0 %v1647
    %1769 = vmatprep.subr.mxu0 0.0
    %1770 = vmatpush1.msra.mxu0 %v1650
    %1771 = vmatprep.subr.mxu0 0.0
    %1772 = vmatpush1.msra.mxu0 0.0
    %1773 = vmatprep.subr.mxu0 0.0
    %1774 = vmatpush1.msra.mxu0 0.0
    %1775 = vmatprep.subr.mxu0 0.0
    %1776 = vmatpush1.msra.mxu0 0.0
    %1777 = vmatprep.subr.mxu0 0.0
    %1778 = vmatpush1.msra.mxu0 0.0
    %1779 = vmatprep.subr.mxu0 0.0
    %1780 = vmatpush1.msra.mxu0 0.0
    %1781 = vmatprep.subr.mxu0 0.0
    %1782 = vmatpush1.msra.mxu0 0.0
    %1783 = vmatprep.subr.mxu0 0.0
    %1784 = vmatpush1.msra.mxu0 0.0
    %1785 = vmatprep.subr.mxu0 0.0
    %1786 = vmatpush1.msra.mxu0 0.0
    %1787 = vmatprep.subr.mxu0 0.0
    %1788 = vmatpush1.msra.mxu0 0.0
    %1789 = vmatprep.subr.mxu0 0.0
    %1790 = vmatpush1.msra.mxu0 0.0
    %1791 = vmatprep.subr.mxu0 0.0
    %1792 = vmatpush1.msra.mxu0 0.0
    %1793 = vmatprep.subr.mxu0 0.0
    %1794 = vmatpush1.msra.mxu0 0.0
    %1795 = vmatprep.subr.mxu0 0.0
    %1796 = vmatpush1.msra.mxu0 0.0
    %1797 = vmatprep.subr.mxu0 0.0
    %1798 = vmatpush1.msra.mxu0 0.0
    %1799 = vmatprep.subr.mxu0 0.0
    %1800 = vmatpush1.msra.mxu0 0.0
    %1801 = vmatprep.subr.mxu0 0.0
    %1802 = vmatpush1.msra.mxu0 0.0
    %1803 = vmatprep.mubr.f32.mxu0 0.0
    %1804 = vmatmul.mubr.f32.gmra.mrb[0].mxu0 %v1596
    %v1805 = vpop.f32.mrb[0].mxu0
    %v1806 = vadd.f32 %v1664, %v1805
    %v1807 = vpop.f32.mrb[0].mxu0
    %1808 = vdwg.mxu0
    %v1809 = vadd.f32 %v1600, %v1735
    %v1810 = vxor.u32 %v1809, 2147483648
    %v1811 = vmul.f32 %v1810, 1.442695
    %v1812 = vpow.pop %v1811
    %v1813 = vadd.f32 %v1812, 1.0
    %v1814 = vrcp.pop %v1813
    %v1815 = vmul.f32 1.0, %v1814
    %v1816 = vadd.f32 %v1601, %v1737
    %v1817 = vxor.u32 %v1816, 2147483648
    %v1818 = vmul.f32 %v1817, 1.442695
    %v1819 = vpow.pop %v1818
    %v1820 = vadd.f32 %v1819, 1.0
    %v1821 = vrcp.pop %v1820
    %v1822 = vmul.f32 1.0, %v1821
    %v1823 = vmul.f32 %v1815, %v1806
    %v1824 = vadd.f32 %v1602, %v1823
    %v1825 = vtanh.pop %v1824
    %v1826 = vsub.f32 1.0, %v1822
    %v1827 = vmul.f32 %v1826, %v1825
    %v1828 = vmul.f32 %v1822, %v1596
    %v1829 = vadd.f32 %v1827, %v1828
    %s1830 = scalar_lea.vmem [#allocation3], 40
    %1831 = vst [vmem:[%s1830] sm:$0xff] %v1829
    %s1832 = scalar_lea.vmem [#allocation2], 144
    %v1833 = vld [vmem:[%s1832] sm:$0xff]
    %v1834 = vld [vmem:[%s1832 + $0x8] sm:$0xff]
    %v1835 = vld [vmem:[%s1832 + $0x10] sm:$0xff]
    %v1836 = vld [vmem:[#allocation9] sm:$0xff]
    %v1837 = vld [vmem:[#allocation9 + $0x8] sm:$0xff]
    %v1838 = vld [vmem:[#allocation9 + $0x10] sm:$0xff]
    %v1839 = vld [vmem:[#allocation9 + $0x18] sm:$0xff]
    %v1840 = vld [vmem:[#allocation9 + $0x20] sm:$0xff]
    %v1841 = vld [vmem:[#allocation9 + $0x28] sm:$0xff]
    %v1842 = vld [vmem:[#allocation9 + $0x30] sm:$0xff]
    %v1843 = vld [vmem:[#allocation9 + $0x38] sm:$0xff]
    %v1844 = vld [vmem:[#allocation9 + $0x40] sm:$0xff]
    %v1845 = vld [vmem:[#allocation9 + $0x48] sm:$0xff]
    %v1846 = vld [vmem:[#allocation9 + $0x50] sm:$0xff]
    %v1847 = vld [vmem:[#allocation9 + $0x58] sm:$0xff]
    %v1848 = vld [vmem:[#allocation9 + $0x60] sm:$0xff]
    %v1849 = vld [vmem:[#allocation9 + $0x68] sm:$0xff]
    %v1850 = vld [vmem:[#allocation9 + $0x70] sm:$0xff]
    %v1851 = vld [vmem:[#allocation9 + $0x78] sm:$0xff]
    %v1852 = vld [vmem:[#allocation9 + $0x80] sm:$0xff]
    %v1853 = vld [vmem:[#allocation9 + $0x88] sm:$0xff]
    %v1854 = vld [vmem:[#allocation9 + $0x90] sm:$0xff]
    %v1855 = vld [vmem:[#allocation9 + $0x98] sm:$0xff]
    %v1856 = vld [vmem:[#allocation9 + $0xa0] sm:$0xff]
    %v1857 = vld [vmem:[#allocation9 + $0xa8] sm:$0xff]
    %v1858 = vld [vmem:[#allocation9 + $0xb0] sm:$0xff]
    %v1859 = vld [vmem:[#allocation9 + $0xb8] sm:$0xff]
    %v1860 = vld [vmem:[#allocation9 + $0xc0] sm:$0xff]
    %v1861 = vld [vmem:[#allocation9 + $0xc8] sm:$0xff]
    %v1862 = vld [vmem:[#allocation9 + $0xd0] sm:$0xff]
    %v1863 = vld [vmem:[#allocation9 + $0xd8] sm:$0xff]
    %v1864 = vld [vmem:[#allocation9 + $0xe0] sm:$0xff]
    %v1865 = vld [vmem:[#allocation9 + $0xe8] sm:$0xff]
    %v1866 = vld [vmem:[#allocation9 + $0xf0] sm:$0xff]
    %v1867 = vld [vmem:[#allocation9 + $0xf8] sm:$0xff]
    %v1868 = vld [vmem:[#allocation9 + $0x100] sm:$0xff]
    %v1869 = vld [vmem:[#allocation9 + $0x108] sm:$0xff]
    %v1870 = vld [vmem:[#allocation9 + $0x110] sm:$0xff]
    %v1871 = vld [vmem:[#allocation9 + $0x118] sm:$0xff]
    %v1872 = vld [vmem:[#allocation9 + $0x120] sm:$0xff]
    %v1873 = vld [vmem:[#allocation9 + $0x128] sm:$0xff]
    %v1874 = vld [vmem:[#allocation9 + $0x130] sm:$0xff]
    %v1875 = vld [vmem:[#allocation9 + $0x138] sm:$0xff]
    %v1876 = vld [vmem:[#allocation9 + $0x140] sm:$0xff]
    %v1877 = vld [vmem:[#allocation9 + $0x148] sm:$0xff]
    %v1878 = vld [vmem:[#allocation9 + $0x150] sm:$0xff]
    %v1879 = vld [vmem:[#allocation9 + $0x158] sm:$0xff]
    %v1880 = vld [vmem:[#allocation9 + $0x160] sm:$0xff]
    %v1881 = vld [vmem:[#allocation9 + $0x168] sm:$0xff]
    %v1882 = vld [vmem:[#allocation9 + $0x170] sm:$0xff]
    %v1883 = vld [vmem:[#allocation9 + $0x178] sm:$0xff]
    %v1884 = vld [vmem:[%s4] sm:$0x7]
    %v1886 = vlaneseq
    %v1887 = vshrl.u32 %v1886, 7
    %v1888 = vsub.s32 0, %v1887
    %v1889 = vrot.slane %v1884, %v1888
    %v1890 = vlaneseq
    %v1891 = vshrl.u32 %v1890, 7
    %v1892 = vsub.s32 1, %v1891
    %v1893 = vrot.slane %v1884, %v1892
    %v1894 = vlaneseq
    %v1895 = vshrl.u32 %v1894, 7
    %v1896 = vsub.s32 2, %v1895
    %v1897 = vrot.slane %v1884, %v1896
    %1901 = vmatprep.subr.mxu0 %v1837
    %1902 = vmatpush1.msra.mxu0 %v1836
    %1903 = vmatprep.subr.mxu0 %v1840
    %1904 = vmatpush1.msra.mxu0 %v1839
    %1905 = vmatprep.subr.mxu0 %v1843
    %1906 = vmatpush1.msra.mxu0 %v1842
    %1907 = vmatprep.subr.mxu0 %v1846
    %1908 = vmatpush1.msra.mxu0 %v1845
    %1909 = vmatprep.subr.mxu0 %v1849
    %1910 = vmatpush1.msra.mxu0 %v1848
    %1911 = vmatprep.subr.mxu0 %v1852
    %1912 = vmatpush1.msra.mxu0 %v1851
    %1913 = vmatprep.subr.mxu0 %v1855
    %1914 = vmatpush1.msra.mxu0 %v1854
    %1915 = vmatprep.subr.mxu0 %v1858
    %1916 = vmatpush1.msra.mxu0 %v1857
    %1917 = vmatprep.subr.mxu0 %v1861
    %1918 = vmatpush1.msra.mxu0 %v1860
    %1919 = vmatprep.subr.mxu0 %v1864
    %1920 = vmatpush1.msra.mxu0 %v1863
    %1921 = vmatprep.subr.mxu0 %v1867
    %1922 = vmatpush1.msra.mxu0 %v1866
    %1923 = vmatprep.subr.mxu0 %v1870
    %1924 = vmatpush1.msra.mxu0 %v1869
    %1925 = vmatprep.subr.mxu0 %v1873
    %1926 = vmatpush1.msra.mxu0 %v1872
    %1927 = vmatprep.subr.mxu0 %v1876
    %1928 = vmatpush1.msra.mxu0 %v1875
    %1929 = vmatprep.subr.mxu0 %v1879
    %1930 = vmatpush1.msra.mxu0 %v1878
    %1931 = vmatprep.subr.mxu0 %v1882
    %1932 = vmatpush1.msra.mxu0 %v1881
    %1933 = vmatprep.subr.mxu0 0.0
    %1934 = vmatpush1.msra.mxu0 0.0
    %1935 = vmatprep.subr.mxu0 0.0
    %1936 = vmatpush1.msra.mxu0 0.0
    %1937 = vmatprep.subr.mxu0 0.0
    %1938 = vmatpush1.msra.mxu0 0.0
    %1939 = vmatprep.subr.mxu0 0.0
    %1940 = vmatpush1.msra.mxu0 0.0
    %1941 = vmatprep.subr.mxu0 0.0
    %1942 = vmatpush1.msra.mxu0 0.0
    %1943 = vmatprep.subr.mxu0 0.0
    %1944 = vmatpush1.msra.mxu0 0.0
    %1945 = vmatprep.subr.mxu0 0.0
    %1946 = vmatpush1.msra.mxu0 0.0
    %1947 = vmatprep.subr.mxu0 0.0
    %1948 = vmatpush1.msra.mxu0 0.0
    %1949 = vmatprep.subr.mxu0 0.0
    %1950 = vmatpush1.msra.mxu0 0.0
    %1951 = vmatprep.subr.mxu0 0.0
    %1952 = vmatpush1.msra.mxu0 0.0
    %1953 = vmatprep.subr.mxu0 0.0
    %1954 = vmatpush1.msra.mxu0 0.0
    %1955 = vmatprep.subr.mxu0 0.0
    %1956 = vmatpush1.msra.mxu0 0.0
    %1957 = vmatprep.subr.mxu0 0.0
    %1958 = vmatpush1.msra.mxu0 0.0
    %1959 = vmatprep.subr.mxu0 0.0
    %1960 = vmatpush1.msra.mxu0 0.0
    %1961 = vmatprep.subr.mxu0 0.0
    %1962 = vmatpush1.msra.mxu0 0.0
    %1963 = vmatprep.subr.mxu0 0.0
    %1964 = vmatpush1.msra.mxu0 0.0
    %1965 = vmatprep.mubr.f32.mxu0 0.0
    %1966 = vmatmul.mubr.f32.gmra.mrb[0].mxu0 %v1829
    %v1967 = vpop.f32.mrb[0].mxu0
    %v1968 = vadd.f32 %v1889, %v1967
    %v1969 = vpop.f32.mrb[0].mxu0
    %v1970 = vadd.f32 %v1893, %v1969
    %1971 = vdwg.mxu0
    %1972 = vmatprep.subr.mxu0 0.0
    %1973 = vmatpush1.msra.mxu0 %v1838
    %1974 = vmatprep.subr.mxu0 0.0
    %1975 = vmatpush1.msra.mxu0 %v1841
    %1976 = vmatprep.subr.mxu0 0.0
    %1977 = vmatpush1.msra.mxu0 %v1844
    %1978 = vmatprep.subr.mxu0 0.0
    %1979 = vmatpush1.msra.mxu0 %v1847
    %1980 = vmatprep.subr.mxu0 0.0
    %1981 = vmatpush1.msra.mxu0 %v1850
    %1982 = vmatprep.subr.mxu0 0.0
    %1983 = vmatpush1.msra.mxu0 %v1853
    %1984 = vmatprep.subr.mxu0 0.0
    %1985 = vmatpush1.msra.mxu0 %v1856
    %1986 = vmatprep.subr.mxu0 0.0
    %1987 = vmatpush1.msra.mxu0 %v1859
    %1988 = vmatprep.subr.mxu0 0.0
    %1989 = vmatpush1.msra.mxu0 %v1862
    %1990 = vmatprep.subr.mxu0 0.0
    %1991 = vmatpush1.msra.mxu0 %v1865
    %1992 = vmatprep.subr.mxu0 0.0
    %1993 = vmatpush1.msra.mxu0 %v1868
    %1994 = vmatprep.subr.mxu0 0.0
    %1995 = vmatpush1.msra.mxu0 %v1871
    %1996 = vmatprep.subr.mxu0 0.0
    %1997 = vmatpush1.msra.mxu0 %v1874
    %1998 = vmatprep.subr.mxu0 0.0
    %1999 = vmatpush1.msra.mxu0 %v1877
    %2000 = vmatprep.subr.mxu0 0.0
    %2001 = vmatpush1.msra.mxu0 %v1880
    %2002 = vmatprep.subr.mxu0 0.0
    %2003 = vmatpush1.msra.mxu0 %v1883
    %2004 = vmatprep.subr.mxu0 0.0
    %2005 = vmatpush1.msra.mxu0 0.0
    %2006 = vmatprep.subr.mxu0 0.0
    %2007 = vmatpush1.msra.mxu0 0.0
    %2008 = vmatprep.subr.mxu0 0.0
    %2009 = vmatpush1.msra.mxu0 0.0
    %2010 = vmatprep.subr.mxu0 0.0
    %2011 = vmatpush1.msra.mxu0 0.0
    %2012 = vmatprep.subr.mxu0 0.0
    %2013 = vmatpush1.msra.mxu0 0.0
    %2014 = vmatprep.subr.mxu0 0.0
    %2015 = vmatpush1.msra.mxu0 0.0
    %2016 = vmatprep.subr.mxu0 0.0
    %2017 = vmatpush1.msra.mxu0 0.0
    %2018 = vmatprep.subr.mxu0 0.0
    %2019 = vmatpush1.msra.mxu0 0.0
    %2020 = vmatprep.subr.mxu0 0.0
    %2021 = vmatpush1.msra.mxu0 0.0
    %2022 = vmatprep.subr.mxu0 0.0
    %2023 = vmatpush1.msra.mxu0 0.0
    %2024 = vmatprep.subr.mxu0 0.0
    %2025 = vmatpush1.msra.mxu0 0.0
    %2026 = vmatprep.subr.mxu0 0.0
    %2027 = vmatpush1.msra.mxu0 0.0
    %2028 = vmatprep.subr.mxu0 0.0
    %2029 = vmatpush1.msra.mxu0 0.0
    %2030 = vmatprep.subr.mxu0 0.0
    %2031 = vmatpush1.msra.mxu0 0.0
    %2032 = vmatprep.subr.mxu0 0.0
    %2033 = vmatpush1.msra.mxu0 0.0
    %2034 = vmatprep.subr.mxu0 0.0
    %2035 = vmatpush1.msra.mxu0 0.0
    %2036 = vmatprep.mubr.f32.mxu0 0.0
    %2037 = vmatmul.mubr.f32.gmra.mrb[0].mxu0 %v1829
    %v2038 = vpop.f32.mrb[0].mxu0
    %v2039 = vadd.f32 %v1897, %v2038
    %v2040 = vpop.f32.mrb[0].mxu0
    %2041 = vdwg.mxu0
    %v2042 = vadd.f32 %v1833, %v1968
    %v2043 = vxor.u32 %v2042, 2147483648
    %v2044 = vmul.f32 %v2043, 1.442695
    %v2045 = vpow.pop %v2044
    %v2046 = vadd.f32 %v2045, 1.0
    %v2047 = vrcp.pop %v2046
    %v2048 = vmul.f32 1.0, %v2047
    %v2049 = vadd.f32 %v1834, %v1970
    %v2050 = vxor.u32 %v2049, 2147483648
    %v2051 = vmul.f32 %v2050, 1.442695
    %v2052 = vpow.pop %v2051
    %v2053 = vadd.f32 %v2052, 1.0
    %v2054 = vrcp.pop %v2053
    %v2055 = vmul.f32 1.0, %v2054
    %v2056 = vmul.f32 %v2048, %v2039
    %v2057 = vadd.f32 %v1835, %v2056
    %v2058 = vtanh.pop %v2057
    %v2059 = vsub.f32 1.0, %v2055
    %v2060 = vmul.f32 %v2059, %v2058
    %v2061 = vmul.f32 %v2055, %v1829
    %v2062 = vadd.f32 %v2060, %v2061
    %s2063 = scalar_lea.vmem [#allocation3], 48
    %2064 = vst [vmem:[%s2063] sm:$0xff] %v2062
    %s2065 = scalar_lea.vmem [#allocation2], 168
    %v2066 = vld [vmem:[%s2065] sm:$0xff]
    %v2067 = vld [vmem:[%s2065 + $0x8] sm:$0xff]
    %v2068 = vld [vmem:[%s2065 + $0x10] sm:$0xff]
    %v2069 = vld [vmem:[#allocation9] sm:$0xff]
    %v2070 = vld [vmem:[#allocation9 + $0x8] sm:$0xff]
    %v2071 = vld [vmem:[#allocation9 + $0x10] sm:$0xff]
    %v2072 = vld [vmem:[#allocation9 + $0x18] sm:$0xff]
    %v2073 = vld [vmem:[#allocation9 + $0x20] sm:$0xff]
    %v2074 = vld [vmem:[#allocation9 + $0x28] sm:$0xff]
    %v2075 = vld [vmem:[#allocation9 + $0x30] sm:$0xff]
    %v2076 = vld [vmem:[#allocation9 + $0x38] sm:$0xff]
    %v2077 = vld [vmem:[#allocation9 + $0x40] sm:$0xff]
    %v2078 = vld [vmem:[#allocation9 + $0x48] sm:$0xff]
    %v2079 = vld [vmem:[#allocation9 + $0x50] sm:$0xff]
    %v2080 = vld [vmem:[#allocation9 + $0x58] sm:$0xff]
    %v2081 = vld [vmem:[#allocation9 + $0x60] sm:$0xff]
    %v2082 = vld [vmem:[#allocation9 + $0x68] sm:$0xff]
    %v2083 = vld [vmem:[#allocation9 + $0x70] sm:$0xff]
    %v2084 = vld [vmem:[#allocation9 + $0x78] sm:$0xff]
    %v2085 = vld [vmem:[#allocation9 + $0x80] sm:$0xff]
    %v2086 = vld [vmem:[#allocation9 + $0x88] sm:$0xff]
    %v2087 = vld [vmem:[#allocation9 + $0x90] sm:$0xff]
    %v2088 = vld [vmem:[#allocation9 + $0x98] sm:$0xff]
    %v2089 = vld [vmem:[#allocation9 + $0xa0] sm:$0xff]
    %v2090 = vld [vmem:[#allocation9 + $0xa8] sm:$0xff]
    %v2091 = vld [vmem:[#allocation9 + $0xb0] sm:$0xff]
    %v2092 = vld [vmem:[#allocation9 + $0xb8] sm:$0xff]
    %v2093 = vld [vmem:[#allocation9 + $0xc0] sm:$0xff]
    %v2094 = vld [vmem:[#allocation9 + $0xc8] sm:$0xff]
    %v2095 = vld [vmem:[#allocation9 + $0xd0] sm:$0xff]
    %v2096 = vld [vmem:[#allocation9 + $0xd8] sm:$0xff]
    %v2097 = vld [vmem:[#allocation9 + $0xe0] sm:$0xff]
    %v2098 = vld [vmem:[#allocation9 + $0xe8] sm:$0xff]
    %v2099 = vld [vmem:[#allocation9 + $0xf0] sm:$0xff]
    %v2100 = vld [vmem:[#allocation9 + $0xf8] sm:$0xff]
    %v2101 = vld [vmem:[#allocation9 + $0x100] sm:$0xff]
    %v2102 = vld [vmem:[#allocation9 + $0x108] sm:$0xff]
    %v2103 = vld [vmem:[#allocation9 + $0x110] sm:$0xff]
    %v2104 = vld [vmem:[#allocation9 + $0x118] sm:$0xff]
    %v2105 = vld [vmem:[#allocation9 + $0x120] sm:$0xff]
    %v2106 = vld [vmem:[#allocation9 + $0x128] sm:$0xff]
    %v2107 = vld [vmem:[#allocation9 + $0x130] sm:$0xff]
    %v2108 = vld [vmem:[#allocation9 + $0x138] sm:$0xff]
    %v2109 = vld [vmem:[#allocation9 + $0x140] sm:$0xff]
    %v2110 = vld [vmem:[#allocation9 + $0x148] sm:$0xff]
    %v2111 = vld [vmem:[#allocation9 + $0x150] sm:$0xff]
    %v2112 = vld [vmem:[#allocation9 + $0x158] sm:$0xff]
    %v2113 = vld [vmem:[#allocation9 + $0x160] sm:$0xff]
    %v2114 = vld [vmem:[#allocation9 + $0x168] sm:$0xff]
    %v2115 = vld [vmem:[#allocation9 + $0x170] sm:$0xff]
    %v2116 = vld [vmem:[#allocation9 + $0x178] sm:$0xff]
    %v2117 = vld [vmem:[%s4] sm:$0x7]
    %v2119 = vlaneseq
    %v2120 = vshrl.u32 %v2119, 7
    %v2121 = vsub.s32 0, %v2120
    %v2122 = vrot.slane %v2117, %v2121
    %v2123 = vlaneseq
    %v2124 = vshrl.u32 %v2123, 7
    %v2125 = vsub.s32 1, %v2124
    %v2126 = vrot.slane %v2117, %v2125
    %v2127 = vlaneseq
    %v2128 = vshrl.u32 %v2127, 7
    %v2129 = vsub.s32 2, %v2128
    %v2130 = vrot.slane %v2117, %v2129
    %2134 = vmatprep.subr.mxu0 %v2070
    %2135 = vmatpush1.msra.mxu0 %v2069
    %2136 = vmatprep.subr.mxu0 %v2073
    %2137 = vmatpush1.msra.mxu0 %v2072
    %2138 = vmatprep.subr.mxu0 %v2076
    %2139 = vmatpush1.msra.mxu0 %v2075
    %2140 = vmatprep.subr.mxu0 %v2079
    %2141 = vmatpush1.msra.mxu0 %v2078
    %2142 = vmatprep.subr.mxu0 %v2082
    %2143 = vmatpush1.msra.mxu0 %v2081
    %2144 = vmatprep.subr.mxu0 %v2085
    %2145 = vmatpush1.msra.mxu0 %v2084
    %2146 = vmatprep.subr.mxu0 %v2088
    %2147 = vmatpush1.msra.mxu0 %v2087
    %2148 = vmatprep.subr.mxu0 %v2091
    %2149 = vmatpush1.msra.mxu0 %v2090
    %2150 = vmatprep.subr.mxu0 %v2094
    %2151 = vmatpush1.msra.mxu0 %v2093
    %2152 = vmatprep.subr.mxu0 %v2097
    %2153 = vmatpush1.msra.mxu0 %v2096
    %2154 = vmatprep.subr.mxu0 %v2100
    %2155 = vmatpush1.msra.mxu0 %v2099
    %2156 = vmatprep.subr.mxu0 %v2103
    %2157 = vmatpush1.msra.mxu0 %v2102
    %2158 = vmatprep.subr.mxu0 %v2106
    %2159 = vmatpush1.msra.mxu0 %v2105
    %2160 = vmatprep.subr.mxu0 %v2109
    %2161 = vmatpush1.msra.mxu0 %v2108
    %2162 = vmatprep.subr.mxu0 %v2112
    %2163 = vmatpush1.msra.mxu0 %v2111
    %2164 = vmatprep.subr.mxu0 %v2115
    %2165 = vmatpush1.msra.mxu0 %v2114
    %2166 = vmatprep.subr.mxu0 0.0
    %2167 = vmatpush1.msra.mxu0 0.0
    %2168 = vmatprep.subr.mxu0 0.0
    %2169 = vmatpush1.msra.mxu0 0.0
    %2170 = vmatprep.subr.mxu0 0.0
    %2171 = vmatpush1.msra.mxu0 0.0
    %2172 = vmatprep.subr.mxu0 0.0
    %2173 = vmatpush1.msra.mxu0 0.0
    %2174 = vmatprep.subr.mxu0 0.0
    %2175 = vmatpush1.msra.mxu0 0.0
    %2176 = vmatprep.subr.mxu0 0.0
    %2177 = vmatpush1.msra.mxu0 0.0
    %2178 = vmatprep.subr.mxu0 0.0
    %2179 = vmatpush1.msra.mxu0 0.0
    %2180 = vmatprep.subr.mxu0 0.0
    %2181 = vmatpush1.msra.mxu0 0.0
    %2182 = vmatprep.subr.mxu0 0.0
    %2183 = vmatpush1.msra.mxu0 0.0
    %2184 = vmatprep.subr.mxu0 0.0
    %2185 = vmatpush1.msra.mxu0 0.0
    %2186 = vmatprep.subr.mxu0 0.0
    %2187 = vmatpush1.msra.mxu0 0.0
    %2188 = vmatprep.subr.mxu0 0.0
    %2189 = vmatpush1.msra.mxu0 0.0
    %2190 = vmatprep.subr.mxu0 0.0
    %2191 = vmatpush1.msra.mxu0 0.0
    %2192 = vmatprep.subr.mxu0 0.0
    %2193 = vmatpush1.msra.mxu0 0.0
    %2194 = vmatprep.subr.mxu0 0.0
    %2195 = vmatpush1.msra.mxu0 0.0
    %2196 = vmatprep.subr.mxu0 0.0
    %2197 = vmatpush1.msra.mxu0 0.0
    %2198 = vmatprep.mubr.f32.mxu0 0.0
    %2199 = vmatmul.mubr.f32.gmra.mrb[0].mxu0 %v2062
    %v2200 = vpop.f32.mrb[0].mxu0
    %v2201 = vadd.f32 %v2122, %v2200
    %v2202 = vpop.f32.mrb[0].mxu0
    %v2203 = vadd.f32 %v2126, %v2202
    %2204 = vdwg.mxu0
    %2205 = vmatprep.subr.mxu0 0.0
    %2206 = vmatpush1.msra.mxu0 %v2071
    %2207 = vmatprep.subr.mxu0 0.0
    %2208 = vmatpush1.msra.mxu0 %v2074
    %2209 = vmatprep.subr.mxu0 0.0
    %2210 = vmatpush1.msra.mxu0 %v2077
    %2211 = vmatprep.subr.mxu0 0.0
    %2212 = vmatpush1.msra.mxu0 %v2080
    %2213 = vmatprep.subr.mxu0 0.0
    %2214 = vmatpush1.msra.mxu0 %v2083
    %2215 = vmatprep.subr.mxu0 0.0
    %2216 = vmatpush1.msra.mxu0 %v2086
    %2217 = vmatprep.subr.mxu0 0.0
    %2218 = vmatpush1.msra.mxu0 %v2089
    %2219 = vmatprep.subr.mxu0 0.0
    %2220 = vmatpush1.msra.mxu0 %v2092
    %2221 = vmatprep.subr.mxu0 0.0
    %2222 = vmatpush1.msra.mxu0 %v2095
    %2223 = vmatprep.subr.mxu0 0.0
    %2224 = vmatpush1.msra.mxu0 %v2098
    %2225 = vmatprep.subr.mxu0 0.0
    %2226 = vmatpush1.msra.mxu0 %v2101
    %2227 = vmatprep.subr.mxu0 0.0
    %2228 = vmatpush1.msra.mxu0 %v2104
    %2229 = vmatprep.subr.mxu0 0.0
    %2230 = vmatpush1.msra.mxu0 %v2107
    %2231 = vmatprep.subr.mxu0 0.0
    %2232 = vmatpush1.msra.mxu0 %v2110
    %2233 = vmatprep.subr.mxu0 0.0
    %2234 = vmatpush1.msra.mxu0 %v2113
    %2235 = vmatprep.subr.mxu0 0.0
    %2236 = vmatpush1.msra.mxu0 %v2116
    %2237 = vmatprep.subr.mxu0 0.0
    %2238 = vmatpush1.msra.mxu0 0.0
    %2239 = vmatprep.subr.mxu0 0.0
    %2240 = vmatpush1.msra.mxu0 0.0
    %2241 = vmatprep.subr.mxu0 0.0
    %2242 = vmatpush1.msra.mxu0 0.0
    %2243 = vmatprep.subr.mxu0 0.0
    %2244 = vmatpush1.msra.mxu0 0.0
    %2245 = vmatprep.subr.mxu0 0.0
    %2246 = vmatpush1.msra.mxu0 0.0
    %2247 = vmatprep.subr.mxu0 0.0
    %2248 = vmatpush1.msra.mxu0 0.0
    %2249 = vmatprep.subr.mxu0 0.0
    %2250 = vmatpush1.msra.mxu0 0.0
    %2251 = vmatprep.subr.mxu0 0.0
    %2252 = vmatpush1.msra.mxu0 0.0
    %2253 = vmatprep.subr.mxu0 0.0
    %2254 = vmatpush1.msra.mxu0 0.0
    %2255 = vmatprep.subr.mxu0 0.0
    %2256 = vmatpush1.msra.mxu0 0.0
    %2257 = vmatprep.subr.mxu0 0.0
    %2258 = vmatpush1.msra.mxu0 0.0
    %2259 = vmatprep.subr.mxu0 0.0
    %2260 = vmatpush1.msra.mxu0 0.0
    %2261 = vmatprep.subr.mxu0 0.0
    %2262 = vmatpush1.msra.mxu0 0.0
    %2263 = vmatprep.subr.mxu0 0.0
    %2264 = vmatpush1.msra.mxu0 0.0
    %2265 = vmatprep.subr.mxu0 0.0
    %2266 = vmatpush1.msra.mxu0 0.0
    %2267 = vmatprep.subr.mxu0 0.0
    %2268 = vmatpush1.msra.mxu0 0.0
    %2269 = vmatprep.mubr.f32.mxu0 0.0
    %2270 = vmatmul.mubr.f32.gmra.mrb[0].mxu0 %v2062
    %v2271 = vpop.f32.mrb[0].mxu0
    %v2272 = vadd.f32 %v2130, %v2271
    %v2273 = vpop.f32.mrb[0].mxu0
    %2274 = vdwg.mxu0
    %v2275 = vadd.f32 %v2066, %v2201
    %v2276 = vxor.u32 %v2275, 2147483648
    %v2277 = vmul.f32 %v2276, 1.442695
    %v2278 = vpow.pop %v2277
    %v2279 = vadd.f32 %v2278, 1.0
    %v2280 = vrcp.pop %v2279
    %v2281 = vmul.f32 1.0, %v2280
    %v2282 = vadd.f32 %v2067, %v2203
    %v2283 = vxor.u32 %v2282, 2147483648
    %v2284 = vmul.f32 %v2283, 1.442695
    %v2285 = vpow.pop %v2284
    %v2286 = vadd.f32 %v2285, 1.0
    %v2287 = vrcp.pop %v2286
    %v2288 = vmul.f32 1.0, %v2287
    %v2289 = vmul.f32 %v2281, %v2272
    %v2290 = vadd.f32 %v2068, %v2289
    %v2291 = vtanh.pop %v2290
    %v2292 = vsub.f32 1.0, %v2288
    %v2293 = vmul.f32 %v2292, %v2291
    %v2294 = vmul.f32 %v2288, %v2062
    %v2295 = vadd.f32 %v2293, %v2294
    %s2296 = scalar_lea.vmem [#allocation3], 56
    %2297 = vst [vmem:[%s2296] sm:$0xff] %v2295
    %v2298 = vld [vmem:[#allocation3] sm:$0xff]
    %v2299 = vld [vmem:[#allocation3 + $0x8] sm:$0xff]
    %v2300 = vld [vmem:[#allocation3 + $0x10] sm:$0xff]
    %v2301 = vld [vmem:[#allocation3 + $0x18] sm:$0xff]
    %v2302 = vld [vmem:[#allocation3 + $0x20] sm:$0xff]
    %v2303 = vld [vmem:[#allocation3 + $0x28] sm:$0xff]
    %v2304 = vld [vmem:[#allocation3 + $0x30] sm:$0xff]
    %v2305 = vld [vmem:[#allocation3 + $0x38] sm:$0xff]
    %v2306 = vld [vmem:[#allocation10] sm:$0xff]
    %v2307 = vld [vmem:[#allocation10 + $0x8] sm:$0xff]
    %v2308 = vld [vmem:[#allocation10 + $0x10] sm:$0xff]
    %v2309 = vld [vmem:[#allocation10 + $0x18] sm:$0xff]
    %v2310 = vld [vmem:[#allocation10 + $0x20] sm:$0xff]
    %v2311 = vld [vmem:[#allocation10 + $0x28] sm:$0xff]
    %v2312 = vld [vmem:[#allocation10 + $0x30] sm:$0xff]
    %v2313 = vld [vmem:[#allocation10 + $0x38] sm:$0xff]
    %v2314 = vld [vmem:[#allocation10 + $0x40] sm:$0xff]
    %v2315 = vld [vmem:[#allocation10 + $0x48] sm:$0xff]
    %v2316 = vld [vmem:[#allocation10 + $0x50] sm:$0xff]
    %v2317 = vld [vmem:[#allocation10 + $0x58] sm:$0xff]
    %v2318 = vld [vmem:[#allocation10 + $0x60] sm:$0xff]
    %v2319 = vld [vmem:[#allocation10 + $0x68] sm:$0xff]
    %v2320 = vld [vmem:[#allocation10 + $0x70] sm:$0xff]
    %v2321 = vld [vmem:[#allocation10 + $0x78] sm:$0xff]
    %v2322 = vld [vmem:[#allocation10 + $0x80] sm:$0xff]
    %v2323 = vld [vmem:[#allocation10 + $0x88] sm:$0xff]
    %v2324 = vld [vmem:[#allocation10 + $0x90] sm:$0xff]
    %v2325 = vld [vmem:[#allocation10 + $0x98] sm:$0xff]
    %v2326 = vld [vmem:[#allocation10 + $0xa0] sm:$0xff]
    %v2327 = vld [vmem:[#allocation10 + $0xa8] sm:$0xff]
    %v2328 = vld [vmem:[#allocation10 + $0xb0] sm:$0xff]
    %v2329 = vld [vmem:[#allocation10 + $0xb8] sm:$0xff]
    %v2330 = vld [vmem:[#allocation10 + $0xc0] sm:$0xff]
    %v2331 = vld [vmem:[#allocation10 + $0xc8] sm:$0xff]
    %v2332 = vld [vmem:[#allocation10 + $0xd0] sm:$0xff]
    %v2333 = vld [vmem:[#allocation10 + $0xd8] sm:$0xff]
    %v2334 = vld [vmem:[#allocation10 + $0xe0] sm:$0xff]
    %v2335 = vld [vmem:[#allocation10 + $0xe8] sm:$0xff]
    %v2336 = vld [vmem:[#allocation10 + $0xf0] sm:$0xff]
    %v2337 = vld [vmem:[#allocation10 + $0xf8] sm:$0xff]
    %v2338 = vld [vmem:[#allocation10 + $0x100] sm:$0xff]
    %v2339 = vld [vmem:[#allocation10 + $0x108] sm:$0xff]
    %v2340 = vld [vmem:[#allocation10 + $0x110] sm:$0xff]
    %v2341 = vld [vmem:[#allocation10 + $0x118] sm:$0xff]
    %v2342 = vld [vmem:[#allocation10 + $0x120] sm:$0xff]
    %v2343 = vld [vmem:[#allocation10 + $0x128] sm:$0xff]
    %v2344 = vld [vmem:[#allocation10 + $0x130] sm:$0xff]
    %v2345 = vld [vmem:[#allocation10 + $0x138] sm:$0xff]
    %v2346 = vld [vmem:[#allocation10 + $0x140] sm:$0xff]
    %v2347 = vld [vmem:[#allocation10 + $0x148] sm:$0xff]
    %v2348 = vld [vmem:[#allocation10 + $0x150] sm:$0xff]
    %v2349 = vld [vmem:[#allocation10 + $0x158] sm:$0xff]
    %v2350 = vld [vmem:[#allocation10 + $0x160] sm:$0xff]
    %v2351 = vld [vmem:[#allocation10 + $0x168] sm:$0xff]
    %v2352 = vld [vmem:[#allocation10 + $0x170] sm:$0xff]
    %v2353 = vld [vmem:[#allocation10 + $0x178] sm:$0xff]
    %v2354 = vld [vmem:[%s7] sm:$0x7]
    %v2356 = vlaneseq
    %v2357 = vshrl.u32 %v2356, 7
    %v2358 = vsub.s32 0, %v2357
    %v2359 = vrot.slane %v2354, %v2358
    %v2360 = vlaneseq
    %v2361 = vshrl.u32 %v2360, 7
    %v2362 = vsub.s32 1, %v2361
    %v2363 = vrot.slane %v2354, %v2362
    %v2364 = vlaneseq
    %v2365 = vshrl.u32 %v2364, 7
    %v2366 = vsub.s32 2, %v2365
    %v2367 = vrot.slane %v2354, %v2366
    %2371 = vmatprep.subr.mxu0 %v2307
    %2372 = vmatpush1.msra.mxu0 %v2306
    %2373 = vmatprep.subr.mxu0 %v2310
    %2374 = vmatpush1.msra.mxu0 %v2309
    %2375 = vmatprep.subr.mxu0 %v2313
    %2376 = vmatpush1.msra.mxu0 %v2312
    %2377 = vmatprep.subr.mxu0 %v2316
    %2378 = vmatpush1.msra.mxu0 %v2315
    %2379 = vmatprep.subr.mxu0 %v2319
    %2380 = vmatpush1.msra.mxu0 %v2318
    %2381 = vmatprep.subr.mxu0 %v2322
    %2382 = vmatpush1.msra.mxu0 %v2321
    %2383 = vmatprep.subr.mxu0 %v2325
    %2384 = vmatpush1.msra.mxu0 %v2324
    %2385 = vmatprep.subr.mxu0 %v2328
    %2386 = vmatpush1.msra.mxu0 %v2327
    %2387 = vmatprep.subr.mxu0 %v2331
    %2388 = vmatpush1.msra.mxu0 %v2330
    %2389 = vmatprep.subr.mxu0 %v2334
    %2390 = vmatpush1.msra.mxu0 %v2333
    %2391 = vmatprep.subr.mxu0 %v2337
    %2392 = vmatpush1.msra.mxu0 %v2336
    %2393 = vmatprep.subr.mxu0 %v2340
    %2394 = vmatpush1.msra.mxu0 %v2339
    %2395 = vmatprep.subr.mxu0 %v2343
    %2396 = vmatpush1.msra.mxu0 %v2342
    %2397 = vmatprep.subr.mxu0 %v2346
    %2398 = vmatpush1.msra.mxu0 %v2345
    %2399 = vmatprep.subr.mxu0 %v2349
    %2400 = vmatpush1.msra.mxu0 %v2348
    %2401 = vmatprep.subr.mxu0 %v2352
    %2402 = vmatpush1.msra.mxu0 %v2351
    %2403 = vmatprep.subr.mxu0 0.0
    %2404 = vmatpush1.msra.mxu0 0.0
    %2405 = vmatprep.subr.mxu0 0.0
    %2406 = vmatpush1.msra.mxu0 0.0
    %2407 = vmatprep.subr.mxu0 0.0
    %2408 = vmatpush1.msra.mxu0 0.0
    %2409 = vmatprep.subr.mxu0 0.0
    %2410 = vmatpush1.msra.mxu0 0.0
    %2411 = vmatprep.subr.mxu0 0.0
    %2412 = vmatpush1.msra.mxu0 0.0
    %2413 = vmatprep.subr.mxu0 0.0
    %2414 = vmatpush1.msra.mxu0 0.0
    %2415 = vmatprep.subr.mxu0 0.0
    %2416 = vmatpush1.msra.mxu0 0.0
    %2417 = vmatprep.subr.mxu0 0.0
    %2418 = vmatpush1.msra.mxu0 0.0
    %2419 = vmatprep.subr.mxu0 0.0
    %2420 = vmatpush1.msra.mxu0 0.0
    %2421 = vmatprep.subr.mxu0 0.0
    %2422 = vmatpush1.msra.mxu0 0.0
    %2423 = vmatprep.subr.mxu0 0.0
    %2424 = vmatpush1.msra.mxu0 0.0
    %2425 = vmatprep.subr.mxu0 0.0
    %2426 = vmatpush1.msra.mxu0 0.0
    %2427 = vmatprep.subr.mxu0 0.0
    %2428 = vmatpush1.msra.mxu0 0.0
    %2429 = vmatprep.subr.mxu0 0.0
    %2430 = vmatpush1.msra.mxu0 0.0
    %2431 = vmatprep.subr.mxu0 0.0
    %2432 = vmatpush1.msra.mxu0 0.0
    %2433 = vmatprep.subr.mxu0 0.0
    %2434 = vmatpush1.msra.mxu0 0.0
    %2435 = vmatprep.mubr.f32.mxu0 0.0
    %2436 = vmatmul.mubr.f32.gmra.mrb[0].mxu0 %v2298
    %v2437 = vpop.f32.mrb[0].mxu0
    %v2438 = vadd.f32 %v2359, %v2437
    %v2439 = vpop.f32.mrb[0].mxu0
    %v2440 = vadd.f32 %v2363, %v2439
    %2441 = vmatprep.mubr.f32.mxu0 0.0
    %2442 = vmatmul.mubr.f32.gmra.mrb[0].mxu0 %v2299
    %v2443 = vpop.f32.mrb[0].mxu0
    %v2444 = vadd.f32 %v2359, %v2443
    %v2445 = vpop.f32.mrb[0].mxu0
    %v2446 = vadd.f32 %v2363, %v2445
    %2447 = vmatprep.mubr.f32.mxu0 0.0
    %2448 = vmatmul.mubr.f32.gmra.mrb[0].mxu0 %v2300
    %v2449 = vpop.f32.mrb[0].mxu0
    %v2450 = vadd.f32 %v2359, %v2449
    %v2451 = vpop.f32.mrb[0].mxu0
    %v2452 = vadd.f32 %v2363, %v2451
    %2453 = vmatprep.mubr.f32.mxu0 0.0
    %2454 = vmatmul.mubr.f32.gmra.mrb[0].mxu0 %v2301
    %v2455 = vpop.f32.mrb[0].mxu0
    %v2456 = vadd.f32 %v2359, %v2455
    %v2457 = vpop.f32.mrb[0].mxu0
    %v2458 = vadd.f32 %v2363, %v2457
    %2459 = vmatprep.mubr.f32.mxu0 0.0
    %2460 = vmatmul.mubr.f32.gmra.mrb[0].mxu0 %v2302
    %v2461 = vpop.f32.mrb[0].mxu0
    %v2462 = vadd.f32 %v2359, %v2461
    %v2463 = vpop.f32.mrb[0].mxu0
    %v2464 = vadd.f32 %v2363, %v2463
    %2465 = vmatprep.mubr.f32.mxu0 0.0
    %2466 = vmatmul.mubr.f32.gmra.mrb[0].mxu0 %v2303
    %v2467 = vpop.f32.mrb[0].mxu0
    %v2468 = vadd.f32 %v2359, %v2467
    %v2469 = vpop.f32.mrb[0].mxu0
    %v2470 = vadd.f32 %v2363, %v2469
    %2471 = vmatprep.mubr.f32.mxu0 0.0
    %2472 = vmatmul.mubr.f32.gmra.mrb[0].mxu0 %v2304
    %v2473 = vpop.f32.mrb[0].mxu0
    %v2474 = vadd.f32 %v2359, %v2473
    %v2475 = vpop.f32.mrb[0].mxu0
    %v2476 = vadd.f32 %v2363, %v2475
    %2477 = vmatprep.mubr.f32.mxu0 0.0
    %2478 = vmatmul.mubr.f32.gmra.mrb[0].mxu0 %v2305
    %v2479 = vpop.f32.mrb[0].mxu0
    %v2480 = vadd.f32 %v2359, %v2479
    %v2481 = vpop.f32.mrb[0].mxu0
    %v2482 = vadd.f32 %v2363, %v2481
    %2483 = vdwg.mxu0
    %2484 = vmatprep.subr.mxu0 0.0
    %2485 = vmatpush1.msra.mxu0 %v2308
    %2486 = vmatprep.subr.mxu0 0.0
    %2487 = vmatpush1.msra.mxu0 %v2311
    %2488 = vmatprep.subr.mxu0 0.0
    %2489 = vmatpush1.msra.mxu0 %v2314
    %2490 = vmatprep.subr.mxu0 0.0
    %2491 = vmatpush1.msra.mxu0 %v2317
    %2492 = vmatprep.subr.mxu0 0.0
    %2493 = vmatpush1.msra.mxu0 %v2320
    %2494 = vmatprep.subr.mxu0 0.0
    %2495 = vmatpush1.msra.mxu0 %v2323
    %2496 = vmatprep.subr.mxu0 0.0
    %2497 = vmatpush1.msra.mxu0 %v2326
    %2498 = vmatprep.subr.mxu0 0.0
    %2499 = vmatpush1.msra.mxu0 %v2329
    %2500 = vmatprep.subr.mxu0 0.0
    %2501 = vmatpush1.msra.mxu0 %v2332
    %2502 = vmatprep.subr.mxu0 0.0
    %2503 = vmatpush1.msra.mxu0 %v2335
    %2504 = vmatprep.subr.mxu0 0.0
    %2505 = vmatpush1.msra.mxu0 %v2338
    %2506 = vmatprep.subr.mxu0 0.0
    %2507 = vmatpush1.msra.mxu0 %v2341
    %2508 = vmatprep.subr.mxu0 0.0
    %2509 = vmatpush1.msra.mxu0 %v2344
    %2510 = vmatprep.subr.mxu0 0.0
    %2511 = vmatpush1.msra.mxu0 %v2347
    %2512 = vmatprep.subr.mxu0 0.0
    %2513 = vmatpush1.msra.mxu0 %v2350
    %2514 = vmatprep.subr.mxu0 0.0
    %2515 = vmatpush1.msra.mxu0 %v2353
    %2516 = vmatprep.subr.mxu0 0.0
    %2517 = vmatpush1.msra.mxu0 0.0
    %2518 = vmatprep.subr.mxu0 0.0
    %2519 = vmatpush1.msra.mxu0 0.0
    %2520 = vmatprep.subr.mxu0 0.0
    %2521 = vmatpush1.msra.mxu0 0.0
    %2522 = vmatprep.subr.mxu0 0.0
    %2523 = vmatpush1.msra.mxu0 0.0
    %2524 = vmatprep.subr.mxu0 0.0
    %2525 = vmatpush1.msra.mxu0 0.0
    %2526 = vmatprep.subr.mxu0 0.0
    %2527 = vmatpush1.msra.mxu0 0.0
    %2528 = vmatprep.subr.mxu0 0.0
    %2529 = vmatpush1.msra.mxu0 0.0
    %2530 = vmatprep.subr.mxu0 0.0
    %2531 = vmatpush1.msra.mxu0 0.0
    %2532 = vmatprep.subr.mxu0 0.0
    %2533 = vmatpush1.msra.mxu0 0.0
    %2534 = vmatprep.subr.mxu0 0.0
    %2535 = vmatpush1.msra.mxu0 0.0
    %2536 = vmatprep.subr.mxu0 0.0
    %2537 = vmatpush1.msra.mxu0 0.0
    %2538 = vmatprep.subr.mxu0 0.0
    %2539 = vmatpush1.msra.mxu0 0.0
    %2540 = vmatprep.subr.mxu0 0.0
    %2541 = vmatpush1.msra.mxu0 0.0
    %2542 = vmatprep.subr.mxu0 0.0
    %2543 = vmatpush1.msra.mxu0 0.0
    %2544 = vmatprep.subr.mxu0 0.0
    %2545 = vmatpush1.msra.mxu0 0.0
    %2546 = vmatprep.subr.mxu0 0.0
    %2547 = vmatpush1.msra.mxu0 0.0
    %2548 = vmatprep.mubr.f32.mxu0 0.0
    %2549 = vmatmul.mubr.f32.gmra.mrb[0].mxu0 %v2298
    %v2550 = vpop.f32.mrb[0].mxu0
    %v2551 = vadd.f32 %v2367, %v2550
    %v2552 = vpop.f32.mrb[0].mxu0
    %2553 = vmatprep.mubr.f32.mxu0 0.0
    %2554 = vmatmul.mubr.f32.gmra.mrb[0].mxu0 %v2299
    %v2555 = vpop.f32.mrb[0].mxu0
    %v2556 = vadd.f32 %v2367, %v2555
    %v2557 = vpop.f32.mrb[0].mxu0
    %2558 = vmatprep.mubr.f32.mxu0 0.0
    %2559 = vmatmul.mubr.f32.gmra.mrb[0].mxu0 %v2300
    %v2560 = vpop.f32.mrb[0].mxu0
    %v2561 = vadd.f32 %v2367, %v2560
    %v2562 = vpop.f32.mrb[0].mxu0
    %2563 = vmatprep.mubr.f32.mxu0 0.0
    %2564 = vmatmul.mubr.f32.gmra.mrb[0].mxu0 %v2301
    %v2565 = vpop.f32.mrb[0].mxu0
    %v2566 = vadd.f32 %v2367, %v2565
    %v2567 = vpop.f32.mrb[0].mxu0
    %2568 = vmatprep.mubr.f32.mxu0 0.0
    %2569 = vmatmul.mubr.f32.gmra.mrb[0].mxu0 %v2302
    %v2570 = vpop.f32.mrb[0].mxu0
    %v2571 = vadd.f32 %v2367, %v2570
    %v2572 = vpop.f32.mrb[0].mxu0
    %2573 = vmatprep.mubr.f32.mxu0 0.0
    %2574 = vmatmul.mubr.f32.gmra.mrb[0].mxu0 %v2303
    %v2575 = vpop.f32.mrb[0].mxu0
    %v2576 = vadd.f32 %v2367, %v2575
    %v2577 = vpop.f32.mrb[0].mxu0
    %2578 = vmatprep.mubr.f32.mxu0 0.0
    %2579 = vmatmul.mubr.f32.gmra.mrb[0].mxu0 %v2304
    %v2580 = vpop.f32.mrb[0].mxu0
    %v2581 = vadd.f32 %v2367, %v2580
    %v2582 = vpop.f32.mrb[0].mxu0
    %2583 = vmatprep.mubr.f32.mxu0 0.0
    %2584 = vmatmul.mubr.f32.gmra.mrb[0].mxu0 %v2305
    %v2585 = vpop.f32.mrb[0].mxu0
    %v2586 = vadd.f32 %v2367, %v2585
    %v2587 = vpop.f32.mrb[0].mxu0
    %2588 = vdwg.mxu0
    %2589 = vst [vmem:[#allocation2] sm:$0xff] %v2438
    %2590 = vst [vmem:[#allocation2 + $0x8] sm:$0xff] %v2440
    %2591 = vst [vmem:[#allocation2 + $0x10] sm:$0xff] %v2551
    %2592 = vst [vmem:[#allocation2 + $0x18] sm:$0xff] %v2444
    %2593 = vst [vmem:[#allocation2 + $0x20] sm:$0xff] %v2446
    %2594 = vst [vmem:[#allocation2 + $0x28] sm:$0xff] %v2556
    %2595 = vst [vmem:[#allocation2 + $0x30] sm:$0xff] %v2450
    %2596 = vst [vmem:[#allocation2 + $0x38] sm:$0xff] %v2452
    %2597 = vst [vmem:[#allocation2 + $0x40] sm:$0xff] %v2561
    %2598 = vst [vmem:[#allocation2 + $0x48] sm:$0xff] %v2456
    %2599 = vst [vmem:[#allocation2 + $0x50] sm:$0xff] %v2458
    %2600 = vst [vmem:[#allocation2 + $0x58] sm:$0xff] %v2566
    %2601 = vst [vmem:[#allocation2 + $0x60] sm:$0xff] %v2462
    %2602 = vst [vmem:[#allocation2 + $0x68] sm:$0xff] %v2464
    %2603 = vst [vmem:[#allocation2 + $0x70] sm:$0xff] %v2571
    %2604 = vst [vmem:[#allocation2 + $0x78] sm:$0xff] %v2468
    %2605 = vst [vmem:[#allocation2 + $0x80] sm:$0xff] %v2470
    %2606 = vst [vmem:[#allocation2 + $0x88] sm:$0xff] %v2576
    %2607 = vst [vmem:[#allocation2 + $0x90] sm:$0xff] %v2474
    %2608 = vst [vmem:[#allocation2 + $0x98] sm:$0xff] %v2476
    %2609 = vst [vmem:[#allocation2 + $0xa0] sm:$0xff] %v2581
    %2610 = vst [vmem:[#allocation2 + $0xa8] sm:$0xff] %v2480
    %2611 = vst [vmem:[#allocation2 + $0xb0] sm:$0xff] %v2482
    %2612 = vst [vmem:[#allocation2 + $0xb8] sm:$0xff] %v2586
    %v2613 = vld [vmem:[#allocation2] sm:$0xff]
    %v2614 = vld [vmem:[#allocation2 + $0x8] sm:$0xff]
    %v2615 = vld [vmem:[#allocation2 + $0x10] sm:$0xff]
    %v2616 = vld [vmem:[#allocation12] sm:$0xff]
    %v2617 = vld [vmem:[#allocation12 + $0x8] sm:$0xff]
    %v2618 = vld [vmem:[#allocation12 + $0x10] sm:$0xff]
    %v2619 = vld [vmem:[#allocation12 + $0x18] sm:$0xff]
    %v2620 = vld [vmem:[#allocation12 + $0x20] sm:$0xff]
    %v2621 = vld [vmem:[#allocation12 + $0x28] sm:$0xff]
    %v2622 = vld [vmem:[#allocation12 + $0x30] sm:$0xff]
    %v2623 = vld [vmem:[#allocation12 + $0x38] sm:$0xff]
    %v2624 = vld [vmem:[#allocation12 + $0x40] sm:$0xff]
    %v2625 = vld [vmem:[#allocation12 + $0x48] sm:$0xff]
    %v2626 = vld [vmem:[#allocation12 + $0x50] sm:$0xff]
    %v2627 = vld [vmem:[#allocation12 + $0x58] sm:$0xff]
    %v2628 = vld [vmem:[#allocation12 + $0x60] sm:$0xff]
    %v2629 = vld [vmem:[#allocation12 + $0x68] sm:$0xff]
    %v2630 = vld [vmem:[#allocation12 + $0x70] sm:$0xff]
    %v2631 = vld [vmem:[#allocation12 + $0x78] sm:$0xff]
    %v2632 = vld [vmem:[#allocation12 + $0x80] sm:$0xff]
    %v2633 = vld [vmem:[#allocation12 + $0x88] sm:$0xff]
    %v2634 = vld [vmem:[#allocation12 + $0x90] sm:$0xff]
    %v2635 = vld [vmem:[#allocation12 + $0x98] sm:$0xff]
    %v2636 = vld [vmem:[#allocation12 + $0xa0] sm:$0xff]
    %v2637 = vld [vmem:[#allocation12 + $0xa8] sm:$0xff]
    %v2638 = vld [vmem:[#allocation12 + $0xb0] sm:$0xff]
    %v2639 = vld [vmem:[#allocation12 + $0xb8] sm:$0xff]
    %v2640 = vld [vmem:[#allocation12 + $0xc0] sm:$0xff]
    %v2641 = vld [vmem:[#allocation12 + $0xc8] sm:$0xff]
    %v2642 = vld [vmem:[#allocation12 + $0xd0] sm:$0xff]
    %v2643 = vld [vmem:[#allocation12 + $0xd8] sm:$0xff]
    %v2644 = vld [vmem:[#allocation12 + $0xe0] sm:$0xff]
    %v2645 = vld [vmem:[#allocation12 + $0xe8] sm:$0xff]
    %v2646 = vld [vmem:[#allocation12 + $0xf0] sm:$0xff]
    %v2647 = vld [vmem:[#allocation12 + $0xf8] sm:$0xff]
    %v2648 = vld [vmem:[#allocation12 + $0x100] sm:$0xff]
    %v2649 = vld [vmem:[#allocation12 + $0x108] sm:$0xff]
    %v2650 = vld [vmem:[#allocation12 + $0x110] sm:$0xff]
    %v2651 = vld [vmem:[#allocation12 + $0x118] sm:$0xff]
    %v2652 = vld [vmem:[#allocation12 + $0x120] sm:$0xff]
    %v2653 = vld [vmem:[#allocation12 + $0x128] sm:$0xff]
    %v2654 = vld [vmem:[#allocation12 + $0x130] sm:$0xff]
    %v2655 = vld [vmem:[#allocation12 + $0x138] sm:$0xff]
    %v2656 = vld [vmem:[#allocation12 + $0x140] sm:$0xff]
    %v2657 = vld [vmem:[#allocation12 + $0x148] sm:$0xff]
    %v2658 = vld [vmem:[#allocation12 + $0x150] sm:$0xff]
    %v2659 = vld [vmem:[#allocation12 + $0x158] sm:$0xff]
    %v2660 = vld [vmem:[#allocation12 + $0x160] sm:$0xff]
    %v2661 = vld [vmem:[#allocation12 + $0x168] sm:$0xff]
    %v2662 = vld [vmem:[#allocation12 + $0x170] sm:$0xff]
    %v2663 = vld [vmem:[#allocation12 + $0x178] sm:$0xff]
    %v2664 = vld [vmem:[%s8] sm:$0x7]
    %v2666 = vlaneseq
    %v2667 = vshrl.u32 %v2666, 7
    %v2668 = vsub.s32 0, %v2667
    %v2669 = vrot.slane %v2664, %v2668
    %v2670 = vlaneseq
    %v2671 = vshrl.u32 %v2670, 7
    %v2672 = vsub.s32 1, %v2671
    %v2673 = vrot.slane %v2664, %v2672
    %v2674 = vlaneseq
    %v2675 = vshrl.u32 %v2674, 7
    %v2676 = vsub.s32 2, %v2675
    %v2677 = vrot.slane %v2664, %v2676
    %2681 = vmatprep.subr.mxu0 %v2617
    %2682 = vmatpush1.msra.mxu0 %v2616
    %2683 = vmatprep.subr.mxu0 %v2620
    %2684 = vmatpush1.msra.mxu0 %v2619
    %2685 = vmatprep.subr.mxu0 %v2623
    %2686 = vmatpush1.msra.mxu0 %v2622
    %2687 = vmatprep.subr.mxu0 %v2626
    %2688 = vmatpush1.msra.mxu0 %v2625
    %2689 = vmatprep.subr.mxu0 %v2629
    %2690 = vmatpush1.msra.mxu0 %v2628
    %2691 = vmatprep.subr.mxu0 %v2632
    %2692 = vmatpush1.msra.mxu0 %v2631
    %2693 = vmatprep.subr.mxu0 %v2635
    %2694 = vmatpush1.msra.mxu0 %v2634
    %2695 = vmatprep.subr.mxu0 %v2638
    %2696 = vmatpush1.msra.mxu0 %v2637
    %2697 = vmatprep.subr.mxu0 %v2641
    %2698 = vmatpush1.msra.mxu0 %v2640
    %2699 = vmatprep.subr.mxu0 %v2644
    %2700 = vmatpush1.msra.mxu0 %v2643
    %2701 = vmatprep.subr.mxu0 %v2647
    %2702 = vmatpush1.msra.mxu0 %v2646
    %2703 = vmatprep.subr.mxu0 %v2650
    %2704 = vmatpush1.msra.mxu0 %v2649
    %2705 = vmatprep.subr.mxu0 %v2653
    %2706 = vmatpush1.msra.mxu0 %v2652
    %2707 = vmatprep.subr.mxu0 %v2656
    %2708 = vmatpush1.msra.mxu0 %v2655
    %2709 = vmatprep.subr.mxu0 %v2659
    %2710 = vmatpush1.msra.mxu0 %v2658
    %2711 = vmatprep.subr.mxu0 %v2662
    %2712 = vmatpush1.msra.mxu0 %v2661
    %2713 = vmatprep.subr.mxu0 0.0
    %2714 = vmatpush1.msra.mxu0 0.0
    %2715 = vmatprep.subr.mxu0 0.0
    %2716 = vmatpush1.msra.mxu0 0.0
    %2717 = vmatprep.subr.mxu0 0.0
    %2718 = vmatpush1.msra.mxu0 0.0
    %2719 = vmatprep.subr.mxu0 0.0
    %2720 = vmatpush1.msra.mxu0 0.0
    %2721 = vmatprep.subr.mxu0 0.0
    %2722 = vmatpush1.msra.mxu0 0.0
    %2723 = vmatprep.subr.mxu0 0.0
    %2724 = vmatpush1.msra.mxu0 0.0
    %2725 = vmatprep.subr.mxu0 0.0
    %2726 = vmatpush1.msra.mxu0 0.0
    %2727 = vmatprep.subr.mxu0 0.0
    %2728 = vmatpush1.msra.mxu0 0.0
    %2729 = vmatprep.subr.mxu0 0.0
    %2730 = vmatpush1.msra.mxu0 0.0
    %2731 = vmatprep.subr.mxu0 0.0
    %2732 = vmatpush1.msra.mxu0 0.0
    %2733 = vmatprep.subr.mxu0 0.0
    %2734 = vmatpush1.msra.mxu0 0.0
    %2735 = vmatprep.subr.mxu0 0.0
    %2736 = vmatpush1.msra.mxu0 0.0
    %2737 = vmatprep.subr.mxu0 0.0
    %2738 = vmatpush1.msra.mxu0 0.0
    %2739 = vmatprep.subr.mxu0 0.0
    %2740 = vmatpush1.msra.mxu0 0.0
    %2741 = vmatprep.subr.mxu0 0.0
    %2742 = vmatpush1.msra.mxu0 0.0
    %2743 = vmatprep.subr.mxu0 0.0
    %2744 = vmatpush1.msra.mxu0 0.0
    %2745 = vmatprep.mubr.f32.mxu0 0.0
    %2746 = vmatmul.mubr.f32.gmra.mrb[0].mxu0 0.0
    %v2747 = vpop.f32.mrb[0].mxu0
    %v2748 = vadd.f32 %v2669, %v2747
    %v2749 = vpop.f32.mrb[0].mxu0
    %v2750 = vadd.f32 %v2673, %v2749
    %2751 = vdwg.mxu0
    %2752 = vmatprep.subr.mxu0 0.0
    %2753 = vmatpush1.msra.mxu0 %v2618
    %2754 = vmatprep.subr.mxu0 0.0
    %2755 = vmatpush1.msra.mxu0 %v2621
    %2756 = vmatprep.subr.mxu0 0.0
    %2757 = vmatpush1.msra.mxu0 %v2624
    %2758 = vmatprep.subr.mxu0 0.0
    %2759 = vmatpush1.msra.mxu0 %v2627
    %2760 = vmatprep.subr.mxu0 0.0
    %2761 = vmatpush1.msra.mxu0 %v2630
    %2762 = vmatprep.subr.mxu0 0.0
    %2763 = vmatpush1.msra.mxu0 %v2633
    %2764 = vmatprep.subr.mxu0 0.0
    %2765 = vmatpush1.msra.mxu0 %v2636
    %2766 = vmatprep.subr.mxu0 0.0
    %2767 = vmatpush1.msra.mxu0 %v2639
    %2768 = vmatprep.subr.mxu0 0.0
    %2769 = vmatpush1.msra.mxu0 %v2642
    %2770 = vmatprep.subr.mxu0 0.0
    %2771 = vmatpush1.msra.mxu0 %v2645
    %2772 = vmatprep.subr.mxu0 0.0
    %2773 = vmatpush1.msra.mxu0 %v2648
    %2774 = vmatprep.subr.mxu0 0.0
    %2775 = vmatpush1.msra.mxu0 %v2651
    %2776 = vmatprep.subr.mxu0 0.0
    %2777 = vmatpush1.msra.mxu0 %v2654
    %2778 = vmatprep.subr.mxu0 0.0
    %2779 = vmatpush1.msra.mxu0 %v2657
    %2780 = vmatprep.subr.mxu0 0.0
    %2781 = vmatpush1.msra.mxu0 %v2660
    %2782 = vmatprep.subr.mxu0 0.0
    %2783 = vmatpush1.msra.mxu0 %v2663
    %2784 = vmatprep.subr.mxu0 0.0
    %2785 = vmatpush1.msra.mxu0 0.0
    %2786 = vmatprep.subr.mxu0 0.0
    %2787 = vmatpush1.msra.mxu0 0.0
    %2788 = vmatprep.subr.mxu0 0.0
    %2789 = vmatpush1.msra.mxu0 0.0
    %2790 = vmatprep.subr.mxu0 0.0
    %2791 = vmatpush1.msra.mxu0 0.0
    %2792 = vmatprep.subr.mxu0 0.0
    %2793 = vmatpush1.msra.mxu0 0.0
    %2794 = vmatprep.subr.mxu0 0.0
    %2795 = vmatpush1.msra.mxu0 0.0
    %2796 = vmatprep.subr.mxu0 0.0
    %2797 = vmatpush1.msra.mxu0 0.0
    %2798 = vmatprep.subr.mxu0 0.0
    %2799 = vmatpush1.msra.mxu0 0.0
    %2800 = vmatprep.subr.mxu0 0.0
    %2801 = vmatpush1.msra.mxu0 0.0
    %2802 = vmatprep.subr.mxu0 0.0
    %2803 = vmatpush1.msra.mxu0 0.0
    %2804 = vmatprep.subr.mxu0 0.0
    %2805 = vmatpush1.msra.mxu0 0.0
    %2806 = vmatprep.subr.mxu0 0.0
    %2807 = vmatpush1.msra.mxu0 0.0
    %2808 = vmatprep.subr.mxu0 0.0
    %2809 = vmatpush1.msra.mxu0 0.0
    %2810 = vmatprep.subr.mxu0 0.0
    %2811 = vmatpush1.msra.mxu0 0.0
    %2812 = vmatprep.subr.mxu0 0.0
    %2813 = vmatpush1.msra.mxu0 0.0
    %2814 = vmatprep.subr.mxu0 0.0
    %2815 = vmatpush1.msra.mxu0 0.0
    %2816 = vmatprep.mubr.f32.mxu0 0.0
    %2817 = vmatmul.mubr.f32.gmra.mrb[0].mxu0 0.0
    %v2818 = vpop.f32.mrb[0].mxu0
    %v2819 = vadd.f32 %v2677, %v2818
    %v2820 = vpop.f32.mrb[0].mxu0
    %2821 = vdwg.mxu0
    %v2822 = vadd.f32 %v2613, %v2748
    %v2823 = vxor.u32 %v2822, 2147483648
    %v2824 = vmul.f32 %v2823, 1.442695
    %v2825 = vpow.pop %v2824
    %v2826 = vadd.f32 %v2825, 1.0
    %v2827 = vrcp.pop %v2826
    %v2828 = vmul.f32 1.0, %v2827
    %v2829 = vadd.f32 %v2614, %v2750
    %v2830 = vxor.u32 %v2829, 2147483648
    %v2831 = vmul.f32 %v2830, 1.442695
    %v2832 = vpow.pop %v2831
    %v2833 = vadd.f32 %v2832, 1.0
    %v2834 = vrcp.pop %v2833
    %v2835 = vmul.f32 1.0, %v2834
    %v2836 = vmul.f32 %v2828, %v2819
    %v2837 = vadd.f32 %v2615, %v2836
    %v2838 = vtanh.pop %v2837
    %v2839 = vsub.f32 1.0, %v2835
    %v2840 = vmul.f32 %v2839, %v2838
    %v2841 = vmul.f32 %v2835, 0.0
    %v2842 = vadd.f32 %v2840, %v2841
    %v2843 = vld [vmem:[%s667] sm:$0xff]
    %v2844 = vld [vmem:[%s667 + $0x8] sm:$0xff]
    %v2845 = vld [vmem:[%s667 + $0x10] sm:$0xff]
    %2846 = vmatprep.subr.mxu0 %v2617
    %2847 = vmatpush1.msra.mxu0 %v2616
    %2848 = vmatprep.subr.mxu0 %v2620
    %2849 = vmatpush1.msra.mxu0 %v2619
    %2850 = vmatprep.subr.mxu0 %v2623
    %2851 = vmatpush1.msra.mxu0 %v2622
    %2852 = vmatprep.subr.mxu0 %v2626
    %2853 = vmatpush1.msra.mxu0 %v2625
    %2854 = vmatprep.subr.mxu0 %v2629
    %2855 = vmatpush1.msra.mxu0 %v2628
    %2856 = vmatprep.subr.mxu0 %v2632
    %2857 = vmatpush1.msra.mxu0 %v2631
    %2858 = vmatprep.subr.mxu0 %v2635
    %2859 = vmatpush1.msra.mxu0 %v2634
    %2860 = vmatprep.subr.mxu0 %v2638
    %2861 = vmatpush1.msra.mxu0 %v2637
    %2862 = vmatprep.subr.mxu0 %v2641
    %2863 = vmatpush1.msra.mxu0 %v2640
    %2864 = vmatprep.subr.mxu0 %v2644
    %2865 = vmatpush1.msra.mxu0 %v2643
    %2866 = vmatprep.subr.mxu0 %v2647
    %2867 = vmatpush1.msra.mxu0 %v2646
    %2868 = vmatprep.subr.mxu0 %v2650
    %2869 = vmatpush1.msra.mxu0 %v2649
    %2870 = vmatprep.subr.mxu0 %v2653
    %2871 = vmatpush1.msra.mxu0 %v2652
    %2872 = vmatprep.subr.mxu0 %v2656
    %2873 = vmatpush1.msra.mxu0 %v2655
    %2874 = vmatprep.subr.mxu0 %v2659
    %2875 = vmatpush1.msra.mxu0 %v2658
    %2876 = vmatprep.subr.mxu0 %v2662
    %2877 = vmatpush1.msra.mxu0 %v2661
    %2878 = vmatprep.subr.mxu0 0.0
    %2879 = vmatpush1.msra.mxu0 0.0
    %2880 = vmatprep.subr.mxu0 0.0
    %2881 = vmatpush1.msra.mxu0 0.0
    %2882 = vmatprep.subr.mxu0 0.0
    %2883 = vmatpush1.msra.mxu0 0.0
    %2884 = vmatprep.subr.mxu0 0.0
    %2885 = vmatpush1.msra.mxu0 0.0
    %2886 = vmatprep.subr.mxu0 0.0
    %2887 = vmatpush1.msra.mxu0 0.0
    %2888 = vmatprep.subr.mxu0 0.0
    %2889 = vmatpush1.msra.mxu0 0.0
    %2890 = vmatprep.subr.mxu0 0.0
    %2891 = vmatpush1.msra.mxu0 0.0
    %2892 = vmatprep.subr.mxu0 0.0
    %2893 = vmatpush1.msra.mxu0 0.0
    %2894 = vmatprep.subr.mxu0 0.0
    %2895 = vmatpush1.msra.mxu0 0.0
    %2896 = vmatprep.subr.mxu0 0.0
    %2897 = vmatpush1.msra.mxu0 0.0
    %2898 = vmatprep.subr.mxu0 0.0
    %2899 = vmatpush1.msra.mxu0 0.0
    %2900 = vmatprep.subr.mxu0 0.0
    %2901 = vmatpush1.msra.mxu0 0.0
    %2902 = vmatprep.subr.mxu0 0.0
    %2903 = vmatpush1.msra.mxu0 0.0
    %2904 = vmatprep.subr.mxu0 0.0
    %2905 = vmatpush1.msra.mxu0 0.0
    %2906 = vmatprep.subr.mxu0 0.0
    %2907 = vmatpush1.msra.mxu0 0.0
    %2908 = vmatprep.subr.mxu0 0.0
    %2909 = vmatpush1.msra.mxu0 0.0
    %2910 = vmatprep.mubr.f32.mxu0 0.0
    %2911 = vmatmul.mubr.f32.gmra.mrb[0].mxu0 %v2842
    %v2912 = vpop.f32.mrb[0].mxu0
    %v2913 = vadd.f32 %v2669, %v2912
    %v2914 = vpop.f32.mrb[0].mxu0
    %v2915 = vadd.f32 %v2673, %v2914
    %2916 = vdwg.mxu0
    %2917 = vmatprep.subr.mxu0 0.0
    %2918 = vmatpush1.msra.mxu0 %v2618
    %2919 = vmatprep.subr.mxu0 0.0
    %2920 = vmatpush1.msra.mxu0 %v2621
    %2921 = vmatprep.subr.mxu0 0.0
    %2922 = vmatpush1.msra.mxu0 %v2624
    %2923 = vmatprep.subr.mxu0 0.0
    %2924 = vmatpush1.msra.mxu0 %v2627
    %2925 = vmatprep.subr.mxu0 0.0
    %2926 = vmatpush1.msra.mxu0 %v2630
    %2927 = vmatprep.subr.mxu0 0.0
    %2928 = vmatpush1.msra.mxu0 %v2633
    %2929 = vmatprep.subr.mxu0 0.0
    %2930 = vmatpush1.msra.mxu0 %v2636
    %2931 = vmatprep.subr.mxu0 0.0
    %2932 = vmatpush1.msra.mxu0 %v2639
    %2933 = vmatprep.subr.mxu0 0.0
    %2934 = vmatpush1.msra.mxu0 %v2642
    %2935 = vmatprep.subr.mxu0 0.0
    %2936 = vmatpush1.msra.mxu0 %v2645
    %2937 = vmatprep.subr.mxu0 0.0
    %2938 = vmatpush1.msra.mxu0 %v2648
    %2939 = vmatprep.subr.mxu0 0.0
    %2940 = vmatpush1.msra.mxu0 %v2651
    %2941 = vmatprep.subr.mxu0 0.0
    %2942 = vmatpush1.msra.mxu0 %v2654
    %2943 = vmatprep.subr.mxu0 0.0
    %2944 = vmatpush1.msra.mxu0 %v2657
    %2945 = vmatprep.subr.mxu0 0.0
    %2946 = vmatpush1.msra.mxu0 %v2660
    %2947 = vmatprep.subr.mxu0 0.0
    %2948 = vmatpush1.msra.mxu0 %v2663
    %2949 = vmatprep.subr.mxu0 0.0
    %2950 = vmatpush1.msra.mxu0 0.0
    %2951 = vmatprep.subr.mxu0 0.0
    %2952 = vmatpush1.msra.mxu0 0.0
    %2953 = vmatprep.subr.mxu0 0.0
    %2954 = vmatpush1.msra.mxu0 0.0
    %2955 = vmatprep.subr.mxu0 0.0
    %2956 = vmatpush1.msra.mxu0 0.0
    %2957 = vmatprep.subr.mxu0 0.0
    %2958 = vmatpush1.msra.mxu0 0.0
    %2959 = vmatprep.subr.mxu0 0.0
    %2960 = vmatpush1.msra.mxu0 0.0
    %2961 = vmatprep.subr.mxu0 0.0
    %2962 = vmatpush1.msra.mxu0 0.0
    %2963 = vmatprep.subr.mxu0 0.0
    %2964 = vmatpush1.msra.mxu0 0.0
    %2965 = vmatprep.subr.mxu0 0.0
    %2966 = vmatpush1.msra.mxu0 0.0
    %2967 = vmatprep.subr.mxu0 0.0
    %2968 = vmatpush1.msra.mxu0 0.0
    %2969 = vmatprep.subr.mxu0 0.0
    %2970 = vmatpush1.msra.mxu0 0.0
    %2971 = vmatprep.subr.mxu0 0.0
    %2972 = vmatpush1.msra.mxu0 0.0
    %2973 = vmatprep.subr.mxu0 0.0
    %2974 = vmatpush1.msra.mxu0 0.0
    %2975 = vmatprep.subr.mxu0 0.0
    %2976 = vmatpush1.msra.mxu0 0.0
    %2977 = vmatprep.subr.mxu0 0.0
    %2978 = vmatpush1.msra.mxu0 0.0
    %2979 = vmatprep.subr.mxu0 0.0
    %2980 = vmatpush1.msra.mxu0 0.0
    %2981 = vmatprep.mubr.f32.mxu0 0.0
    %2982 = vmatmul.mubr.f32.gmra.mrb[0].mxu0 %v2842
    %v2983 = vpop.f32.mrb[0].mxu0
    %v2984 = vadd.f32 %v2677, %v2983
    %v2985 = vpop.f32.mrb[0].mxu0
    %2986 = vdwg.mxu0
    %v2987 = vadd.f32 %v2843, %v2913
    %v2988 = vxor.u32 %v2987, 2147483648
    %v2989 = vmul.f32 %v2988, 1.442695
    %v2990 = vpow.pop %v2989
    %v2991 = vadd.f32 %v2990, 1.0
    %v2992 = vrcp.pop %v2991
    %v2993 = vmul.f32 1.0, %v2992
    %v2994 = vadd.f32 %v2844, %v2915
    %v2995 = vxor.u32 %v2994, 2147483648
    %v2996 = vmul.f32 %v2995, 1.442695
    %v2997 = vpow.pop %v2996
    %v2998 = vadd.f32 %v2997, 1.0
    %v2999 = vrcp.pop %v2998
    %v3000 = vmul.f32 1.0, %v2999
    %v3001 = vmul.f32 %v2993, %v2984
    %v3002 = vadd.f32 %v2845, %v3001
    %v3003 = vtanh.pop %v3002
    %v3004 = vsub.f32 1.0, %v3000
    %v3005 = vmul.f32 %v3004, %v3003
    %v3006 = vmul.f32 %v3000, %v2842
    %v3007 = vadd.f32 %v3005, %v3006
    %v3008 = vld [vmem:[%s900] sm:$0xff]
    %v3009 = vld [vmem:[%s900 + $0x8] sm:$0xff]
    %v3010 = vld [vmem:[%s900 + $0x10] sm:$0xff]
    %3011 = vmatprep.subr.mxu0 %v2617
    %3012 = vmatpush1.msra.mxu0 %v2616
    %3013 = vmatprep.subr.mxu0 %v2620
    %3014 = vmatpush1.msra.mxu0 %v2619
    %3015 = vmatprep.subr.mxu0 %v2623
    %3016 = vmatpush1.msra.mxu0 %v2622
    %3017 = vmatprep.subr.mxu0 %v2626
    %3018 = vmatpush1.msra.mxu0 %v2625
    %3019 = vmatprep.subr.mxu0 %v2629
    %3020 = vmatpush1.msra.mxu0 %v2628
    %3021 = vmatprep.subr.mxu0 %v2632
    %3022 = vmatpush1.msra.mxu0 %v2631
    %3023 = vmatprep.subr.mxu0 %v2635
    %3024 = vmatpush1.msra.mxu0 %v2634
    %3025 = vmatprep.subr.mxu0 %v2638
    %3026 = vmatpush1.msra.mxu0 %v2637
    %3027 = vmatprep.subr.mxu0 %v2641
    %3028 = vmatpush1.msra.mxu0 %v2640
    %3029 = vmatprep.subr.mxu0 %v2644
    %3030 = vmatpush1.msra.mxu0 %v2643
    %3031 = vmatprep.subr.mxu0 %v2647
    %3032 = vmatpush1.msra.mxu0 %v2646
    %3033 = vmatprep.subr.mxu0 %v2650
    %3034 = vmatpush1.msra.mxu0 %v2649
    %3035 = vmatprep.subr.mxu0 %v2653
    %3036 = vmatpush1.msra.mxu0 %v2652
    %3037 = vmatprep.subr.mxu0 %v2656
    %3038 = vmatpush1.msra.mxu0 %v2655
    %3039 = vmatprep.subr.mxu0 %v2659
    %3040 = vmatpush1.msra.mxu0 %v2658
    %3041 = vmatprep.subr.mxu0 %v2662
    %3042 = vmatpush1.msra.mxu0 %v2661
    %3043 = vmatprep.subr.mxu0 0.0
    %3044 = vmatpush1.msra.mxu0 0.0
    %3045 = vmatprep.subr.mxu0 0.0
    %3046 = vmatpush1.msra.mxu0 0.0
    %3047 = vmatprep.subr.mxu0 0.0
    %3048 = vmatpush1.msra.mxu0 0.0
    %3049 = vmatprep.subr.mxu0 0.0
    %3050 = vmatpush1.msra.mxu0 0.0
    %3051 = vmatprep.subr.mxu0 0.0
    %3052 = vmatpush1.msra.mxu0 0.0
    %3053 = vmatprep.subr.mxu0 0.0
    %3054 = vmatpush1.msra.mxu0 0.0
    %3055 = vmatprep.subr.mxu0 0.0
    %3056 = vmatpush1.msra.mxu0 0.0
    %3057 = vmatprep.subr.mxu0 0.0
    %3058 = vmatpush1.msra.mxu0 0.0
    %3059 = vmatprep.subr.mxu0 0.0
    %3060 = vmatpush1.msra.mxu0 0.0
    %3061 = vmatprep.subr.mxu0 0.0
    %3062 = vmatpush1.msra.mxu0 0.0
    %3063 = vmatprep.subr.mxu0 0.0
    %3064 = vmatpush1.msra.mxu0 0.0
    %3065 = vmatprep.subr.mxu0 0.0
    %3066 = vmatpush1.msra.mxu0 0.0
    %3067 = vmatprep.subr.mxu0 0.0
    %3068 = vmatpush1.msra.mxu0 0.0
    %3069 = vmatprep.subr.mxu0 0.0
    %3070 = vmatpush1.msra.mxu0 0.0
    %3071 = vmatprep.subr.mxu0 0.0
    %3072 = vmatpush1.msra.mxu0 0.0
    %3073 = vmatprep.subr.mxu0 0.0
    %3074 = vmatpush1.msra.mxu0 0.0
    %3075 = vmatprep.mubr.f32.mxu0 0.0
    %3076 = vmatmul.mubr.f32.gmra.mrb[0].mxu0 %v3007
    %v3077 = vpop.f32.mrb[0].mxu0
    %v3078 = vadd.f32 %v2669, %v3077
    %v3079 = vpop.f32.mrb[0].mxu0
    %v3080 = vadd.f32 %v2673, %v3079
    %3081 = vdwg.mxu0
    %3082 = vmatprep.subr.mxu0 0.0
    %3083 = vmatpush1.msra.mxu0 %v2618
    %3084 = vmatprep.subr.mxu0 0.0
    %3085 = vmatpush1.msra.mxu0 %v2621
    %3086 = vmatprep.subr.mxu0 0.0
    %3087 = vmatpush1.msra.mxu0 %v2624
    %3088 = vmatprep.subr.mxu0 0.0
    %3089 = vmatpush1.msra.mxu0 %v2627
    %3090 = vmatprep.subr.mxu0 0.0
    %3091 = vmatpush1.msra.mxu0 %v2630
    %3092 = vmatprep.subr.mxu0 0.0
    %3093 = vmatpush1.msra.mxu0 %v2633
    %3094 = vmatprep.subr.mxu0 0.0
    %3095 = vmatpush1.msra.mxu0 %v2636
    %3096 = vmatprep.subr.mxu0 0.0
    %3097 = vmatpush1.msra.mxu0 %v2639
    %3098 = vmatprep.subr.mxu0 0.0
    %3099 = vmatpush1.msra.mxu0 %v2642
    %3100 = vmatprep.subr.mxu0 0.0
    %3101 = vmatpush1.msra.mxu0 %v2645
    %3102 = vmatprep.subr.mxu0 0.0
    %3103 = vmatpush1.msra.mxu0 %v2648
    %3104 = vmatprep.subr.mxu0 0.0
    %3105 = vmatpush1.msra.mxu0 %v2651
    %3106 = vmatprep.subr.mxu0 0.0
    %3107 = vmatpush1.msra.mxu0 %v2654
    %3108 = vmatprep.subr.mxu0 0.0
    %3109 = vmatpush1.msra.mxu0 %v2657
    %3110 = vmatprep.subr.mxu0 0.0
    %3111 = vmatpush1.msra.mxu0 %v2660
    %3112 = vmatprep.subr.mxu0 0.0
    %3113 = vmatpush1.msra.mxu0 %v2663
    %3114 = vmatprep.subr.mxu0 0.0
    %3115 = vmatpush1.msra.mxu0 0.0
    %3116 = vmatprep.subr.mxu0 0.0
    %3117 = vmatpush1.msra.mxu0 0.0
    %3118 = vmatprep.subr.mxu0 0.0
    %3119 = vmatpush1.msra.mxu0 0.0
    %3120 = vmatprep.subr.mxu0 0.0
    %3121 = vmatpush1.msra.mxu0 0.0
    %3122 = vmatprep.subr.mxu0 0.0
    %3123 = vmatpush1.msra.mxu0 0.0
    %3124 = vmatprep.subr.mxu0 0.0
    %3125 = vmatpush1.msra.mxu0 0.0
    %3126 = vmatprep.subr.mxu0 0.0
    %3127 = vmatpush1.msra.mxu0 0.0
    %3128 = vmatprep.subr.mxu0 0.0
    %3129 = vmatpush1.msra.mxu0 0.0
    %3130 = vmatprep.subr.mxu0 0.0
    %3131 = vmatpush1.msra.mxu0 0.0
    %3132 = vmatprep.subr.mxu0 0.0
    %3133 = vmatpush1.msra.mxu0 0.0
    %3134 = vmatprep.subr.mxu0 0.0
    %3135 = vmatpush1.msra.mxu0 0.0
    %3136 = vmatprep.subr.mxu0 0.0
    %3137 = vmatpush1.msra.mxu0 0.0
    %3138 = vmatprep.subr.mxu0 0.0
    %3139 = vmatpush1.msra.mxu0 0.0
    %3140 = vmatprep.subr.mxu0 0.0
    %3141 = vmatpush1.msra.mxu0 0.0
    %3142 = vmatprep.subr.mxu0 0.0
    %3143 = vmatpush1.msra.mxu0 0.0
    %3144 = vmatprep.subr.mxu0 0.0
    %3145 = vmatpush1.msra.mxu0 0.0
    %3146 = vmatprep.mubr.f32.mxu0 0.0
    %3147 = vmatmul.mubr.f32.gmra.mrb[0].mxu0 %v3007
    %v3148 = vpop.f32.mrb[0].mxu0
    %v3149 = vadd.f32 %v2677, %v3148
    %v3150 = vpop.f32.mrb[0].mxu0
    %3151 = vdwg.mxu0
    %v3152 = vadd.f32 %v3008, %v3078
    %v3153 = vxor.u32 %v3152, 2147483648
    %v3154 = vmul.f32 %v3153, 1.442695
    %v3155 = vpow.pop %v3154
    %v3156 = vadd.f32 %v3155, 1.0
    %v3157 = vrcp.pop %v3156
    %v3158 = vmul.f32 1.0, %v3157
    %v3159 = vadd.f32 %v3009, %v3080
    %v3160 = vxor.u32 %v3159, 2147483648
    %v3161 = vmul.f32 %v3160, 1.442695
    %v3162 = vpow.pop %v3161
    %v3163 = vadd.f32 %v3162, 1.0
    %v3164 = vrcp.pop %v3163
    %v3165 = vmul.f32 1.0, %v3164
    %v3166 = vmul.f32 %v3158, %v3149
    %v3167 = vadd.f32 %v3010, %v3166
    %v3168 = vtanh.pop %v3167
    %v3169 = vsub.f32 1.0, %v3165
    %v3170 = vmul.f32 %v3169, %v3168
    %v3171 = vmul.f32 %v3165, %v3007
    %v3172 = vadd.f32 %v3170, %v3171
    %v3173 = vld [vmem:[%s1133] sm:$0xff]
    %v3174 = vld [vmem:[%s1133 + $0x8] sm:$0xff]
    %v3175 = vld [vmem:[%s1133 + $0x10] sm:$0xff]
    %3176 = vmatprep.subr.mxu0 %v2617
    %3177 = vmatpush1.msra.mxu0 %v2616
    %3178 = vmatprep.subr.mxu0 %v2620
    %3179 = vmatpush1.msra.mxu0 %v2619
    %3180 = vmatprep.subr.mxu0 %v2623
    %3181 = vmatpush1.msra.mxu0 %v2622
    %3182 = vmatprep.subr.mxu0 %v2626
    %3183 = vmatpush1.msra.mxu0 %v2625
    %3184 = vmatprep.subr.mxu0 %v2629
    %3185 = vmatpush1.msra.mxu0 %v2628
    %3186 = vmatprep.subr.mxu0 %v2632
    %3187 = vmatpush1.msra.mxu0 %v2631
    %3188 = vmatprep.subr.mxu0 %v2635
    %3189 = vmatpush1.msra.mxu0 %v2634
    %3190 = vmatprep.subr.mxu0 %v2638
    %3191 = vmatpush1.msra.mxu0 %v2637
    %3192 = vmatprep.subr.mxu0 %v2641
    %3193 = vmatpush1.msra.mxu0 %v2640
    %3194 = vmatprep.subr.mxu0 %v2644
    %3195 = vmatpush1.msra.mxu0 %v2643
    %3196 = vmatprep.subr.mxu0 %v2647
    %3197 = vmatpush1.msra.mxu0 %v2646
    %3198 = vmatprep.subr.mxu0 %v2650
    %3199 = vmatpush1.msra.mxu0 %v2649
    %3200 = vmatprep.subr.mxu0 %v2653
    %3201 = vmatpush1.msra.mxu0 %v2652
    %3202 = vmatprep.subr.mxu0 %v2656
    %3203 = vmatpush1.msra.mxu0 %v2655
    %3204 = vmatprep.subr.mxu0 %v2659
    %3205 = vmatpush1.msra.mxu0 %v2658
    %3206 = vmatprep.subr.mxu0 %v2662
    %3207 = vmatpush1.msra.mxu0 %v2661
    %3208 = vmatprep.subr.mxu0 0.0
    %3209 = vmatpush1.msra.mxu0 0.0
    %3210 = vmatprep.subr.mxu0 0.0
    %3211 = vmatpush1.msra.mxu0 0.0
    %3212 = vmatprep.subr.mxu0 0.0
    %3213 = vmatpush1.msra.mxu0 0.0
    %3214 = vmatprep.subr.mxu0 0.0
    %3215 = vmatpush1.msra.mxu0 0.0
    %3216 = vmatprep.subr.mxu0 0.0
    %3217 = vmatpush1.msra.mxu0 0.0
    %3218 = vmatprep.subr.mxu0 0.0
    %3219 = vmatpush1.msra.mxu0 0.0
    %3220 = vmatprep.subr.mxu0 0.0
    %3221 = vmatpush1.msra.mxu0 0.0
    %3222 = vmatprep.subr.mxu0 0.0
    %3223 = vmatpush1.msra.mxu0 0.0
    %3224 = vmatprep.subr.mxu0 0.0
    %3225 = vmatpush1.msra.mxu0 0.0
    %3226 = vmatprep.subr.mxu0 0.0
    %3227 = vmatpush1.msra.mxu0 0.0
    %3228 = vmatprep.subr.mxu0 0.0
    %3229 = vmatpush1.msra.mxu0 0.0
    %3230 = vmatprep.subr.mxu0 0.0
    %3231 = vmatpush1.msra.mxu0 0.0
    %3232 = vmatprep.subr.mxu0 0.0
    %3233 = vmatpush1.msra.mxu0 0.0
    %3234 = vmatprep.subr.mxu0 0.0
    %3235 = vmatpush1.msra.mxu0 0.0
    %3236 = vmatprep.subr.mxu0 0.0
    %3237 = vmatpush1.msra.mxu0 0.0
    %3238 = vmatprep.subr.mxu0 0.0
    %3239 = vmatpush1.msra.mxu0 0.0
    %3240 = vmatprep.mubr.f32.mxu0 0.0
    %3241 = vmatmul.mubr.f32.gmra.mrb[0].mxu0 %v3172
    %v3242 = vpop.f32.mrb[0].mxu0
    %v3243 = vadd.f32 %v2669, %v3242
    %v3244 = vpop.f32.mrb[0].mxu0
    %v3245 = vadd.f32 %v2673, %v3244
    %3246 = vdwg.mxu0
    %3247 = vmatprep.subr.mxu0 0.0
    %3248 = vmatpush1.msra.mxu0 %v2618
    %3249 = vmatprep.subr.mxu0 0.0
    %3250 = vmatpush1.msra.mxu0 %v2621
    %3251 = vmatprep.subr.mxu0 0.0
    %3252 = vmatpush1.msra.mxu0 %v2624
    %3253 = vmatprep.subr.mxu0 0.0
    %3254 = vmatpush1.msra.mxu0 %v2627
    %3255 = vmatprep.subr.mxu0 0.0
    %3256 = vmatpush1.msra.mxu0 %v2630
    %3257 = vmatprep.subr.mxu0 0.0
    %3258 = vmatpush1.msra.mxu0 %v2633
    %3259 = vmatprep.subr.mxu0 0.0
    %3260 = vmatpush1.msra.mxu0 %v2636
    %3261 = vmatprep.subr.mxu0 0.0
    %3262 = vmatpush1.msra.mxu0 %v2639
    %3263 = vmatprep.subr.mxu0 0.0
    %3264 = vmatpush1.msra.mxu0 %v2642
    %3265 = vmatprep.subr.mxu0 0.0
    %3266 = vmatpush1.msra.mxu0 %v2645
    %3267 = vmatprep.subr.mxu0 0.0
    %3268 = vmatpush1.msra.mxu0 %v2648
    %3269 = vmatprep.subr.mxu0 0.0
    %3270 = vmatpush1.msra.mxu0 %v2651
    %3271 = vmatprep.subr.mxu0 0.0
    %3272 = vmatpush1.msra.mxu0 %v2654
    %3273 = vmatprep.subr.mxu0 0.0
    %3274 = vmatpush1.msra.mxu0 %v2657
    %3275 = vmatprep.subr.mxu0 0.0
    %3276 = vmatpush1.msra.mxu0 %v2660
    %3277 = vmatprep.subr.mxu0 0.0
    %3278 = vmatpush1.msra.mxu0 %v2663
    %3279 = vmatprep.subr.mxu0 0.0
    %3280 = vmatpush1.msra.mxu0 0.0
    %3281 = vmatprep.subr.mxu0 0.0
    %3282 = vmatpush1.msra.mxu0 0.0
    %3283 = vmatprep.subr.mxu0 0.0
    %3284 = vmatpush1.msra.mxu0 0.0
    %3285 = vmatprep.subr.mxu0 0.0
    %3286 = vmatpush1.msra.mxu0 0.0
    %3287 = vmatprep.subr.mxu0 0.0
    %3288 = vmatpush1.msra.mxu0 0.0
    %3289 = vmatprep.subr.mxu0 0.0
    %3290 = vmatpush1.msra.mxu0 0.0
    %3291 = vmatprep.subr.mxu0 0.0
    %3292 = vmatpush1.msra.mxu0 0.0
    %3293 = vmatprep.subr.mxu0 0.0
    %3294 = vmatpush1.msra.mxu0 0.0
    %3295 = vmatprep.subr.mxu0 0.0
    %3296 = vmatpush1.msra.mxu0 0.0
    %3297 = vmatprep.subr.mxu0 0.0
    %3298 = vmatpush1.msra.mxu0 0.0
    %3299 = vmatprep.subr.mxu0 0.0
    %3300 = vmatpush1.msra.mxu0 0.0
    %3301 = vmatprep.subr.mxu0 0.0
    %3302 = vmatpush1.msra.mxu0 0.0
    %3303 = vmatprep.subr.mxu0 0.0
    %3304 = vmatpush1.msra.mxu0 0.0
    %3305 = vmatprep.subr.mxu0 0.0
    %3306 = vmatpush1.msra.mxu0 0.0
    %3307 = vmatprep.subr.mxu0 0.0
    %3308 = vmatpush1.msra.mxu0 0.0
    %3309 = vmatprep.subr.mxu0 0.0
    %3310 = vmatpush1.msra.mxu0 0.0
    %3311 = vmatprep.mubr.f32.mxu0 0.0
    %3312 = vmatmul.mubr.f32.gmra.mrb[0].mxu0 %v3172
    %v3313 = vpop.f32.mrb[0].mxu0
    %v3314 = vadd.f32 %v2677, %v3313
    %v3315 = vpop.f32.mrb[0].mxu0
    %3316 = vdwg.mxu0
    %v3317 = vadd.f32 %v3173, %v3243
    %v3318 = vxor.u32 %v3317, 2147483648
    %v3319 = vmul.f32 %v3318, 1.442695
    %v3320 = vpow.pop %v3319
    %v3321 = vadd.f32 %v3320, 1.0
    %v3322 = vrcp.pop %v3321
    %v3323 = vmul.f32 1.0, %v3322
    %v3324 = vadd.f32 %v3174, %v3245
    %v3325 = vxor.u32 %v3324, 2147483648
    %v3326 = vmul.f32 %v3325, 1.442695
    %v3327 = vpow.pop %v3326
    %v3328 = vadd.f32 %v3327, 1.0
    %v3329 = vrcp.pop %v3328
    %v3330 = vmul.f32 1.0, %v3329
    %v3331 = vmul.f32 %v3323, %v3314
    %v3332 = vadd.f32 %v3175, %v3331
    %v3333 = vtanh.pop %v3332
    %v3334 = vsub.f32 1.0, %v3330
    %v3335 = vmul.f32 %v3334, %v3333
    %v3336 = vmul.f32 %v3330, %v3172
    %v3337 = vadd.f32 %v3335, %v3336
    %v3338 = vld [vmem:[%s1366] sm:$0xff]
    %v3339 = vld [vmem:[%s1366 + $0x8] sm:$0xff]
    %v3340 = vld [vmem:[%s1366 + $0x10] sm:$0xff]
    %3341 = vmatprep.subr.mxu0 %v2617
    %3342 = vmatpush1.msra.mxu0 %v2616
    %3343 = vmatprep.subr.mxu0 %v2620
    %3344 = vmatpush1.msra.mxu0 %v2619
    %3345 = vmatprep.subr.mxu0 %v2623
    %3346 = vmatpush1.msra.mxu0 %v2622
    %3347 = vmatprep.subr.mxu0 %v2626
    %3348 = vmatpush1.msra.mxu0 %v2625
    %3349 = vmatprep.subr.mxu0 %v2629
    %3350 = vmatpush1.msra.mxu0 %v2628
    %3351 = vmatprep.subr.mxu0 %v2632
    %3352 = vmatpush1.msra.mxu0 %v2631
    %3353 = vmatprep.subr.mxu0 %v2635
    %3354 = vmatpush1.msra.mxu0 %v2634
    %3355 = vmatprep.subr.mxu0 %v2638
    %3356 = vmatpush1.msra.mxu0 %v2637
    %3357 = vmatprep.subr.mxu0 %v2641
    %3358 = vmatpush1.msra.mxu0 %v2640
    %3359 = vmatprep.subr.mxu0 %v2644
    %3360 = vmatpush1.msra.mxu0 %v2643
    %3361 = vmatprep.subr.mxu0 %v2647
    %3362 = vmatpush1.msra.mxu0 %v2646
    %3363 = vmatprep.subr.mxu0 %v2650
    %3364 = vmatpush1.msra.mxu0 %v2649
    %3365 = vmatprep.subr.mxu0 %v2653
    %3366 = vmatpush1.msra.mxu0 %v2652
    %3367 = vmatprep.subr.mxu0 %v2656
    %3368 = vmatpush1.msra.mxu0 %v2655
    %3369 = vmatprep.subr.mxu0 %v2659
    %3370 = vmatpush1.msra.mxu0 %v2658
    %3371 = vmatprep.subr.mxu0 %v2662
    %3372 = vmatpush1.msra.mxu0 %v2661
    %3373 = vmatprep.subr.mxu0 0.0
    %3374 = vmatpush1.msra.mxu0 0.0
    %3375 = vmatprep.subr.mxu0 0.0
    %3376 = vmatpush1.msra.mxu0 0.0
    %3377 = vmatprep.subr.mxu0 0.0
    %3378 = vmatpush1.msra.mxu0 0.0
    %3379 = vmatprep.subr.mxu0 0.0
    %3380 = vmatpush1.msra.mxu0 0.0
    %3381 = vmatprep.subr.mxu0 0.0
    %3382 = vmatpush1.msra.mxu0 0.0
    %3383 = vmatprep.subr.mxu0 0.0
    %3384 = vmatpush1.msra.mxu0 0.0
    %3385 = vmatprep.subr.mxu0 0.0
    %3386 = vmatpush1.msra.mxu0 0.0
    %3387 = vmatprep.subr.mxu0 0.0
    %3388 = vmatpush1.msra.mxu0 0.0
    %3389 = vmatprep.subr.mxu0 0.0
    %3390 = vmatpush1.msra.mxu0 0.0
    %3391 = vmatprep.subr.mxu0 0.0
    %3392 = vmatpush1.msra.mxu0 0.0
    %3393 = vmatprep.subr.mxu0 0.0
    %3394 = vmatpush1.msra.mxu0 0.0
    %3395 = vmatprep.subr.mxu0 0.0
    %3396 = vmatpush1.msra.mxu0 0.0
    %3397 = vmatprep.subr.mxu0 0.0
    %3398 = vmatpush1.msra.mxu0 0.0
    %3399 = vmatprep.subr.mxu0 0.0
    %3400 = vmatpush1.msra.mxu0 0.0
    %3401 = vmatprep.subr.mxu0 0.0
    %3402 = vmatpush1.msra.mxu0 0.0
    %3403 = vmatprep.subr.mxu0 0.0
    %3404 = vmatpush1.msra.mxu0 0.0
    %3405 = vmatprep.mubr.f32.mxu0 0.0
    %3406 = vmatmul.mubr.f32.gmra.mrb[0].mxu0 %v3337
    %v3407 = vpop.f32.mrb[0].mxu0
    %v3408 = vadd.f32 %v2669, %v3407
    %v3409 = vpop.f32.mrb[0].mxu0
    %v3410 = vadd.f32 %v2673, %v3409
    %3411 = vdwg.mxu0
    %3412 = vmatprep.subr.mxu0 0.0
    %3413 = vmatpush1.msra.mxu0 %v2618
    %3414 = vmatprep.subr.mxu0 0.0
    %3415 = vmatpush1.msra.mxu0 %v2621
    %3416 = vmatprep.subr.mxu0 0.0
    %3417 = vmatpush1.msra.mxu0 %v2624
    %3418 = vmatprep.subr.mxu0 0.0
    %3419 = vmatpush1.msra.mxu0 %v2627
    %3420 = vmatprep.subr.mxu0 0.0
    %3421 = vmatpush1.msra.mxu0 %v2630
    %3422 = vmatprep.subr.mxu0 0.0
    %3423 = vmatpush1.msra.mxu0 %v2633
    %3424 = vmatprep.subr.mxu0 0.0
    %3425 = vmatpush1.msra.mxu0 %v2636
    %3426 = vmatprep.subr.mxu0 0.0
    %3427 = vmatpush1.msra.mxu0 %v2639
    %3428 = vmatprep.subr.mxu0 0.0
    %3429 = vmatpush1.msra.mxu0 %v2642
    %3430 = vmatprep.subr.mxu0 0.0
    %3431 = vmatpush1.msra.mxu0 %v2645
    %3432 = vmatprep.subr.mxu0 0.0
    %3433 = vmatpush1.msra.mxu0 %v2648
    %3434 = vmatprep.subr.mxu0 0.0
    %3435 = vmatpush1.msra.mxu0 %v2651
    %3436 = vmatprep.subr.mxu0 0.0
    %3437 = vmatpush1.msra.mxu0 %v2654
    %3438 = vmatprep.subr.mxu0 0.0
    %3439 = vmatpush1.msra.mxu0 %v2657
    %3440 = vmatprep.subr.mxu0 0.0
    %3441 = vmatpush1.msra.mxu0 %v2660
    %3442 = vmatprep.subr.mxu0 0.0
    %3443 = vmatpush1.msra.mxu0 %v2663
    %3444 = vmatprep.subr.mxu0 0.0
    %3445 = vmatpush1.msra.mxu0 0.0
    %3446 = vmatprep.subr.mxu0 0.0
    %3447 = vmatpush1.msra.mxu0 0.0
    %3448 = vmatprep.subr.mxu0 0.0
    %3449 = vmatpush1.msra.mxu0 0.0
    %3450 = vmatprep.subr.mxu0 0.0
    %3451 = vmatpush1.msra.mxu0 0.0
    %3452 = vmatprep.subr.mxu0 0.0
    %3453 = vmatpush1.msra.mxu0 0.0
    %3454 = vmatprep.subr.mxu0 0.0
    %3455 = vmatpush1.msra.mxu0 0.0
    %3456 = vmatprep.subr.mxu0 0.0
    %3457 = vmatpush1.msra.mxu0 0.0
    %3458 = vmatprep.subr.mxu0 0.0
    %3459 = vmatpush1.msra.mxu0 0.0
    %3460 = vmatprep.subr.mxu0 0.0
    %3461 = vmatpush1.msra.mxu0 0.0
    %3462 = vmatprep.subr.mxu0 0.0
    %3463 = vmatpush1.msra.mxu0 0.0
    %3464 = vmatprep.subr.mxu0 0.0
    %3465 = vmatpush1.msra.mxu0 0.0
    %3466 = vmatprep.subr.mxu0 0.0
    %3467 = vmatpush1.msra.mxu0 0.0
    %3468 = vmatprep.subr.mxu0 0.0
    %3469 = vmatpush1.msra.mxu0 0.0
    %3470 = vmatprep.subr.mxu0 0.0
    %3471 = vmatpush1.msra.mxu0 0.0
    %3472 = vmatprep.subr.mxu0 0.0
    %3473 = vmatpush1.msra.mxu0 0.0
    %3474 = vmatprep.subr.mxu0 0.0
    %3475 = vmatpush1.msra.mxu0 0.0
    %3476 = vmatprep.mubr.f32.mxu0 0.0
    %3477 = vmatmul.mubr.f32.gmra.mrb[0].mxu0 %v3337
    %v3478 = vpop.f32.mrb[0].mxu0
    %v3479 = vadd.f32 %v2677, %v3478
    %v3480 = vpop.f32.mrb[0].mxu0
    %3481 = vdwg.mxu0
    %v3482 = vadd.f32 %v3338, %v3408
    %v3483 = vxor.u32 %v3482, 2147483648
    %v3484 = vmul.f32 %v3483, 1.442695
    %v3485 = vpow.pop %v3484
    %v3486 = vadd.f32 %v3485, 1.0
    %v3487 = vrcp.pop %v3486
    %v3488 = vmul.f32 1.0, %v3487
    %v3489 = vadd.f32 %v3339, %v3410
    %v3490 = vxor.u32 %v3489, 2147483648
    %v3491 = vmul.f32 %v3490, 1.442695
    %v3492 = vpow.pop %v3491
    %v3493 = vadd.f32 %v3492, 1.0
    %v3494 = vrcp.pop %v3493
    %v3495 = vmul.f32 1.0, %v3494
    %v3496 = vmul.f32 %v3488, %v3479
    %v3497 = vadd.f32 %v3340, %v3496
    %v3498 = vtanh.pop %v3497
    %v3499 = vsub.f32 1.0, %v3495
    %v3500 = vmul.f32 %v3499, %v3498
    %v3501 = vmul.f32 %v3495, %v3337
    %v3502 = vadd.f32 %v3500, %v3501
    %v3503 = vld [vmem:[%s1599] sm:$0xff]
    %v3504 = vld [vmem:[%s1599 + $0x8] sm:$0xff]
    %v3505 = vld [vmem:[%s1599 + $0x10] sm:$0xff]
    %3506 = vmatprep.subr.mxu0 %v2617
    %3507 = vmatpush1.msra.mxu0 %v2616
    %3508 = vmatprep.subr.mxu0 %v2620
    %3509 = vmatpush1.msra.mxu0 %v2619
    %3510 = vmatprep.subr.mxu0 %v2623
    %3511 = vmatpush1.msra.mxu0 %v2622
    %3512 = vmatprep.subr.mxu0 %v2626
    %3513 = vmatpush1.msra.mxu0 %v2625
    %3514 = vmatprep.subr.mxu0 %v2629
    %3515 = vmatpush1.msra.mxu0 %v2628
    %3516 = vmatprep.subr.mxu0 %v2632
    %3517 = vmatpush1.msra.mxu0 %v2631
    %3518 = vmatprep.subr.mxu0 %v2635
    %3519 = vmatpush1.msra.mxu0 %v2634
    %3520 = vmatprep.subr.mxu0 %v2638
    %3521 = vmatpush1.msra.mxu0 %v2637
    %3522 = vmatprep.subr.mxu0 %v2641
    %3523 = vmatpush1.msra.mxu0 %v2640
    %3524 = vmatprep.subr.mxu0 %v2644
    %3525 = vmatpush1.msra.mxu0 %v2643
    %3526 = vmatprep.subr.mxu0 %v2647
    %3527 = vmatpush1.msra.mxu0 %v2646
    %3528 = vmatprep.subr.mxu0 %v2650
    %3529 = vmatpush1.msra.mxu0 %v2649
    %3530 = vmatprep.subr.mxu0 %v2653
    %3531 = vmatpush1.msra.mxu0 %v2652
    %3532 = vmatprep.subr.mxu0 %v2656
    %3533 = vmatpush1.msra.mxu0 %v2655
    %3534 = vmatprep.subr.mxu0 %v2659
    %3535 = vmatpush1.msra.mxu0 %v2658
    %3536 = vmatprep.subr.mxu0 %v2662
    %3537 = vmatpush1.msra.mxu0 %v2661
    %3538 = vmatprep.subr.mxu0 0.0
    %3539 = vmatpush1.msra.mxu0 0.0
    %3540 = vmatprep.subr.mxu0 0.0
    %3541 = vmatpush1.msra.mxu0 0.0
    %3542 = vmatprep.subr.mxu0 0.0
    %3543 = vmatpush1.msra.mxu0 0.0
    %3544 = vmatprep.subr.mxu0 0.0
    %3545 = vmatpush1.msra.mxu0 0.0
    %3546 = vmatprep.subr.mxu0 0.0
    %3547 = vmatpush1.msra.mxu0 0.0
    %3548 = vmatprep.subr.mxu0 0.0
    %3549 = vmatpush1.msra.mxu0 0.0
    %3550 = vmatprep.subr.mxu0 0.0
    %3551 = vmatpush1.msra.mxu0 0.0
    %3552 = vmatprep.subr.mxu0 0.0
    %3553 = vmatpush1.msra.mxu0 0.0
    %3554 = vmatprep.subr.mxu0 0.0
    %3555 = vmatpush1.msra.mxu0 0.0
    %3556 = vmatprep.subr.mxu0 0.0
    %3557 = vmatpush1.msra.mxu0 0.0
    %3558 = vmatprep.subr.mxu0 0.0
    %3559 = vmatpush1.msra.mxu0 0.0
    %3560 = vmatprep.subr.mxu0 0.0
    %3561 = vmatpush1.msra.mxu0 0.0
    %3562 = vmatprep.subr.mxu0 0.0
    %3563 = vmatpush1.msra.mxu0 0.0
    %3564 = vmatprep.subr.mxu0 0.0
    %3565 = vmatpush1.msra.mxu0 0.0
    %3566 = vmatprep.subr.mxu0 0.0
    %3567 = vmatpush1.msra.mxu0 0.0
    %3568 = vmatprep.subr.mxu0 0.0
    %3569 = vmatpush1.msra.mxu0 0.0
    %3570 = vmatprep.mubr.f32.mxu0 0.0
    %3571 = vmatmul.mubr.f32.gmra.mrb[0].mxu0 %v3502
    %v3572 = vpop.f32.mrb[0].mxu0
    %v3573 = vadd.f32 %v2669, %v3572
    %v3574 = vpop.f32.mrb[0].mxu0
    %v3575 = vadd.f32 %v2673, %v3574
    %3576 = vdwg.mxu0
    %3577 = vmatprep.subr.mxu0 0.0
    %3578 = vmatpush1.msra.mxu0 %v2618
    %3579 = vmatprep.subr.mxu0 0.0
    %3580 = vmatpush1.msra.mxu0 %v2621
    %3581 = vmatprep.subr.mxu0 0.0
    %3582 = vmatpush1.msra.mxu0 %v2624
    %3583 = vmatprep.subr.mxu0 0.0
    %3584 = vmatpush1.msra.mxu0 %v2627
    %3585 = vmatprep.subr.mxu0 0.0
    %3586 = vmatpush1.msra.mxu0 %v2630
    %3587 = vmatprep.subr.mxu0 0.0
    %3588 = vmatpush1.msra.mxu0 %v2633
    %3589 = vmatprep.subr.mxu0 0.0
    %3590 = vmatpush1.msra.mxu0 %v2636
    %3591 = vmatprep.subr.mxu0 0.0
    %3592 = vmatpush1.msra.mxu0 %v2639
    %3593 = vmatprep.subr.mxu0 0.0
    %3594 = vmatpush1.msra.mxu0 %v2642
    %3595 = vmatprep.subr.mxu0 0.0
    %3596 = vmatpush1.msra.mxu0 %v2645
    %3597 = vmatprep.subr.mxu0 0.0
    %3598 = vmatpush1.msra.mxu0 %v2648
    %3599 = vmatprep.subr.mxu0 0.0
    %3600 = vmatpush1.msra.mxu0 %v2651
    %3601 = vmatprep.subr.mxu0 0.0
    %3602 = vmatpush1.msra.mxu0 %v2654
    %3603 = vmatprep.subr.mxu0 0.0
    %3604 = vmatpush1.msra.mxu0 %v2657
    %3605 = vmatprep.subr.mxu0 0.0
    %3606 = vmatpush1.msra.mxu0 %v2660
    %3607 = vmatprep.subr.mxu0 0.0
    %3608 = vmatpush1.msra.mxu0 %v2663
    %3609 = vmatprep.subr.mxu0 0.0
    %3610 = vmatpush1.msra.mxu0 0.0
    %3611 = vmatprep.subr.mxu0 0.0
    %3612 = vmatpush1.msra.mxu0 0.0
    %3613 = vmatprep.subr.mxu0 0.0
    %3614 = vmatpush1.msra.mxu0 0.0
    %3615 = vmatprep.subr.mxu0 0.0
    %3616 = vmatpush1.msra.mxu0 0.0
    %3617 = vmatprep.subr.mxu0 0.0
    %3618 = vmatpush1.msra.mxu0 0.0
    %3619 = vmatprep.subr.mxu0 0.0
    %3620 = vmatpush1.msra.mxu0 0.0
    %3621 = vmatprep.subr.mxu0 0.0
    %3622 = vmatpush1.msra.mxu0 0.0
    %3623 = vmatprep.subr.mxu0 0.0
    %3624 = vmatpush1.msra.mxu0 0.0
    %3625 = vmatprep.subr.mxu0 0.0
    %3626 = vmatpush1.msra.mxu0 0.0
    %3627 = vmatprep.subr.mxu0 0.0
    %3628 = vmatpush1.msra.mxu0 0.0
    %3629 = vmatprep.subr.mxu0 0.0
    %3630 = vmatpush1.msra.mxu0 0.0
    %3631 = vmatprep.subr.mxu0 0.0
    %3632 = vmatpush1.msra.mxu0 0.0
    %3633 = vmatprep.subr.mxu0 0.0
    %3634 = vmatpush1.msra.mxu0 0.0
    %3635 = vmatprep.subr.mxu0 0.0
    %3636 = vmatpush1.msra.mxu0 0.0
    %3637 = vmatprep.subr.mxu0 0.0
    %3638 = vmatpush1.msra.mxu0 0.0
    %3639 = vmatprep.subr.mxu0 0.0
    %3640 = vmatpush1.msra.mxu0 0.0
    %3641 = vmatprep.mubr.f32.mxu0 0.0
    %3642 = vmatmul.mubr.f32.gmra.mrb[0].mxu0 %v3502
    %v3643 = vpop.f32.mrb[0].mxu0
    %v3644 = vadd.f32 %v2677, %v3643
    %v3645 = vpop.f32.mrb[0].mxu0
    %3646 = vdwg.mxu0
    %v3647 = vadd.f32 %v3503, %v3573
    %v3648 = vxor.u32 %v3647, 2147483648
    %v3649 = vmul.f32 %v3648, 1.442695
    %v3650 = vpow.pop %v3649
    %v3651 = vadd.f32 %v3650, 1.0
    %v3652 = vrcp.pop %v3651
    %v3653 = vmul.f32 1.0, %v3652
    %v3654 = vadd.f32 %v3504, %v3575
    %v3655 = vxor.u32 %v3654, 2147483648
    %v3656 = vmul.f32 %v3655, 1.442695
    %v3657 = vpow.pop %v3656
    %v3658 = vadd.f32 %v3657, 1.0
    %v3659 = vrcp.pop %v3658
    %v3660 = vmul.f32 1.0, %v3659
    %v3661 = vmul.f32 %v3653, %v3644
    %v3662 = vadd.f32 %v3505, %v3661
    %v3663 = vtanh.pop %v3662
    %v3664 = vsub.f32 1.0, %v3660
    %v3665 = vmul.f32 %v3664, %v3663
    %v3666 = vmul.f32 %v3660, %v3502
    %v3667 = vadd.f32 %v3665, %v3666
    %v3668 = vld [vmem:[%s1832] sm:$0xff]
    %v3669 = vld [vmem:[%s1832 + $0x8] sm:$0xff]
    %v3670 = vld [vmem:[%s1832 + $0x10] sm:$0xff]
    %3671 = vmatprep.subr.mxu0 %v2617
    %3672 = vmatpush1.msra.mxu0 %v2616
    %3673 = vmatprep.subr.mxu0 %v2620
    %3674 = vmatpush1.msra.mxu0 %v2619
    %3675 = vmatprep.subr.mxu0 %v2623
    %3676 = vmatpush1.msra.mxu0 %v2622
    %3677 = vmatprep.subr.mxu0 %v2626
    %3678 = vmatpush1.msra.mxu0 %v2625
    %3679 = vmatprep.subr.mxu0 %v2629
    %3680 = vmatpush1.msra.mxu0 %v2628
    %3681 = vmatprep.subr.mxu0 %v2632
    %3682 = vmatpush1.msra.mxu0 %v2631
    %3683 = vmatprep.subr.mxu0 %v2635
    %3684 = vmatpush1.msra.mxu0 %v2634
    %3685 = vmatprep.subr.mxu0 %v2638
    %3686 = vmatpush1.msra.mxu0 %v2637
    %3687 = vmatprep.subr.mxu0 %v2641
    %3688 = vmatpush1.msra.mxu0 %v2640
    %3689 = vmatprep.subr.mxu0 %v2644
    %3690 = vmatpush1.msra.mxu0 %v2643
    %3691 = vmatprep.subr.mxu0 %v2647
    %3692 = vmatpush1.msra.mxu0 %v2646
    %3693 = vmatprep.subr.mxu0 %v2650
    %3694 = vmatpush1.msra.mxu0 %v2649
    %3695 = vmatprep.subr.mxu0 %v2653
    %3696 = vmatpush1.msra.mxu0 %v2652
    %3697 = vmatprep.subr.mxu0 %v2656
    %3698 = vmatpush1.msra.mxu0 %v2655
    %3699 = vmatprep.subr.mxu0 %v2659
    %3700 = vmatpush1.msra.mxu0 %v2658
    %3701 = vmatprep.subr.mxu0 %v2662
    %3702 = vmatpush1.msra.mxu0 %v2661
    %3703 = vmatprep.subr.mxu0 0.0
    %3704 = vmatpush1.msra.mxu0 0.0
    %3705 = vmatprep.subr.mxu0 0.0
    %3706 = vmatpush1.msra.mxu0 0.0
    %3707 = vmatprep.subr.mxu0 0.0
    %3708 = vmatpush1.msra.mxu0 0.0
    %3709 = vmatprep.subr.mxu0 0.0
    %3710 = vmatpush1.msra.mxu0 0.0
    %3711 = vmatprep.subr.mxu0 0.0
    %3712 = vmatpush1.msra.mxu0 0.0
    %3713 = vmatprep.subr.mxu0 0.0
    %3714 = vmatpush1.msra.mxu0 0.0
    %3715 = vmatprep.subr.mxu0 0.0
    %3716 = vmatpush1.msra.mxu0 0.0
    %3717 = vmatprep.subr.mxu0 0.0
    %3718 = vmatpush1.msra.mxu0 0.0
    %3719 = vmatprep.subr.mxu0 0.0
    %3720 = vmatpush1.msra.mxu0 0.0
    %3721 = vmatprep.subr.mxu0 0.0
    %3722 = vmatpush1.msra.mxu0 0.0
    %3723 = vmatprep.subr.mxu0 0.0
    %3724 = vmatpush1.msra.mxu0 0.0
    %3725 = vmatprep.subr.mxu0 0.0
    %3726 = vmatpush1.msra.mxu0 0.0
    %3727 = vmatprep.subr.mxu0 0.0
    %3728 = vmatpush1.msra.mxu0 0.0
    %3729 = vmatprep.subr.mxu0 0.0
    %3730 = vmatpush1.msra.mxu0 0.0
    %3731 = vmatprep.subr.mxu0 0.0
    %3732 = vmatpush1.msra.mxu0 0.0
    %3733 = vmatprep.subr.mxu0 0.0
    %3734 = vmatpush1.msra.mxu0 0.0
    %3735 = vmatprep.mubr.f32.mxu0 0.0
    %3736 = vmatmul.mubr.f32.gmra.mrb[0].mxu0 %v3667
    %v3737 = vpop.f32.mrb[0].mxu0
    %v3738 = vadd.f32 %v2669, %v3737
    %v3739 = vpop.f32.mrb[0].mxu0
    %v3740 = vadd.f32 %v2673, %v3739
    %3741 = vdwg.mxu0
    %3742 = vmatprep.subr.mxu0 0.0
    %3743 = vmatpush1.msra.mxu0 %v2618
    %3744 = vmatprep.subr.mxu0 0.0
    %3745 = vmatpush1.msra.mxu0 %v2621
    %3746 = vmatprep.subr.mxu0 0.0
    %3747 = vmatpush1.msra.mxu0 %v2624
    %3748 = vmatprep.subr.mxu0 0.0
    %3749 = vmatpush1.msra.mxu0 %v2627
    %3750 = vmatprep.subr.mxu0 0.0
    %3751 = vmatpush1.msra.mxu0 %v2630
    %3752 = vmatprep.subr.mxu0 0.0
    %3753 = vmatpush1.msra.mxu0 %v2633
    %3754 = vmatprep.subr.mxu0 0.0
    %3755 = vmatpush1.msra.mxu0 %v2636
    %3756 = vmatprep.subr.mxu0 0.0
    %3757 = vmatpush1.msra.mxu0 %v2639
    %3758 = vmatprep.subr.mxu0 0.0
    %3759 = vmatpush1.msra.mxu0 %v2642
    %3760 = vmatprep.subr.mxu0 0.0
    %3761 = vmatpush1.msra.mxu0 %v2645
    %3762 = vmatprep.subr.mxu0 0.0
    %3763 = vmatpush1.msra.mxu0 %v2648
    %3764 = vmatprep.subr.mxu0 0.0
    %3765 = vmatpush1.msra.mxu0 %v2651
    %3766 = vmatprep.subr.mxu0 0.0
    %3767 = vmatpush1.msra.mxu0 %v2654
    %3768 = vmatprep.subr.mxu0 0.0
    %3769 = vmatpush1.msra.mxu0 %v2657
    %3770 = vmatprep.subr.mxu0 0.0
    %3771 = vmatpush1.msra.mxu0 %v2660
    %3772 = vmatprep.subr.mxu0 0.0
    %3773 = vmatpush1.msra.mxu0 %v2663
    %3774 = vmatprep.subr.mxu0 0.0
    %3775 = vmatpush1.msra.mxu0 0.0
    %3776 = vmatprep.subr.mxu0 0.0
    %3777 = vmatpush1.msra.mxu0 0.0
    %3778 = vmatprep.subr.mxu0 0.0
    %3779 = vmatpush1.msra.mxu0 0.0
    %3780 = vmatprep.subr.mxu0 0.0
    %3781 = vmatpush1.msra.mxu0 0.0
    %3782 = vmatprep.subr.mxu0 0.0
    %3783 = vmatpush1.msra.mxu0 0.0
    %3784 = vmatprep.subr.mxu0 0.0
    %3785 = vmatpush1.msra.mxu0 0.0
    %3786 = vmatprep.subr.mxu0 0.0
    %3787 = vmatpush1.msra.mxu0 0.0
    %3788 = vmatprep.subr.mxu0 0.0
    %3789 = vmatpush1.msra.mxu0 0.0
    %3790 = vmatprep.subr.mxu0 0.0
    %3791 = vmatpush1.msra.mxu0 0.0
    %3792 = vmatprep.subr.mxu0 0.0
    %3793 = vmatpush1.msra.mxu0 0.0
    %3794 = vmatprep.subr.mxu0 0.0
    %3795 = vmatpush1.msra.mxu0 0.0
    %3796 = vmatprep.subr.mxu0 0.0
    %3797 = vmatpush1.msra.mxu0 0.0
    %3798 = vmatprep.subr.mxu0 0.0
    %3799 = vmatpush1.msra.mxu0 0.0
    %3800 = vmatprep.subr.mxu0 0.0
    %3801 = vmatpush1.msra.mxu0 0.0
    %3802 = vmatprep.subr.mxu0 0.0
    %3803 = vmatpush1.msra.mxu0 0.0
    %3804 = vmatprep.subr.mxu0 0.0
    %3805 = vmatpush1.msra.mxu0 0.0
    %3806 = vmatprep.mubr.f32.mxu0 0.0
    %3807 = vmatmul.mubr.f32.gmra.mrb[0].mxu0 %v3667
    %v3808 = vpop.f32.mrb[0].mxu0
    %v3809 = vadd.f32 %v2677, %v3808
    %v3810 = vpop.f32.mrb[0].mxu0
    %3811 = vdwg.mxu0
    %v3812 = vadd.f32 %v3668, %v3738
    %v3813 = vxor.u32 %v3812, 2147483648
    %v3814 = vmul.f32 %v3813, 1.442695
    %v3815 = vpow.pop %v3814
    %v3816 = vadd.f32 %v3815, 1.0
    %v3817 = vrcp.pop %v3816
    %v3818 = vmul.f32 1.0, %v3817
    %v3819 = vadd.f32 %v3669, %v3740
    %v3820 = vxor.u32 %v3819, 2147483648
    %v3821 = vmul.f32 %v3820, 1.442695
    %v3822 = vpow.pop %v3821
    %v3823 = vadd.f32 %v3822, 1.0
    %v3824 = vrcp.pop %v3823
    %v3825 = vmul.f32 1.0, %v3824
    %v3826 = vmul.f32 %v3818, %v3809
    %v3827 = vadd.f32 %v3670, %v3826
    %v3828 = vtanh.pop %v3827
    %v3829 = vsub.f32 1.0, %v3825
    %v3830 = vmul.f32 %v3829, %v3828
    %v3831 = vmul.f32 %v3825, %v3667
    %v3832 = vadd.f32 %v3830, %v3831
    %v3833 = vld [vmem:[%s2065] sm:$0xff]
    %v3834 = vld [vmem:[%s2065 + $0x8] sm:$0xff]
    %v3835 = vld [vmem:[%s2065 + $0x10] sm:$0xff]
    %3836 = vmatprep.subr.mxu0 %v2617
    %3837 = vmatpush1.msra.mxu0 %v2616
    %3838 = vmatprep.subr.mxu0 %v2620
    %3839 = vmatpush1.msra.mxu0 %v2619
    %3840 = vmatprep.subr.mxu0 %v2623
    %3841 = vmatpush1.msra.mxu0 %v2622
    %3842 = vmatprep.subr.mxu0 %v2626
    %3843 = vmatpush1.msra.mxu0 %v2625
    %3844 = vmatprep.subr.mxu0 %v2629
    %3845 = vmatpush1.msra.mxu0 %v2628
    %3846 = vmatprep.subr.mxu0 %v2632
    %3847 = vmatpush1.msra.mxu0 %v2631
    %3848 = vmatprep.subr.mxu0 %v2635
    %3849 = vmatpush1.msra.mxu0 %v2634
    %3850 = vmatprep.subr.mxu0 %v2638
    %3851 = vmatpush1.msra.mxu0 %v2637
    %3852 = vmatprep.subr.mxu0 %v2641
    %3853 = vmatpush1.msra.mxu0 %v2640
    %3854 = vmatprep.subr.mxu0 %v2644
    %3855 = vmatpush1.msra.mxu0 %v2643
    %3856 = vmatprep.subr.mxu0 %v2647
    %3857 = vmatpush1.msra.mxu0 %v2646
    %3858 = vmatprep.subr.mxu0 %v2650
    %3859 = vmatpush1.msra.mxu0 %v2649
    %3860 = vmatprep.subr.mxu0 %v2653
    %3861 = vmatpush1.msra.mxu0 %v2652
    %3862 = vmatprep.subr.mxu0 %v2656
    %3863 = vmatpush1.msra.mxu0 %v2655
    %3864 = vmatprep.subr.mxu0 %v2659
    %3865 = vmatpush1.msra.mxu0 %v2658
    %3866 = vmatprep.subr.mxu0 %v2662
    %3867 = vmatpush1.msra.mxu0 %v2661
    %3868 = vmatprep.subr.mxu0 0.0
    %3869 = vmatpush1.msra.mxu0 0.0
    %3870 = vmatprep.subr.mxu0 0.0
    %3871 = vmatpush1.msra.mxu0 0.0
    %3872 = vmatprep.subr.mxu0 0.0
    %3873 = vmatpush1.msra.mxu0 0.0
    %3874 = vmatprep.subr.mxu0 0.0
    %3875 = vmatpush1.msra.mxu0 0.0
    %3876 = vmatprep.subr.mxu0 0.0
    %3877 = vmatpush1.msra.mxu0 0.0
    %3878 = vmatprep.subr.mxu0 0.0
    %3879 = vmatpush1.msra.mxu0 0.0
    %3880 = vmatprep.subr.mxu0 0.0
    %3881 = vmatpush1.msra.mxu0 0.0
    %3882 = vmatprep.subr.mxu0 0.0
    %3883 = vmatpush1.msra.mxu0 0.0
    %3884 = vmatprep.subr.mxu0 0.0
    %3885 = vmatpush1.msra.mxu0 0.0
    %3886 = vmatprep.subr.mxu0 0.0
    %3887 = vmatpush1.msra.mxu0 0.0
    %3888 = vmatprep.subr.mxu0 0.0
    %3889 = vmatpush1.msra.mxu0 0.0
    %3890 = vmatprep.subr.mxu0 0.0
    %3891 = vmatpush1.msra.mxu0 0.0
    %3892 = vmatprep.subr.mxu0 0.0
    %3893 = vmatpush1.msra.mxu0 0.0
    %3894 = vmatprep.subr.mxu0 0.0
    %3895 = vmatpush1.msra.mxu0 0.0
    %3896 = vmatprep.subr.mxu0 0.0
    %3897 = vmatpush1.msra.mxu0 0.0
    %3898 = vmatprep.subr.mxu0 0.0
    %3899 = vmatpush1.msra.mxu0 0.0
    %3900 = vmatprep.mubr.f32.mxu0 0.0
    %3901 = vmatmul.mubr.f32.gmra.mrb[0].mxu0 %v3832
    %v3902 = vpop.f32.mrb[0].mxu0
    %v3903 = vadd.f32 %v2669, %v3902
    %v3904 = vpop.f32.mrb[0].mxu0
    %v3905 = vadd.f32 %v2673, %v3904
    %3906 = vdwg.mxu0
    %3907 = vmatprep.subr.mxu0 0.0
    %3908 = vmatpush1.msra.mxu0 %v2618
    %3909 = vmatprep.subr.mxu0 0.0
    %3910 = vmatpush1.msra.mxu0 %v2621
    %3911 = vmatprep.subr.mxu0 0.0
    %3912 = vmatpush1.msra.mxu0 %v2624
    %3913 = vmatprep.subr.mxu0 0.0
    %3914 = vmatpush1.msra.mxu0 %v2627
    %3915 = vmatprep.subr.mxu0 0.0
    %3916 = vmatpush1.msra.mxu0 %v2630
    %3917 = vmatprep.subr.mxu0 0.0
    %3918 = vmatpush1.msra.mxu0 %v2633
    %3919 = vmatprep.subr.mxu0 0.0
    %3920 = vmatpush1.msra.mxu0 %v2636
    %3921 = vmatprep.subr.mxu0 0.0
    %3922 = vmatpush1.msra.mxu0 %v2639
    %3923 = vmatprep.subr.mxu0 0.0
    %3924 = vmatpush1.msra.mxu0 %v2642
    %3925 = vmatprep.subr.mxu0 0.0
    %3926 = vmatpush1.msra.mxu0 %v2645
    %3927 = vmatprep.subr.mxu0 0.0
    %3928 = vmatpush1.msra.mxu0 %v2648
    %3929 = vmatprep.subr.mxu0 0.0
    %3930 = vmatpush1.msra.mxu0 %v2651
    %3931 = vmatprep.subr.mxu0 0.0
    %3932 = vmatpush1.msra.mxu0 %v2654
    %3933 = vmatprep.subr.mxu0 0.0
    %3934 = vmatpush1.msra.mxu0 %v2657
    %3935 = vmatprep.subr.mxu0 0.0
    %3936 = vmatpush1.msra.mxu0 %v2660
    %3937 = vmatprep.subr.mxu0 0.0
    %3938 = vmatpush1.msra.mxu0 %v2663
    %3939 = vmatprep.subr.mxu0 0.0
    %3940 = vmatpush1.msra.mxu0 0.0
    %3941 = vmatprep.subr.mxu0 0.0
    %3942 = vmatpush1.msra.mxu0 0.0
    %3943 = vmatprep.subr.mxu0 0.0
    %3944 = vmatpush1.msra.mxu0 0.0
    %3945 = vmatprep.subr.mxu0 0.0
    %3946 = vmatpush1.msra.mxu0 0.0
    %3947 = vmatprep.subr.mxu0 0.0
    %3948 = vmatpush1.msra.mxu0 0.0
    %3949 = vmatprep.subr.mxu0 0.0
    %3950 = vmatpush1.msra.mxu0 0.0
    %3951 = vmatprep.subr.mxu0 0.0
    %3952 = vmatpush1.msra.mxu0 0.0
    %3953 = vmatprep.subr.mxu0 0.0
    %3954 = vmatpush1.msra.mxu0 0.0
    %3955 = vmatprep.subr.mxu0 0.0
    %3956 = vmatpush1.msra.mxu0 0.0
    %3957 = vmatprep.subr.mxu0 0.0
    %3958 = vmatpush1.msra.mxu0 0.0
    %3959 = vmatprep.subr.mxu0 0.0
    %3960 = vmatpush1.msra.mxu0 0.0
    %3961 = vmatprep.subr.mxu0 0.0
    %3962 = vmatpush1.msra.mxu0 0.0
    %3963 = vmatprep.subr.mxu0 0.0
    %3964 = vmatpush1.msra.mxu0 0.0
    %3965 = vmatprep.subr.mxu0 0.0
    %3966 = vmatpush1.msra.mxu0 0.0
    %3967 = vmatprep.subr.mxu0 0.0
    %3968 = vmatpush1.msra.mxu0 0.0
    %3969 = vmatprep.subr.mxu0 0.0
    %3970 = vmatpush1.msra.mxu0 0.0
    %3971 = vmatprep.mubr.f32.mxu0 0.0
    %3972 = vmatmul.mubr.f32.gmra.mrb[0].mxu0 %v3832
    %v3973 = vpop.f32.mrb[0].mxu0
    %v3974 = vadd.f32 %v2677, %v3973
    %v3975 = vpop.f32.mrb[0].mxu0
    %3976 = vdwg.mxu0
    %v3977 = vadd.f32 %v3833, %v3903
    %v3978 = vxor.u32 %v3977, 2147483648
    %v3979 = vmul.f32 %v3978, 1.442695
    %v3980 = vpow.pop %v3979
    %v3981 = vadd.f32 %v3980, 1.0
    %v3982 = vrcp.pop %v3981
    %v3983 = vmul.f32 1.0, %v3982
    %v3984 = vadd.f32 %v3834, %v3905
    %v3985 = vxor.u32 %v3984, 2147483648
    %v3986 = vmul.f32 %v3985, 1.442695
    %v3987 = vpow.pop %v3986
    %v3988 = vadd.f32 %v3987, 1.0
    %v3989 = vrcp.pop %v3988
    %v3990 = vmul.f32 1.0, %v3989
    %v3991 = vmul.f32 %v3983, %v3974
    %v3992 = vadd.f32 %v3835, %v3991
    %v3993 = vtanh.pop %v3992
    %v3994 = vsub.f32 1.0, %v3990
    %v3995 = vmul.f32 %v3994, %v3993
    %v3996 = vmul.f32 %v3990, %v3832
    %v3997 = vadd.f32 %v3995, %v3996
    %v3998 = vmax.f32 %v3997, 0.0
    %v3999 = vld [vmem:[#allocation13] sm:$0xff]
    %v4000 = vld [vmem:[#allocation13 + $0x8] sm:$0xff]
    %v4001 = vld [vmem:[#allocation13 + $0x10] sm:$0xff]
    %v4002 = vld [vmem:[#allocation13 + $0x18] sm:$0xff]
    %v4003 = vld [vmem:[#allocation13 + $0x20] sm:$0xff]
    %v4004 = vld [vmem:[#allocation13 + $0x28] sm:$0xff]
    %v4005 = vld [vmem:[#allocation13 + $0x30] sm:$0xff]
    %v4006 = vld [vmem:[#allocation13 + $0x38] sm:$0xff]
    %v4007 = vld [vmem:[#allocation13 + $0x40] sm:$0xff]
    %v4008 = vld [vmem:[#allocation13 + $0x48] sm:$0xff]
    %v4009 = vld [vmem:[#allocation13 + $0x50] sm:$0xff]
    %v4010 = vld [vmem:[#allocation13 + $0x58] sm:$0xff]
    %v4011 = vld [vmem:[#allocation13 + $0x60] sm:$0xff]
    %v4012 = vld [vmem:[#allocation13 + $0x68] sm:$0xff]
    %v4013 = vld [vmem:[#allocation13 + $0x70] sm:$0xff]
    %v4014 = vld [vmem:[#allocation13 + $0x78] sm:$0xff]
    %v4015 = vld [vmem:[%s10] sm:$0x1]
    %v4017 = vlaneseq
    %v4018 = vshrl.u32 %v4017, 7
    %v4019 = vsub.s32 0, %v4018
    %v4020 = vrot.slane %v4015, %v4019
    %4022 = vmatprep.subr.mxu0 0.0
    %4023 = vmatpush1.msra.mxu0 %v3999
    %4024 = vmatprep.subr.mxu0 0.0
    %4025 = vmatpush1.msra.mxu0 %v4000
    %4026 = vmatprep.subr.mxu0 0.0
    %4027 = vmatpush1.msra.mxu0 %v4001
    %4028 = vmatprep.subr.mxu0 0.0
    %4029 = vmatpush1.msra.mxu0 %v4002
    %4030 = vmatprep.subr.mxu0 0.0
    %4031 = vmatpush1.msra.mxu0 %v4003
    %4032 = vmatprep.subr.mxu0 0.0
    %4033 = vmatpush1.msra.mxu0 %v4004
    %4034 = vmatprep.subr.mxu0 0.0
    %4035 = vmatpush1.msra.mxu0 %v4005
    %4036 = vmatprep.subr.mxu0 0.0
    %4037 = vmatpush1.msra.mxu0 %v4006
    %4038 = vmatprep.subr.mxu0 0.0
    %4039 = vmatpush1.msra.mxu0 %v4007
    %4040 = vmatprep.subr.mxu0 0.0
    %4041 = vmatpush1.msra.mxu0 %v4008
    %4042 = vmatprep.subr.mxu0 0.0
    %4043 = vmatpush1.msra.mxu0 %v4009
    %4044 = vmatprep.subr.mxu0 0.0
    %4045 = vmatpush1.msra.mxu0 %v4010
    %4046 = vmatprep.subr.mxu0 0.0
    %4047 = vmatpush1.msra.mxu0 %v4011
    %4048 = vmatprep.subr.mxu0 0.0
    %4049 = vmatpush1.msra.mxu0 %v4012
    %4050 = vmatprep.subr.mxu0 0.0
    %4051 = vmatpush1.msra.mxu0 %v4013
    %4052 = vmatprep.subr.mxu0 0.0
    %4053 = vmatpush1.msra.mxu0 %v4014
    %4054 = vmatprep.subr.mxu0 0.0
    %4055 = vmatpush1.msra.mxu0 0.0
    %4056 = vmatprep.subr.mxu0 0.0
    %4057 = vmatpush1.msra.mxu0 0.0
    %4058 = vmatprep.subr.mxu0 0.0
    %4059 = vmatpush1.msra.mxu0 0.0
    %4060 = vmatprep.subr.mxu0 0.0
    %4061 = vmatpush1.msra.mxu0 0.0
    %4062 = vmatprep.subr.mxu0 0.0
    %4063 = vmatpush1.msra.mxu0 0.0
    %4064 = vmatprep.subr.mxu0 0.0
    %4065 = vmatpush1.msra.mxu0 0.0
    %4066 = vmatprep.subr.mxu0 0.0
    %4067 = vmatpush1.msra.mxu0 0.0
    %4068 = vmatprep.subr.mxu0 0.0
    %4069 = vmatpush1.msra.mxu0 0.0
    %4070 = vmatprep.subr.mxu0 0.0
    %4071 = vmatpush1.msra.mxu0 0.0
    %4072 = vmatprep.subr.mxu0 0.0
    %4073 = vmatpush1.msra.mxu0 0.0
    %4074 = vmatprep.subr.mxu0 0.0
    %4075 = vmatpush1.msra.mxu0 0.0
    %4076 = vmatprep.subr.mxu0 0.0
    %4077 = vmatpush1.msra.mxu0 0.0
    %4078 = vmatprep.subr.mxu0 0.0
    %4079 = vmatpush1.msra.mxu0 0.0
    %4080 = vmatprep.subr.mxu0 0.0
    %4081 = vmatpush1.msra.mxu0 0.0
    %4082 = vmatprep.subr.mxu0 0.0
    %4083 = vmatpush1.msra.mxu0 0.0
    %4084 = vmatprep.subr.mxu0 0.0
    %4085 = vmatpush1.msra.mxu0 0.0
    %4086 = vmatprep.mubr.f32.mxu0 0.0
    %4087 = vmatmul.mubr.f32.gmra.mrb[0].mxu0 %v3998
    %v4088 = vpop.f32.mrb[0].mxu0
    %v4089 = vadd.f32 %v4020, %v4088
    %v4090 = vpop.f32.mrb[0].mxu0
    %4091 = vdwg.mxu0
    %4092 = vst [vmem:[#allocation15] sm:$0xff] %v4089
    // Predicated region
    $region70: #{tpu_custom_call.1} parent=1 // pred_check
      _
    $region71: #{tpu_custom_call.1} parent=1 // pred_check_branch
      %4094 = sbr.rel (0) target = $region73
    $region72: #{tpu_custom_call.1} parent=1 // pred_region
      %s4096 = ssub.s32 128, 128
      %4097 = vsyncadd [#allocation6], %s4096
      %s4099 = sshll.u32 [#allocation15], 4
      %s4100 = int_to_ptr.vmem [resolvable:$true] %s4099
      %4102 = dma.vmem_to_hbm [thread:$0]  %s4100, 128, %s11, [#allocation6]
    $region73: #{tpu_custom_call.1} parent=1 // pred_fallthru
      _
    // Predicated region
    $region74: #{tpu_custom_call.1} parent=1 // pred_check
      _
    $region75: #{tpu_custom_call.1} parent=1 // pred_check_branch
      %4104 = sbr.rel (0) target = $region77
    $region76: #{tpu_custom_call.1} parent=1 // pred_region
      %4105 = dma.done [#allocation6], 128
    $region77: #{tpu_custom_call.1} parent=1 // pred_fallthru
      _
    %4106 = vsyncpa [#allocation5], 1
    %4107 = vsyncpa [#allocation8], 1
    %4108 = vsyncpa [#allocation11], 1
    %4109 = vsyncpa [#allocation14], 1
    %4110 = vsyncpa [#allocation6], 1

</llo_original>
